<compile_context>
chip_gen: v6e
topology: v6e:2x2x1
jax: 0.10.0
libtpu: 0.0.40
codegen_flags: <defaults>
</compile_context>

<pallas_src>
import functools

import jax
import jax.numpy as jnp
from jax import lax
from jax.experimental import pallas as pl
from jax.experimental.pallas import tpu as pltpu


def _round_up(x, m):
    return (x + m - 1) // m * m


def _vmem_budget_bytes():
    """Per-generation scoped-VMEM ceiling (v7x: 64 MiB/TC physical; v5e/v6e: 128 MiB)."""
    kind = ""
    try:
        kind = jax.devices()[0].device_kind.lower()
    except Exception:
        pass
    if "v7" in kind or "7x" in kind:
        return 48 * 1024 * 1024
    return 100 * 1024 * 1024


@functools.partial(jax.jit, static_argnames=("padding", "dilation"))
def aspp_forward(x_nchw, weight_oihw, gamma, beta, running_mean, running_var,
                 *, padding, dilation, eps=1e-5):
    """Forward of _ASPPModule: ReLU(BN(atrous_conv(x))), BN using running stats (eval mode)."""
    N, Cin, H, W = x_nchw.shape
    Cout, _, KH, KW = weight_oihw.shape

    # ---------------- static geometry ----------------
    Ho = H + 2 * padding - dilation * (KH - 1)
    Wo = W + 2 * padding - dilation * (KW - 1)
    halo = dilation * (KH - 1)                 # extra input rows needed below each tile
    HB = max(8, _round_up(halo, 8))            # halo block rows (sublane aligned)

    LANE = 128
    Coutp = _round_up(Cout, LANE)
    Wo_pad = _round_up(Wo, 8)                  # keeps flattened-row slices 8-aligned
    Wp = W + 2 * padding
    Wp_pad = Wp + (Wo_pad - Wo)

    vmem_limit = _vmem_budget_bytes()
    usable = int(vmem_limit * 0.70)            # headroom for compiler temporaries / spills

    def vmem_est(th, tcin, cinp, n_c):
        inp = 2 * (th + HB) * Wp_pad * tcin * 2          # double-buffered bf16 inputs (+halo)
        wgt = 2 * KH * KW * cinp * Coutp * 2             # resident weights (double-buffered)
        out = 2 * th * Wo_pad * Coutp * 2                # double-buffered bf16 output
        acc = th * Wo_pad * Coutp * 4 if n_c > 1 else 0  # f32 accumulator scratch
        tmp = (th + HB) * (Wp_pad + Wo_pad) * tcin * 2   # concat + per-kw window copies
        tmp += th * Wo_pad * Coutp * 4                   # live f32 accumulator value
        return inp + wgt + out + acc + tmp

    def pick_th(tcin, cinp, n_c):
        th_cap = max(HB, _round_up(Ho, HB))
        best = None
        for th in range(HB, th_cap + 1, HB):
            if vmem_est(th, tcin, cinp, n_c) > usable:
                continue
            key = (_round_up(Ho, th), -th)     # minimize padded waste, then prefer bigger TH
            if best is None or key < best[0]:
                best = (key, th)
        return None if best is None else best[1]

    # Prefer a single full-depth contraction: weights + full-Cin input tile resident in VMEM.
    Cinp = _round_up(Cin, LANE)
    TCin, n_c = Cinp, 1
    TH = pick_th(TCin, Cinp, n_c)
    if TH is None:
        # Cin too large for a single contraction step: tile it (weights stay resident; pad Cin
        # to a multiple of 256 so every step has a full MXU contraction depth).
        Cinp = _round_up(Cin, 256)
        TCin = 256
        n_c = Cinp // TCin
        TH = pick_th(TCin, Cinp, n_c)
        if TH is None:
            TH = HB                            # realistic ASPP shapes never hit this

    Ho_pad = _round_up(Ho, TH)
    n_h = Ho_pad // TH
    # (n_h + 1) * TH keeps every block-shape divisible AND keeps the last tile's halo block
    # fully in bounds ((n_h+1)*TH >= n_h*TH + HB since HB <= TH).
    Hp_total = (n_h + 1) * TH

    # ---------------- wrapper glue (plain JAX, fused by XLA) ----------------
    # Fold BN (running stats) into the conv weights: y = conv(x, w*scale) + shift
    scale = gamma / jnp.sqrt(running_var + eps)                      # (Cout,)
    shift = beta - running_mean * scale                              # (Cout,)

    w_hwio = jnp.transpose(weight_oihw, (2, 3, 1, 0)) * scale        # (KH,KW,Cin,Cout) f32
    w_hwio = jnp.pad(w_hwio, ((0, 0), (0, 0),
                              (0, Cinp - Cin),
                              (0, Coutp - Cout))).astype(jnp.bfloat16)
    shift_p = jnp.pad(shift, (0, Coutp - Cout)).reshape(1, Coutp).astype(jnp.float32)

    x_nhwc = jnp.transpose(x_nchw, (0, 2, 3, 1)).astype(jnp.bfloat16)
    # TODO(synk): the NHWC transpose + spatial zero-pad is still an extra HBM pass; a
    # halo-aware index_map with boundary masking inside the kernel would remove it.
    x_pad = jnp.pad(x_nhwc, ((0, 0),
                             (padding, Hp_total - H - padding),
                             (padding, Wp_pad - W - padding),
                             (0, Cinp - Cin)))                       # (N, Hp_total, Wp_pad, Cinp)

    # ---------------- Pallas kernel ----------------
    def kernel(xc_ref, xh_ref, w_ref, sh_ref, o_ref, *acc_scratch):
        # Assemble TH + HB input rows: this tile's TH rows plus the dilation halo rows below.
        xw = jnp.concatenate([xc_ref[0], xh_ref[0]], axis=0)          # (TH+HB, Wp_pad, TCin)

        if n_c > 1:
            c = pl.program_id(2)
            acc_ref = acc_scratch[0]

            @pl.when(c == 0)
            def _():
                acc_ref[...] = jnp.zeros_like(acc_ref)

            acc = acc_ref[...]
        else:
            acc = jnp.zeros((TH * Wo_pad, Coutp), jnp.float32)

        for kw in range(KW):
            w0 = kw * dilation
            # One misaligned W shift per kw; the reshape is hoisted so every kh tap below is
            # an aligned (multiple-of-8) row slice with no relayout copy.
            xs_w = xw[:, w0:w0 + Wo_pad, :].reshape((TH + HB) * Wo_pad, TCin)
            for kh in range(KH):
                r0 = kh * dilation * Wo_pad
                xs = xs_w[r0:r0 + TH * Wo_pad]
                if n_c > 1:
                    wk = w_ref[kh, kw, pl.ds(pl.multiple_of(c * TCin, TCin), TCin), :]
                else:
                    wk = w_ref[kh, kw]
                acc = acc + jnp.dot(xs, wk, preferred_element_type=jnp.float32)

        def finalize(acc_val):
            y = acc_val + sh_ref[...]                                 # folded BN shift
            o_ref[0] = jnp.maximum(y, 0.0).astype(o_ref.dtype)        # ReLU, bf16 store

        if n_c > 1:
            acc_ref[...] = acc

            @pl.when(c == pl.num_programs(2) - 1)
            def _():
                finalize(acc_ref[...])
        else:
            finalize(acc)

    # ---------------- grid / specs ----------------
    w_block = (KH, KW, Cinp, Coutp)
    if n_c == 1:
        grid = (N, n_h)
        in_specs = [
            # current TH input rows of this tile
            pl.BlockSpec((1, TH, Wp_pad, TCin), lambda n, h: (n, h, 0, 0)),
            # halo rows directly below the tile (only HB rows re-read, not a full tile)
            pl.BlockSpec((1, HB, Wp_pad, TCin),
                         lambda n, h: (n, (h + 1) * (TH // HB), 0, 0)),
            # BN-folded weights: constant index_map -> DMA'd once, resident in VMEM
            # TODO(synk): pipeline_mode=pl.Buffered(1) would drop the redundant 2nd buffer.
            pl.BlockSpec(w_block, lambda n, h: (0, 0, 0, 0)),
            # folded BN shift
            pl.BlockSpec((1, Coutp), lambda n, h: (0, 0)),
        ]
        out_spec = pl.BlockSpec((1, TH * Wo_pad, Coutp), lambda n, h: (n, h, 0))
        scratch = []
        dims = ("parallel", "parallel")
    else:
        grid = (N, n_h, n_c)
        in_specs = [
            pl.BlockSpec((1, TH, Wp_pad, TCin), lambda n, h, c: (n, h, 0, c)),
            pl.BlockSpec((1, HB, Wp_pad, TCin),
                         lambda n, h, c: (n, (h + 1) * (TH // HB), 0, c)),
            pl.BlockSpec(w_block, lambda n, h, c: (0, 0, 0, 0)),     # resident, sliced by c
            pl.BlockSpec((1, Coutp), lambda n, h, c: (0, 0)),
        ]
        out_spec = pl.BlockSpec((1, TH * Wo_pad, Coutp), lambda n, h, c: (n, h, 0))
        scratch = [pltpu.VMEM((TH * Wo_pad, Coutp), jnp.float32)]
        dims = ("parallel", "parallel", "arbitrary")

    flops = 2 * N * Ho_pad * Wo_pad * Coutp * Cinp * KH * KW
    bytes_accessed = (N * n_h * n_c * (TH + HB) * Wp_pad * TCin * 2   # bf16 input (+halo re-read)
                      + KH * KW * Cinp * Coutp * 2                    # resident bf16 weights
                      + Coutp * 4                                     # BN shift
                      + N * Ho_pad * Wo_pad * Coutp * 2)              # bf16 output

    out_flat = pl.pallas_call(
        kernel,
        out_shape=jax.ShapeDtypeStruct((N, Ho_pad * Wo_pad, Coutp), jnp.bfloat16),
        grid_spec=pltpu.PrefetchScalarGridSpec(
            num_scalar_prefetch=0,
            grid=grid,
            in_specs=in_specs,
            out_specs=out_spec,
            scratch_shapes=scratch,
        ),
        compiler_params=pltpu.CompilerParams(
            dimension_semantics=dims,
            vmem_limit_bytes=vmem_limit,
        ),
        cost_estimate=pl.CostEstimate(flops=flops, transcendentals=0,
                                      bytes_accessed=bytes_accessed),
    )(x_pad, x_pad, w_hwio, shift_p)

    out = out_flat.reshape(N, Ho_pad, Wo_pad, Coutp)[:, :Ho, :Wo, :Cout]
    # Return NCHW f32 to match the PyTorch module interface.
    # TODO(synk): downstream ASPP consumers (concat + 1x1 conv) could take NHWC/bf16 directly
    # and skip this transpose/cast pass.
    return jnp.transpose(out, (0, 3, 1, 2)).astype(jnp.float32)


if __name__ == "__main__":
    # Typical ASPP branch hyper-params (padding == dilation keeps the spatial size).
    N, Cin, Cout, H, W = 2, 4, 8, 16, 16
    KH = KW = 3
    dilation = 2
    padding = 2
    eps = 1e-5

    key = jax.random.PRNGKey(0)
    kx, kw_key = jax.random.split(key)

    x = jax.random.normal(kx, (N, Cin, H, W), dtype=jnp.float32)

    # kaiming_normal_ (fan_in, relu gain): std = sqrt(2 / (Cin*KH*KW))
    fan_in = Cin * KH * KW
    std = (2.0 / fan_in) ** 0.5
    weight = jax.random.normal(kw_key, (Cout, Cin, KH, KW), dtype=jnp.float32) * std

    # BatchNorm params per _init_weight (weight=1, bias=0) + default running stats.
    gamma = jnp.ones((Cout,), jnp.float32)
    beta = jnp.zeros((Cout,), jnp.float32)
    running_mean = jnp.zeros((Cout,), jnp.float32)
    running_var = jnp.ones((Cout,), jnp.float32)

    out = aspp_forward(x, weight, gamma, beta, running_mean, running_var,
                       padding=padding, dilation=dilation)
    out = jax.block_until_ready(out)
    assert out.shape == (N, Cout, H, W), out.shape

    # Reference: identical math (BN folded into weights, running stats, ReLU) on the same
    # bf16-rounded operands, f32 convolution, then bf16 rounding to match the kernel's
    # bf16 output store.  Isolates kernel correctness from bf16 quantization.
    scale = gamma / jnp.sqrt(running_var + eps)
    shift = beta - running_mean * scale
    x_bf = x.astype(jnp.bfloat16).astype(jnp.float32)
    w_folded = (weight * scale[:, None, None, None]).astype(jnp.bfloat16).astype(jnp.float32)
    conv = lax.conv_general_dilated(
        x_bf, w_folded, window_strides=(1, 1),
        padding=((padding, padding), (padding, padding)),
        rhs_dilation=(dilation, dilation),
        dimension_numbers=("NCHW", "OIHW", "NCHW"))
    ref = jnp.maximum(conv + shift[None, :, None, None], 0.0)
    ref = ref.astype(jnp.bfloat16).astype(jnp.float32)
    ref = jax.block_until_ready(ref)

    err = float(jnp.max(jnp.abs(out - ref)))
    tol = 1e-2 * max(1.0, float(jnp.max(jnp.abs(ref))))
    assert err < tol, (err, tol)
    print("KERNEL_OK")
</pallas_src>

<mosaic_0001>
module attributes {stable_mosaic.version = 11 : i64} {
  func.func @kernel(%arg0: i32, %arg1: i32, %arg2: memref<1x16x20x128xbf16, #tpu.memory_space<vmem>>, %arg3: memref<1x8x20x128xbf16, #tpu.memory_space<vmem>>, %arg4: memref<3x3x128x128xbf16, #tpu.memory_space<vmem>>, %arg5: memref<1x128xf32, #tpu.memory_space<vmem>>, %arg6: memref<1x256x128xbf16, #tpu.memory_space<vmem>>) attributes {dimension_semantics = [#tpu.dimension_semantics<parallel>, #tpu.dimension_semantics<parallel>], iteration_bounds = array<i64: 2, 1>, scalar_prefetch = 0 : i64, scratch_operands = 0 : i64, tpu.core_type = #tpu.core_type<tc>, window_params = [{transform_indices = @transform_0, window_bounds = array<i64: 1, 16, 20, 128>}, {transform_indices = @transform_1, window_bounds = array<i64: 1, 8, 20, 128>}, {pipeline_mode = #tpu.pipeline_mode<synchronous>, transform_indices = @transform_2, window_bounds = array<i64: 3, 3, 128, 128>}, {pipeline_mode = #tpu.pipeline_mode<synchronous>, transform_indices = @transform_3, window_bounds = array<i64: 1, 128>}, {transform_indices = @transform_4, window_bounds = array<i64: 1, 256, 128>}]} {
    %c0 = arith.constant 0 : index
    %c0_0 = arith.constant 0 : index
    %c0_1 = arith.constant 0 : index
    %c0_2 = arith.constant 0 : index
    %0 = vector.load %arg2[%c0, %c0_0, %c0_1, %c0_2] : memref<1x16x20x128xbf16, #tpu.memory_space<vmem>>, vector<1x16x20x128xbf16>
    %1 = vector.shape_cast %0 : vector<1x16x20x128xbf16> to vector<16x20x128xbf16>
    %c0_3 = arith.constant 0 : index
    %c0_4 = arith.constant 0 : index
    %c0_5 = arith.constant 0 : index
    %c0_6 = arith.constant 0 : index
    %2 = vector.load %arg3[%c0_3, %c0_4, %c0_5, %c0_6] : memref<1x8x20x128xbf16, #tpu.memory_space<vmem>>, vector<1x8x20x128xbf16>
    %3 = vector.shape_cast %2 : vector<1x8x20x128xbf16> to vector<8x20x128xbf16>
    %4 = tpu.concatenate %1, %3 in 0 : vector<16x20x128xbf16>, vector<8x20x128xbf16> -> vector<24x20x128xbf16>
    %cst = arith.constant 0.000000e+00 : f32
    %5 = vector.broadcast %cst : f32 to vector<256x128xf32>
    %6 = vector.extract_strided_slice %4 {offsets = [0, 0, 0], sizes = [24, 16, 128], strides = [1, 1, 1]} : vector<24x20x128xbf16> to vector<24x16x128xbf16>
    %7 = vector.shape_cast %6 : vector<24x16x128xbf16> to vector<384x128xbf16>
    %8 = vector.extract_strided_slice %7 {offsets = [0, 0], sizes = [256, 128], strides = [1, 1]} : vector<384x128xbf16> to vector<256x128xbf16>
    %c0_7 = arith.constant 0 : index
    %c0_8 = arith.constant 0 : index
    %c0_9 = arith.constant 0 : index
    %c0_10 = arith.constant 0 : index
    %9 = vector.load %arg4[%c0_7, %c0_8, %c0_9, %c0_10] : memref<3x3x128x128xbf16, #tpu.memory_space<vmem>>, vector<1x1x128x128xbf16>
    %10 = vector.shape_cast %9 : vector<1x1x128x128xbf16> to vector<128x128xbf16>
    %cst_11 = arith.constant dense<0.000000e+00> : vector<256x128xf32>
    %11 = tpu.matmul %8, %10, %cst_11 {dimension_numbers = #tpu.dot_dimension_numbers<[1], [0], [0], [1], [0, 0, 1, 1], [], []>} : vector<256x128xbf16>, vector<128x128xbf16>, vector<256x128xf32> -> vector<256x128xf32>
    %12 = arith.addf %5, %11 : vector<256x128xf32>
    %13 = vector.extract_strided_slice %7 {offsets = [32, 0], sizes = [256, 128], strides = [1, 1]} : vector<384x128xbf16> to vector<256x128xbf16>
    %c1 = arith.constant 1 : index
    %c0_12 = arith.constant 0 : index
    %c0_13 = arith.constant 0 : index
    %c0_14 = arith.constant 0 : index
    %14 = vector.load %arg4[%c1, %c0_12, %c0_13, %c0_14] : memref<3x3x128x128xbf16, #tpu.memory_space<vmem>>, vector<1x1x128x128xbf16>
    %15 = vector.shape_cast %14 : vector<1x1x128x128xbf16> to vector<128x128xbf16>
    %cst_15 = arith.constant dense<0.000000e+00> : vector<256x128xf32>
    %16 = tpu.matmul %13, %15, %cst_15 {dimension_numbers = #tpu.dot_dimension_numbers<[1], [0], [0], [1], [0, 0, 1, 1], [], []>} : vector<256x128xbf16>, vector<128x128xbf16>, vector<256x128xf32> -> vector<256x128xf32>
    %17 = arith.addf %12, %16 : vector<256x128xf32>
    %18 = vector.extract_strided_slice %7 {offsets = [64, 0], sizes = [256, 128], strides = [1, 1]} : vector<384x128xbf16> to vector<256x128xbf16>
    %c2 = arith.constant 2 : index
    %c0_16 = arith.constant 0 : index
    %c0_17 = arith.constant 0 : index
    %c0_18 = arith.constant 0 : index
    %19 = vector.load %arg4[%c2, %c0_16, %c0_17, %c0_18] : memref<3x3x128x128xbf16, #tpu.memory_space<vmem>>, vector<1x1x128x128xbf16>
    %20 = vector.shape_cast %19 : vector<1x1x128x128xbf16> to vector<128x128xbf16>
    %cst_19 = arith.constant dense<0.000000e+00> : vector<256x128xf32>
    %21 = tpu.matmul %18, %20, %cst_19 {dimension_numbers = #tpu.dot_dimension_numbers<[1], [0], [0], [1], [0, 0, 1, 1], [], []>} : vector<256x128xbf16>, vector<128x128xbf16>, vector<256x128xf32> -> vector<256x128xf32>
    %22 = arith.addf %17, %21 : vector<256x128xf32>
    %23 = vector.extract_strided_slice %4 {offsets = [0, 2, 0], sizes = [24, 16, 128], strides = [1, 1, 1]} : vector<24x20x128xbf16> to vector<24x16x128xbf16>
    %24 = vector.shape_cast %23 : vector<24x16x128xbf16> to vector<384x128xbf16>
    %25 = vector.extract_strided_slice %24 {offsets = [0, 0], sizes = [256, 128], strides = [1, 1]} : vector<384x128xbf16> to vector<256x128xbf16>
    %c0_20 = arith.constant 0 : index
    %c1_21 = arith.constant 1 : index
    %c0_22 = arith.constant 0 : index
    %c0_23 = arith.constant 0 : index
    %26 = vector.load %arg4[%c0_20, %c1_21, %c0_22, %c0_23] : memref<3x3x128x128xbf16, #tpu.memory_space<vmem>>, vector<1x1x128x128xbf16>
    %27 = vector.shape_cast %26 : vector<1x1x128x128xbf16> to vector<128x128xbf16>
    %cst_24 = arith.constant dense<0.000000e+00> : vector<256x128xf32>
    %28 = tpu.matmul %25, %27, %cst_24 {dimension_numbers = #tpu.dot_dimension_numbers<[1], [0], [0], [1], [0, 0, 1, 1], [], []>} : vector<256x128xbf16>, vector<128x128xbf16>, vector<256x128xf32> -> vector<256x128xf32>
    %29 = arith.addf %22, %28 : vector<256x128xf32>
    %30 = vector.extract_strided_slice %24 {offsets = [32, 0], sizes = [256, 128], strides = [1, 1]} : vector<384x128xbf16> to vector<256x128xbf16>
    %c1_25 = arith.constant 1 : index
    %c1_26 = arith.constant 1 : index
    %c0_27 = arith.constant 0 : index
    %c0_28 = arith.constant 0 : index
    %31 = vector.load %arg4[%c1_25, %c1_26, %c0_27, %c0_28] : memref<3x3x128x128xbf16, #tpu.memory_space<vmem>>, vector<1x1x128x128xbf16>
    %32 = vector.shape_cast %31 : vector<1x1x128x128xbf16> to vector<128x128xbf16>
    %cst_29 = arith.constant dense<0.000000e+00> : vector<256x128xf32>
    %33 = tpu.matmul %30, %32, %cst_29 {dimension_numbers = #tpu.dot_dimension_numbers<[1], [0], [0], [1], [0, 0, 1, 1], [], []>} : vector<256x128xbf16>, vector<128x128xbf16>, vector<256x128xf32> -> vector<256x128xf32>
    %34 = arith.addf %29, %33 : vector<256x128xf32>
    %35 = vector.extract_strided_slice %24 {offsets = [64, 0], sizes = [256, 128], strides = [1, 1]} : vector<384x128xbf16> to vector<256x128xbf16>
    %c2_30 = arith.constant 2 : index
    %c1_31 = arith.constant 1 : index
    %c0_32 = arith.constant 0 : index
    %c0_33 = arith.constant 0 : index
    %36 = vector.load %arg4[%c2_30, %c1_31, %c0_32, %c0_33] : memref<3x3x128x128xbf16, #tpu.memory_space<vmem>>, vector<1x1x128x128xbf16>
    %37 = vector.shape_cast %36 : vector<1x1x128x128xbf16> to vector<128x128xbf16>
    %cst_34 = arith.constant dense<0.000000e+00> : vector<256x128xf32>
    %38 = tpu.matmul %35, %37, %cst_34 {dimension_numbers = #tpu.dot_dimension_numbers<[1], [0], [0], [1], [0, 0, 1, 1], [], []>} : vector<256x128xbf16>, vector<128x128xbf16>, vector<256x128xf32> -> vector<256x128xf32>
    %39 = arith.addf %34, %38 : vector<256x128xf32>
    %40 = vector.extract_strided_slice %4 {offsets = [0, 4, 0], sizes = [24, 16, 128], strides = [1, 1, 1]} : vector<24x20x128xbf16> to vector<24x16x128xbf16>
    %41 = vector.shape_cast %40 : vector<24x16x128xbf16> to vector<384x128xbf16>
    %42 = vector.extract_strided_slice %41 {offsets = [0, 0], sizes = [256, 128], strides = [1, 1]} : vector<384x128xbf16> to vector<256x128xbf16>
    %c0_35 = arith.constant 0 : index
    %c2_36 = arith.constant 2 : index
    %c0_37 = arith.constant 0 : index
    %c0_38 = arith.constant 0 : index
    %43 = vector.load %arg4[%c0_35, %c2_36, %c0_37, %c0_38] : memref<3x3x128x128xbf16, #tpu.memory_space<vmem>>, vector<1x1x128x128xbf16>
    %44 = vector.shape_cast %43 : vector<1x1x128x128xbf16> to vector<128x128xbf16>
    %cst_39 = arith.constant dense<0.000000e+00> : vector<256x128xf32>
    %45 = tpu.matmul %42, %44, %cst_39 {dimension_numbers = #tpu.dot_dimension_numbers<[1], [0], [0], [1], [0, 0, 1, 1], [], []>} : vector<256x128xbf16>, vector<128x128xbf16>, vector<256x128xf32> -> vector<256x128xf32>
    %46 = arith.addf %39, %45 : vector<256x128xf32>
    %47 = vector.extract_strided_slice %41 {offsets = [32, 0], sizes = [256, 128], strides = [1, 1]} : vector<384x128xbf16> to vector<256x128xbf16>
    %c1_40 = arith.constant 1 : index
    %c2_41 = arith.constant 2 : index
    %c0_42 = arith.constant 0 : index
    %c0_43 = arith.constant 0 : index
    %48 = vector.load %arg4[%c1_40, %c2_41, %c0_42, %c0_43] : memref<3x3x128x128xbf16, #tpu.memory_space<vmem>>, vector<1x1x128x128xbf16>
    %49 = vector.shape_cast %48 : vector<1x1x128x128xbf16> to vector<128x128xbf16>
    %cst_44 = arith.constant dense<0.000000e+00> : vector<256x128xf32>
    %50 = tpu.matmul %47, %49, %cst_44 {dimension_numbers = #tpu.dot_dimension_numbers<[1], [0], [0], [1], [0, 0, 1, 1], [], []>} : vector<256x128xbf16>, vector<128x128xbf16>, vector<256x128xf32> -> vector<256x128xf32>
    %51 = arith.addf %46, %50 : vector<256x128xf32>
    %52 = vector.extract_strided_slice %41 {offsets = [64, 0], sizes = [256, 128], strides = [1, 1]} : vector<384x128xbf16> to vector<256x128xbf16>
    %c2_45 = arith.constant 2 : index
    %c2_46 = arith.constant 2 : index
    %c0_47 = arith.constant 0 : index
    %c0_48 = arith.constant 0 : index
    %53 = vector.load %arg4[%c2_45, %c2_46, %c0_47, %c0_48] : memref<3x3x128x128xbf16, #tpu.memory_space<vmem>>, vector<1x1x128x128xbf16>
    %54 = vector.shape_cast %53 : vector<1x1x128x128xbf16> to vector<128x128xbf16>
    %cst_49 = arith.constant dense<0.000000e+00> : vector<256x128xf32>
    %55 = tpu.matmul %52, %54, %cst_49 {dimension_numbers = #tpu.dot_dimension_numbers<[1], [0], [0], [1], [0, 0, 1, 1], [], []>} : vector<256x128xbf16>, vector<128x128xbf16>, vector<256x128xf32> -> vector<256x128xf32>
    %56 = arith.addf %51, %55 : vector<256x128xf32>
    %c0_50 = arith.constant 0 : index
    %c0_51 = arith.constant 0 : index
    %57 = vector.load %arg5[%c0_50, %c0_51] : memref<1x128xf32, #tpu.memory_space<vmem>>, vector<1x128xf32>
    %58 = vector.broadcast %57 : vector<1x128xf32> to vector<256x128xf32>
    %59 = arith.addf %56, %58 : vector<256x128xf32>
    %cst_52 = arith.constant 0.000000e+00 : f32
    %60 = vector.broadcast %cst_52 : f32 to vector<256x128xf32>
    %61 = arith.maximumf %59, %60 : vector<256x128xf32>
    %62 = arith.truncf %61 : vector<256x128xf32> to vector<256x128xbf16>
    %c0_53 = arith.constant 0 : index
    %c0_54 = arith.constant 0 : index
    %c0_55 = arith.constant 0 : index
    %63 = vector.load %arg6[%c0_53, %c0_54, %c0_55] : memref<1x256x128xbf16, #tpu.memory_space<vmem>>, vector<1x256x128xbf16>
    %64 = vector.shape_cast %63 : vector<1x256x128xbf16> to vector<256x128xbf16>
    %65 = vector.shape_cast %62 : vector<256x128xbf16> to vector<1x256x128xbf16>
    tpu.vector_store %arg6[%c0_53, %c0_54, %c0_55], %65 {strides = array<i32>} : memref<1x256x128xbf16, #tpu.memory_space<vmem>>, vector<1x256x128xbf16>,
    return
  }
  func.func @transform_0(%arg0: i32, %arg1: i32) -> (i32, i32, i32, i32) {
    %c0_i32 = arith.constant 0 : i32
    %c0_i32_0 = arith.constant 0 : i32
    %c0_i32_1 = arith.constant 0 : i32
    return %arg0, %arg1, %c0_i32, %c0_i32_0 : i32, i32, i32, i32
  }
  func.func @transform_1(%arg0: i32, %arg1: i32) -> (i32, i32, i32, i32) {
    %c1_i32 = arith.constant 1 : i32
    %0 = arith.addi %arg1, %c1_i32 : i32
    %c2_i32 = arith.constant 2 : i32
    %1 = arith.muli %0, %c2_i32 : i32
    %c0_i32 = arith.constant 0 : i32
    %c0_i32_0 = arith.constant 0 : i32
    %c0_i32_1 = arith.constant 0 : i32
    return %arg0, %1, %c0_i32, %c0_i32_0 : i32, i32, i32, i32
  }
  func.func @transform_2(%arg0: i32, %arg1: i32) -> (i32, i32, i32, i32) {
    %c0_i32 = arith.constant 0 : i32
    %c0_i32_0 = arith.constant 0 : i32
    %c0_i32_1 = arith.constant 0 : i32
    %c0_i32_2 = arith.constant 0 : i32
    %c0_i32_3 = arith.constant 0 : i32
    return %c0_i32, %c0_i32_0, %c0_i32_1, %c0_i32_2 : i32, i32, i32, i32
  }
  func.func @transform_3(%arg0: i32, %arg1: i32) -> (i32, i32) {
    %c0_i32 = arith.constant 0 : i32
    %c0_i32_0 = arith.constant 0 : i32
    %c0_i32_1 = arith.constant 0 : i32
    return %c0_i32, %c0_i32_0 : i32, i32
  }
  func.func @transform_4(%arg0: i32, %arg1: i32) -> (i32, i32, i32) {
    %c0_i32 = arith.constant 0 : i32
    %c0_i32_0 = arith.constant 0 : i32
    return %arg0, %arg1, %c0_i32 : i32, i32, i32
  }
}

</mosaic_0001>

<llo_original>
// kernel: aspp_forward.1
$region0: #{aspp_forward.1}
  #allocation0 [shape = 'u32[]', space=smem, size = 0x4, offset = 0x4, fixed_abs, tag = 'smem constant byte address 0x4 - core index']
  #allocation1 [shape = 'u32[144,128]{1,0:T(1,128)}', space=vmem, size = 0x12000, scoped, tag = 'internal scratch']
  %s0 = inlined_call_operand.vmem [shape: bf16[2,32,20,128], index: 0, kind: input, shape index: {}, may-alias: {0,1}]
  %s1 = inlined_call_operand.vmem [shape: bf16[2,32,20,128], index: 1, kind: input, shape index: {}, may-alias: {0,1}]
  %s2 = inlined_call_operand.vmem [shape: bf16[3,3,128,128], index: 2, kind: input, shape index: {}]
  %s3 = inlined_call_operand.vmem [shape: f32[1,128], index: 3, kind: input, shape index: {}]
  %s4 = inlined_call_operand.vmem [shape: bf16[2,256,128], index: 4, kind: output, shape index: {}]
  %s5 = sld [smem:[#allocation0]]
  $region49: #{aspp_forward.1} parent=0
    _
  %s7 = ssub.s32 1, %s5
  %s8 = scalar_select 0, %s7, %s5
  loop: start=0, step=1, limit=4
  $region2: #{aspp_forward.1} parent=0 // loop_pre_header
    _
  $region3: #{aspp_forward.1} parent=0 // loop_header
    %s10 = sphi 0, %s14
    %p11 = scmp.ge.s32.totalorder %s10, 4
    %s17 = sphi 0, %s29
    %s18 = sphi 0, %s25
    %s19 = sphi 0, %s17
    %s20 = sphi 0, %s18
    %s21 = sphi 0, %s19
    %s22 = sphi 0, %s20
    %s34 = sphi 0, %s36
    %s37 = sphi 0, %s34
    %s38 = sphi 0, %s37
    %s54 = sphi 0, %s38
    %s66 = sphi 0, %s68
    %s69 = sphi 0, %s66
    %s70 = sphi 0, %s69
    %s86 = sphi 0, %s70
    %s90 = sphi 0, %s90
    %s92 = sphi 0, %s90
    %s93 = sphi 0, %s92
    %s107 = sphi 0, %s93
    %s111 = sphi 0, %s111
    %s113 = sphi 0, %s111
    %s114 = sphi 0, %s113
    %s128 = sphi 0, %s114
    %s136 = sphi 0, %s138
    %s139 = sphi 0, %s136
    %s140 = sphi 0, %s139
    %s156 = sphi 0, %s140
  $region4: #{aspp_forward.1} parent=0 // loop_header_branch
    %13 = sbr.rel (%p11) target = $region8
  $region5: #{aspp_forward.1} parent=0 // loop_body
    %s15 = ssub.s32 %s10, 1
    %s16 = ssub.s32 %s10, 2
    %s23 = sadd.s32 1, %s18
    %p24 = scmp.ge.s32.totalorder %s23, 1
    %s25 = scalar_select %p24, 0, %s23
    %s26 = sadd.s32 1, %s17
    %s27 = scalar_select %p24, %s26, %s17
    %p28 = scmp.ge.s32.totalorder %s27, 2
    %s29 = scalar_select %p28, 0, %s27
    %s30 = ssub.s32 %s17, %s29
    %s31 = ssub.s32 %s18, %s25
    %s32 = sor.u32 %s30, %s31
    %p33 = scmp.eq.s32.totalorder %s32, 0
    %s35 = sadd.s32 %s34, 1
    %s36 = scalar_select %p33, %s34, %s35
    %p39 = pneg %p33
    %p40 = scmp.eq.s32.totalorder %s10, 1
    %p41 = por %p39, %p40
    %p42 = scmp.ne.s32.totalorder %s34, %s37
    %p43 = scmp.eq.s32.totalorder %s10, 0
    %p44 = por %p42, %p43
    %p45 = scmp.ne.s32.totalorder %s34, %s37
    %p46 = scmp.eq.s32.totalorder %s15, 1
    %p47 = por %p45, %p46
    %p48 = scmp.ne.s32.totalorder %s37, %s38
    %p49 = scmp.eq.s32.totalorder %s15, 0
    %p50 = por %p48, %p49
    %p51 = scmp.ne.s32.totalorder %s37, %s38
    %p52 = scmp.eq.s32.totalorder %s16, 1
    %p53 = por %p51, %p52
    %p55 = scmp.ne.s32.totalorder %s38, %s54
    %p56 = scmp.eq.s32.totalorder %s16, 0
    %p57 = por %p55, %p56
    %s58 = sadd.s32 %s18, 1
    %s59 = smul.u32 %s58, 2
    %s60 = sadd.s32 %s25, 1
    %s61 = smul.u32 %s60, 2
    %s62 = ssub.s32 %s17, %s29
    %s63 = ssub.s32 %s59, %s61
    %s64 = sor.u32 %s62, %s63
    %p65 = scmp.eq.s32.totalorder %s64, 0
    %s67 = sadd.s32 %s66, 1
    %s68 = scalar_select %p65, %s66, %s67
    %p71 = pneg %p65
    %p72 = scmp.eq.s32.totalorder %s10, 1
    %p73 = por %p71, %p72
    %p74 = scmp.ne.s32.totalorder %s66, %s69
    %p75 = scmp.eq.s32.totalorder %s10, 0
    %p76 = por %p74, %p75
    %p77 = scmp.ne.s32.totalorder %s66, %s69
    %p78 = scmp.eq.s32.totalorder %s15, 1
    %p79 = por %p77, %p78
    %p80 = scmp.ne.s32.totalorder %s69, %s70
    %p81 = scmp.eq.s32.totalorder %s15, 0
    %p82 = por %p80, %p81
    %p83 = scmp.ne.s32.totalorder %s69, %s70
    %p84 = scmp.eq.s32.totalorder %s16, 1
    %p85 = por %p83, %p84
    %p87 = scmp.ne.s32.totalorder %s70, %s86
    %p88 = scmp.eq.s32.totalorder %s16, 0
    %p89 = por %p87, %p88
    %s91 = sadd.s32 %s90, 1
    %p94 = scmp.eq.s32.totalorder %s10, 1
    %p95 = scmp.ne.s32.totalorder %s90, %s92
    %p96 = scmp.eq.s32.totalorder %s10, 0
    %p97 = por %p95, %p96
    %p98 = scmp.ne.s32.totalorder %s90, %s92
    %p99 = scmp.eq.s32.totalorder %s15, 1
    %p100 = por %p98, %p99
    %p101 = scmp.ne.s32.totalorder %s92, %s93
    %p102 = scmp.eq.s32.totalorder %s15, 0
    %p103 = por %p101, %p102
    %p104 = scmp.ne.s32.totalorder %s92, %s93
    %p105 = scmp.eq.s32.totalorder %s16, 1
    %p106 = por %p104, %p105
    %p108 = scmp.ne.s32.totalorder %s93, %s107
    %p109 = scmp.eq.s32.totalorder %s16, 0
    %p110 = por %p108, %p109
    %s112 = sadd.s32 %s111, 1
    %p115 = scmp.eq.s32.totalorder %s10, 1
    %p116 = scmp.ne.s32.totalorder %s111, %s113
    %p117 = scmp.eq.s32.totalorder %s10, 0
    %p118 = por %p116, %p117
    %p119 = scmp.ne.s32.totalorder %s111, %s113
    %p120 = scmp.eq.s32.totalorder %s15, 1
    %p121 = por %p119, %p120
    %p122 = scmp.ne.s32.totalorder %s113, %s114
    %p123 = scmp.eq.s32.totalorder %s15, 0
    %p124 = por %p122, %p123
    %p125 = scmp.ne.s32.totalorder %s113, %s114
    %p126 = scmp.eq.s32.totalorder %s16, 1
    %p127 = por %p125, %p126
    %p129 = scmp.ne.s32.totalorder %s114, %s128
    %p130 = scmp.eq.s32.totalorder %s16, 0
    %p131 = por %p129, %p130
    %s132 = ssub.s32 %s17, %s29
    %s133 = ssub.s32 %s18, %s25
    %s134 = sor.u32 %s132, %s133
    %p135 = scmp.eq.s32.totalorder %s134, 0
    %s137 = sadd.s32 %s136, 1
    %s138 = scalar_select %p135, %s136, %s137
    %p141 = pneg %p135
    %p142 = scmp.eq.s32.totalorder %s10, 1
    %p143 = por %p141, %p142
    %p144 = scmp.ne.s32.totalorder %s136, %s139
    %p145 = scmp.eq.s32.totalorder %s10, 0
    %p146 = por %p144, %p145
    %p147 = scmp.ne.s32.totalorder %s136, %s139
    %p148 = scmp.eq.s32.totalorder %s15, 1
    %p149 = por %p147, %p148
    %p150 = scmp.ne.s32.totalorder %s139, %s140
    %p151 = scmp.eq.s32.totalorder %s15, 0
    %p152 = por %p150, %p151
    %p153 = scmp.ne.s32.totalorder %s139, %s140
    %p154 = scmp.eq.s32.totalorder %s16, 1
    %p155 = por %p153, %p154
    %p157 = scmp.ne.s32.totalorder %s140, %s156
    %p158 = scmp.eq.s32.totalorder %s16, 0
    %p159 = por %p157, %p158
    %p160 = scmp.le.s32.totalorder 1, %s10
    %p161 = scmp.lt.s32.totalorder %s10, 3
    %p162 = pnand %p160, %p161
    %p163 = pneg %p162
    // Predicated region
    $region9: #{aspp_forward.1} parent=5 // pred_check
      _
    $region10: #{aspp_forward.1} parent=5 // pred_check_branch
      %165 = sbr.rel (%p162) target = $region12
    $region11: #{aspp_forward.1} parent=5 // pred_region
      %s166 = ssub.s32 %s10, 1
      // Predicated region
      $region13: #{aspp_forward.1} parent=11 // pred_check
        %p167 = pneg %p103
      $region14: #{aspp_forward.1} parent=11 // pred_check_branch
        %169 = sbr.rel (%p167) target = $region16
      $region15: #{aspp_forward.1} parent=11 // pred_region
        _
      $region16: #{aspp_forward.1} parent=11 // pred_fallthru
        _
      // Predicated region
      $region17: #{aspp_forward.1} parent=11 // pred_check
        %p170 = pneg %p124
      $region18: #{aspp_forward.1} parent=11 // pred_check_branch
        %172 = sbr.rel (%p170) target = $region20
      $region19: #{aspp_forward.1} parent=11 // pred_region
        _
      $region20: #{aspp_forward.1} parent=11 // pred_fallthru
        _
    $region12: #{aspp_forward.1} parent=5 // pred_fallthru
      _
    %p173 = scmp.lt.s32.totalorder %s10, 2
    // Predicated region
    $region21: #{aspp_forward.1} parent=5 // pred_check
      %p174 = pneg %p173
    $region22: #{aspp_forward.1} parent=5 // pred_check_branch
      %176 = sbr.rel (%p174) target = $region24
    $region23: #{aspp_forward.1} parent=5 // pred_region
      // Predicated region
      $region25: #{aspp_forward.1} parent=23 // pred_check
        %p177 = pneg %p44
      $region26: #{aspp_forward.1} parent=23 // pred_check_branch
        %179 = sbr.rel (%p177) target = $region28
      $region27: #{aspp_forward.1} parent=23 // pred_region
        %s180 = smul.u32 16, %s18
        %p181 = scmp.lt.s32.totalorder %s17, 1
        %s182 = scalar_select %p181, %s17, 1
        %p183 = scmp.lt.s32.totalorder %s180, 31
        %s184 = scalar_select %p183, %s180, 31
        %s185 = smul.addr %s184, 3
        %s186 = smul.addr %s182, 96
        %s187 = sadd.s32 %s185, %s186
        %s188 = smul.addr %s187, 4
        %s189 = scalar_lea.vmem %s0, %s188
        %s190 = smul.u32 16, %s18
      $region28: #{aspp_forward.1} parent=23 // pred_fallthru
        _
      // Predicated region
      $region29: #{aspp_forward.1} parent=23 // pred_check
        %p191 = pneg %p76
      $region30: #{aspp_forward.1} parent=23 // pred_check_branch
        %193 = sbr.rel (%p191) target = $region32
      $region31: #{aspp_forward.1} parent=23 // pred_region
        %s194 = sadd.s32 %s18, 1
        %s195 = smul.u32 %s194, 2
        %s196 = smul.u32 8, %s195
        %p197 = scmp.lt.s32.totalorder %s17, 1
        %s198 = scalar_select %p197, %s17, 1
        %p199 = scmp.lt.s32.totalorder %s196, 31
        %s200 = scalar_select %p199, %s196, 31
        %s201 = smul.addr %s200, 3
        %s202 = smul.addr %s198, 96
        %s203 = sadd.s32 %s201, %s202
        %s204 = smul.addr %s203, 4
        %s205 = scalar_lea.vmem %s1, %s204
        %s206 = sadd.s32 %s18, 1
        %s207 = smul.u32 %s206, 2
        %s208 = smul.u32 8, %s207
      $region32: #{aspp_forward.1} parent=23 // pred_fallthru
        _
    $region24: #{aspp_forward.1} parent=5 // pred_fallthru
      _
    %p209 = scmp.le.s32.totalorder 1, %s10
    %p210 = scmp.lt.s32.totalorder %s10, 3
    %p211 = pnand %p209, %p210
    %p212 = pneg %p211
    // Predicated region
    $region33: #{aspp_forward.1} parent=5 // pred_check
      _
    $region34: #{aspp_forward.1} parent=5 // pred_check_branch
      %214 = sbr.rel (%p211) target = $region36
    $region35: #{aspp_forward.1} parent=5 // pred_region
      %s215 = ssub.s32 %s10, 1
      %s216 = smul.u32 16, %s20
      %p217 = scmp.lt.s32.totalorder %s19, 1
      %s218 = scalar_select %p217, %s19, 1
      %p219 = scmp.lt.s32.totalorder %s216, 31
      %s220 = scalar_select %p219, %s216, 31
      %s221 = smul.addr %s220, 3
      %s222 = smul.addr %s218, 96
      %s223 = sadd.s32 %s221, %s222
      %s224 = smul.addr %s223, 4
      %s225 = scalar_lea.vmem %s0, %s224
      %p226 = pneg %p50
      %p227 = pneg %p47
      %s228 = sadd.s32 %s20, 1
      %s229 = smul.u32 %s228, 2
      %s230 = smul.u32 8, %s229
      %p231 = scmp.lt.s32.totalorder %s19, 1
      %s232 = scalar_select %p231, %s19, 1
      %p233 = scmp.lt.s32.totalorder %s230, 31
      %s234 = scalar_select %p233, %s230, 31
      %s235 = smul.addr %s234, 3
      %s236 = smul.addr %s232, 96
      %s237 = sadd.s32 %s235, %s236
      %s238 = smul.addr %s237, 4
      %s239 = scalar_lea.vmem %s1, %s238
      %p240 = pneg %p82
      %p241 = pneg %p79
      %p242 = pneg %p103
      %p243 = pneg %p100
      %p244 = pneg %p124
      %p245 = pneg %p121
      %p246 = pneg %p152
      %p247 = pneg %p149
      %s248 = smul.u32 32, %s20
      %p249 = scmp.lt.s32.totalorder %s19, 1
      %s250 = scalar_select %p249, %s19, 1
      %p251 = scmp.lt.s32.totalorder %s248, 31
      %s252 = scalar_select %p251, %s248, 31
      %s253 = smul.addr %s250, 32
      %s254 = sadd.s32 %s252, %s253
      %s255 = smul.addr %s254, 4
      %s256 = scalar_lea.vmem %s4, %s255
      %s257 = smul.u32 16, %s20
      %p258 = scmp.lt.s32.totalorder %s19, 1
      %s259 = scalar_select %p258, %s19, 1
      %p260 = scmp.lt.s32.totalorder %s257, 31
      %s261 = scalar_select %p260, %s257, 31
      %s262 = smul.addr %s261, 3
      %s263 = smul.addr %s259, 96
      %s264 = sadd.s32 %s262, %s263
      %s265 = smul.addr %s264, 4
      %s266 = scalar_lea.vmem %s0, %s265
      %s267 = smul.u32 16, %s20
      %s268 = sadd.s32 %s20, 1
      %s269 = smul.u32 %s268, 2
      %s270 = smul.u32 8, %s269
      %p271 = scmp.lt.s32.totalorder %s19, 1
      %s272 = scalar_select %p271, %s19, 1
      %p273 = scmp.lt.s32.totalorder %s270, 31
      %s274 = scalar_select %p273, %s270, 31
      %s275 = smul.addr %s274, 3
      %s276 = smul.addr %s272, 96
      %s277 = sadd.s32 %s275, %s276
      %s278 = smul.addr %s277, 4
      %s279 = scalar_lea.vmem %s1, %s278
      %s280 = sadd.s32 %s20, 1
      %s281 = smul.u32 %s280, 2
      %s282 = smul.u32 8, %s281
      %s283 = smul.u32 32, %s20
      %p284 = scmp.lt.s32.totalorder %s19, 1
      %s285 = scalar_select %p284, %s19, 1
      %p286 = scmp.lt.s32.totalorder %s283, 31
      %s287 = scalar_select %p286, %s283, 31
      %s288 = smul.addr %s285, 32
      %s289 = sadd.s32 %s287, %s288
      %s290 = smul.addr %s289, 4
      %s291 = scalar_lea.vmem %s4, %s290
      %s292 = smul.u32 32, %s20
      %v294 = vld [vmem:[%s266] sm:$0xf]
      %v295 = vld [vmem:[%s266 + $0x4] sm:$0xf]
      %v296 = vld [vmem:[%s266 + $0x8] sm:$0x3]
      %v297 = vld [vmem:[%s266 + $0xc] sm:$0xf]
      %v298 = vld [vmem:[%s266 + $0x10] sm:$0xf]
      %v299 = vld [vmem:[%s266 + $0x14] sm:$0x3]
      %v300 = vld [vmem:[%s266 + $0x18] sm:$0xf]
      %v301 = vld [vmem:[%s266 + $0x1c] sm:$0xf]
      %v302 = vld [vmem:[%s266 + $0x20] sm:$0x3]
      %v303 = vld [vmem:[%s266 + $0x24] sm:$0xf]
      %v304 = vld [vmem:[%s266 + $0x28] sm:$0xf]
      %v305 = vld [vmem:[%s266 + $0x2c] sm:$0x3]
      %v306 = vld [vmem:[%s266 + $0x30] sm:$0xf]
      %v307 = vld [vmem:[%s266 + $0x34] sm:$0xf]
      %v308 = vld [vmem:[%s266 + $0x38] sm:$0x3]
      %v309 = vld [vmem:[%s266 + $0x3c] sm:$0xf]
      %v310 = vld [vmem:[%s266 + $0x40] sm:$0xf]
      %v311 = vld [vmem:[%s266 + $0x44] sm:$0x3]
      %v312 = vld [vmem:[%s266 + $0x48] sm:$0xf]
      %v313 = vld [vmem:[%s266 + $0x4c] sm:$0xf]
      %v314 = vld [vmem:[%s266 + $0x50] sm:$0x3]
      %v315 = vld [vmem:[%s266 + $0x54] sm:$0xf]
      %v316 = vld [vmem:[%s266 + $0x58] sm:$0xf]
      %v317 = vld [vmem:[%s266 + $0x5c] sm:$0x3]
      %v318 = vld [vmem:[%s266 + $0x60] sm:$0xf]
      %v319 = vld [vmem:[%s266 + $0x64] sm:$0xf]
      %v320 = vld [vmem:[%s266 + $0x68] sm:$0x3]
      %v321 = vld [vmem:[%s266 + $0x6c] sm:$0xf]
      %v322 = vld [vmem:[%s266 + $0x70] sm:$0xf]
      %v323 = vld [vmem:[%s266 + $0x74] sm:$0x3]
      %v324 = vld [vmem:[%s266 + $0x78] sm:$0xf]
      %v325 = vld [vmem:[%s266 + $0x7c] sm:$0xf]
      %v326 = vld [vmem:[%s266 + $0x80] sm:$0x3]
      %v327 = vld [vmem:[%s266 + $0x84] sm:$0xf]
      %v328 = vld [vmem:[%s266 + $0x88] sm:$0xf]
      %v329 = vld [vmem:[%s266 + $0x8c] sm:$0x3]
      %v330 = vld [vmem:[%s266 + $0x90] sm:$0xf]
      %v331 = vld [vmem:[%s266 + $0x94] sm:$0xf]
      %v332 = vld [vmem:[%s266 + $0x98] sm:$0x3]
      %v333 = vld [vmem:[%s266 + $0x9c] sm:$0xf]
      %v334 = vld [vmem:[%s266 + $0xa0] sm:$0xf]
      %v335 = vld [vmem:[%s266 + $0xa4] sm:$0x3]
      %v336 = vld [vmem:[%s266 + $0xa8] sm:$0xf]
      %v337 = vld [vmem:[%s266 + $0xac] sm:$0xf]
      %v338 = vld [vmem:[%s266 + $0xb0] sm:$0x3]
      %v339 = vld [vmem:[%s266 + $0xb4] sm:$0xf]
      %v340 = vld [vmem:[%s266 + $0xb8] sm:$0xf]
      %v341 = vld [vmem:[%s266 + $0xbc] sm:$0x3]
      %v342 = vld [vmem:[%s279] sm:$0xf]
      %v343 = vld [vmem:[%s279 + $0x4] sm:$0xf]
      %v344 = vld [vmem:[%s279 + $0x8] sm:$0x3]
      %v345 = vld [vmem:[%s279 + $0xc] sm:$0xf]
      %v346 = vld [vmem:[%s279 + $0x10] sm:$0xf]
      %v347 = vld [vmem:[%s279 + $0x14] sm:$0x3]
      %v348 = vld [vmem:[%s279 + $0x18] sm:$0xf]
      %v349 = vld [vmem:[%s279 + $0x1c] sm:$0xf]
      %v350 = vld [vmem:[%s279 + $0x20] sm:$0x3]
      %v351 = vld [vmem:[%s279 + $0x24] sm:$0xf]
      %v352 = vld [vmem:[%s279 + $0x28] sm:$0xf]
      %v353 = vld [vmem:[%s279 + $0x2c] sm:$0x3]
      %v354 = vld [vmem:[%s2] sm:$0xf]
      %v355 = vld [vmem:[%s2 + $0x4] sm:$0xf]
      %v356 = vld [vmem:[%s2 + $0x8] sm:$0xf]
      %v357 = vld [vmem:[%s2 + $0xc] sm:$0xf]
      %v358 = vld [vmem:[%s2 + $0x10] sm:$0xf]
      %v359 = vld [vmem:[%s2 + $0x14] sm:$0xf]
      %v360 = vld [vmem:[%s2 + $0x18] sm:$0xf]
      %v361 = vld [vmem:[%s2 + $0x1c] sm:$0xf]
      %v362 = vld [vmem:[%s2 + $0x20] sm:$0xf]
      %v363 = vld [vmem:[%s2 + $0x24] sm:$0xf]
      %v364 = vld [vmem:[%s2 + $0x28] sm:$0xf]
      %v365 = vld [vmem:[%s2 + $0x2c] sm:$0xf]
      %v366 = vld [vmem:[%s2 + $0x30] sm:$0xf]
      %v367 = vld [vmem:[%s2 + $0x34] sm:$0xf]
      %v368 = vld [vmem:[%s2 + $0x38] sm:$0xf]
      %v369 = vld [vmem:[%s2 + $0x3c] sm:$0xf]
      %s370 = scalar_lea.vmem %s2, 192
      %v371 = vld [vmem:[%s370] sm:$0xf]
      %v372 = vld [vmem:[%s370 + $0x4] sm:$0xf]
      %v373 = vld [vmem:[%s370 + $0x8] sm:$0xf]
      %v374 = vld [vmem:[%s370 + $0xc] sm:$0xf]
      %v375 = vld [vmem:[%s370 + $0x10] sm:$0xf]
      %v376 = vld [vmem:[%s370 + $0x14] sm:$0xf]
      %v377 = vld [vmem:[%s370 + $0x18] sm:$0xf]
      %v378 = vld [vmem:[%s370 + $0x1c] sm:$0xf]
      %v379 = vld [vmem:[%s370 + $0x20] sm:$0xf]
      %v380 = vld [vmem:[%s370 + $0x24] sm:$0xf]
      %v381 = vld [vmem:[%s370 + $0x28] sm:$0xf]
      %v382 = vld [vmem:[%s370 + $0x2c] sm:$0xf]
      %v383 = vld [vmem:[%s370 + $0x30] sm:$0xf]
      %v384 = vld [vmem:[%s370 + $0x34] sm:$0xf]
      %v385 = vld [vmem:[%s370 + $0x38] sm:$0xf]
      %v386 = vld [vmem:[%s370 + $0x3c] sm:$0xf]
      %v419 = vunpack.c.l.b16 %v300
      %v420 = vunpack.c.l.b16 %v301
      %v421 = vunpack.c.l.b16 %v303
      %v422 = vunpack.c.l.b16 %v304
      %v423 = vunpack.c.l.b16 %v306
      %v424 = vunpack.c.l.b16 %v307
      %v425 = vunpack.c.l.b16 %v309
      %v426 = vunpack.c.l.b16 %v310
      %v427 = vunpack.c.l.b16 %v312
      %v428 = vunpack.c.l.b16 %v313
      %v429 = vunpack.c.l.b16 %v315
      %v430 = vunpack.c.l.b16 %v316
      %v431 = vunpack.c.l.b16 %v318
      %v432 = vunpack.c.l.b16 %v319
      %v433 = vunpack.c.l.b16 %v321
      %v434 = vunpack.c.l.b16 %v322
      %v435 = vunpack.c.l.b16 %v324
      %v436 = vunpack.c.l.b16 %v325
      %v437 = vunpack.c.l.b16 %v327
      %v438 = vunpack.c.l.b16 %v328
      %v439 = vunpack.c.l.b16 %v330
      %v440 = vunpack.c.l.b16 %v331
      %v441 = vunpack.c.l.b16 %v333
      %v442 = vunpack.c.l.b16 %v334
      %v443 = vunpack.c.l.b16 %v336
      %v444 = vunpack.c.l.b16 %v337
      %v445 = vunpack.c.l.b16 %v339
      %v446 = vunpack.c.l.b16 %v340
      %v447 = vunpack.c.l.b16 %v342
      %v448 = vunpack.c.l.b16 %v343
      %v449 = vunpack.c.l.b16 %v345
      %v450 = vunpack.c.l.b16 %v346
      %v451 = vpack.c.b16 %v420, %v419
      %v452 = vpack.c.b16 %v422, %v421
      %v453 = vpack.c.b16 %v424, %v423
      %v454 = vpack.c.b16 %v426, %v425
      %v455 = vpack.c.b16 %v428, %v427
      %v456 = vpack.c.b16 %v430, %v429
      %v457 = vpack.c.b16 %v432, %v431
      %v458 = vpack.c.b16 %v434, %v433
      %v459 = vpack.c.b16 %v436, %v435
      %v460 = vpack.c.b16 %v438, %v437
      %v461 = vpack.c.b16 %v440, %v439
      %v462 = vpack.c.b16 %v442, %v441
      %v463 = vpack.c.b16 %v444, %v443
      %v464 = vpack.c.b16 %v446, %v445
      %v465 = vpack.c.b16 %v448, %v447
      %v466 = vpack.c.b16 %v450, %v449
      %v499 = vunpack.c.l.b16 %v371
      %v500 = vunpack.c.l.b16 %v372
      %v501 = vunpack.c.l.b16 %v373
      %v502 = vunpack.c.l.b16 %v374
      %v503 = vunpack.c.l.b16 %v375
      %v504 = vunpack.c.l.b16 %v376
      %v505 = vunpack.c.l.b16 %v377
      %v506 = vunpack.c.l.b16 %v378
      %v507 = vunpack.c.l.b16 %v379
      %v508 = vunpack.c.l.b16 %v380
      %v509 = vunpack.c.l.b16 %v381
      %v510 = vunpack.c.l.b16 %v382
      %v511 = vunpack.c.l.b16 %v383
      %v512 = vunpack.c.l.b16 %v384
      %v513 = vunpack.c.l.b16 %v385
      %v514 = vunpack.c.l.b16 %v386
      %v515 = vpack.c.b16 %v500, %v499
      %v516 = vpack.c.b16 %v502, %v501
      %v517 = vpack.c.b16 %v504, %v503
      %v518 = vpack.c.b16 %v506, %v505
      %v519 = vpack.c.b16 %v508, %v507
      %v520 = vpack.c.b16 %v510, %v509
      %v521 = vpack.c.b16 %v512, %v511
      %v522 = vpack.c.b16 %v514, %v513
      %531 = vmatprep.subr.bf16.mxu0 0
      %532 = vmatpush1.bf16.msra.mxu0 %v522
      %533 = vmatprep.subr.bf16.mxu0 0
      %534 = vmatpush1.bf16.msra.mxu0 %v521
      %535 = vmatprep.subr.bf16.mxu0 0
      %536 = vmatpush1.bf16.msra.mxu0 %v520
      %537 = vmatprep.subr.bf16.mxu0 0
      %538 = vmatpush1.bf16.msra.mxu0 %v519
      %539 = vmatprep.subr.bf16.mxu0 0
      %540 = vmatpush1.bf16.msra.mxu0 %v518
      %541 = vmatprep.subr.bf16.mxu0 0
      %542 = vmatpush1.bf16.msra.mxu0 %v517
      %543 = vmatprep.subr.bf16.mxu0 0
      %544 = vmatpush1.bf16.msra.mxu0 %v516
      %545 = vmatprep.subr.bf16.mxu0 0
      %546 = vmatpush1.bf16.msra.mxu0 %v515
      %547 = vmatprep.subr.bf16.mxu0 0
      %548 = vmatpush2.bf16.msra.mxu0 0
      %549 = vmatprep.subr.bf16.mxu0 0
      %550 = vmatpush2.bf16.msra.mxu0 0
      %551 = vmatprep.subr.bf16.mxu0 0
      %552 = vmatpush2.bf16.msra.mxu0 0
      %553 = vmatprep.subr.bf16.mxu0 0
      %554 = vmatpush2.bf16.msra.mxu0 0
      %555 = vmatprep.subr.bf16.mxu0 0
      %556 = vmatpush2.bf16.msra.mxu0 0
      %557 = vmatprep.subr.bf16.mxu0 0
      %558 = vmatpush2.bf16.msra.mxu0 0
      %559 = vmatprep.subr.bf16.mxu0 0
      %560 = vmatpush2.bf16.msra.mxu0 0
      %561 = vmatprep.subr.bf16.mxu0 0
      %562 = vmatpush2.bf16.msra.mxu0 0
      %563 = vmatprep.mubr.bf16.mxu0 0
      %564 = vmatmul.mubr.bf16.gmra.mxu0 %v451
      %v565 = vpop.f32.mrf.mxu0
      %v566 = vadd.f32 0.0, %v565
      %v567 = vpop.f32.mrf.mxu0
      %v568 = vpop.f32.mrf.mxu0
      %v569 = vadd.f32 0.0, %v568
      %v570 = vpop.f32.mrf.mxu0
      %571 = vmatprep.mubr.bf16.mxu0 0
      %572 = vmatmul.mubr.bf16.gmra.mxu0 %v452
      %v573 = vpop.f32.mrf.mxu0
      %v574 = vadd.f32 0.0, %v573
      %v575 = vpop.f32.mrf.mxu0
      %v576 = vpop.f32.mrf.mxu0
      %v577 = vadd.f32 0.0, %v576
      %v578 = vpop.f32.mrf.mxu0
      %579 = vmatprep.mubr.bf16.mxu0 0
      %580 = vmatmul.mubr.bf16.gmra.mxu0 %v453
      %v581 = vpop.f32.mrf.mxu0
      %v582 = vadd.f32 0.0, %v581
      %v583 = vpop.f32.mrf.mxu0
      %v584 = vpop.f32.mrf.mxu0
      %v585 = vadd.f32 0.0, %v584
      %v586 = vpop.f32.mrf.mxu0
      %587 = vmatprep.mubr.bf16.mxu0 0
      %588 = vmatmul.mubr.bf16.gmra.mxu0 %v454
      %v589 = vpop.f32.mrf.mxu0
      %v590 = vadd.f32 0.0, %v589
      %v591 = vpop.f32.mrf.mxu0
      %v592 = vpop.f32.mrf.mxu0
      %v593 = vadd.f32 0.0, %v592
      %v594 = vpop.f32.mrf.mxu0
      %595 = vmatprep.mubr.bf16.mxu0 0
      %596 = vmatmul.mubr.bf16.gmra.mxu0 %v455
      %v597 = vpop.f32.mrf.mxu0
      %v598 = vadd.f32 0.0, %v597
      %v599 = vpop.f32.mrf.mxu0
      %v600 = vpop.f32.mrf.mxu0
      %v601 = vadd.f32 0.0, %v600
      %v602 = vpop.f32.mrf.mxu0
      %603 = vmatprep.mubr.bf16.mxu0 0
      %604 = vmatmul.mubr.bf16.gmra.mxu0 %v456
      %v605 = vpop.f32.mrf.mxu0
      %v606 = vadd.f32 0.0, %v605
      %v607 = vpop.f32.mrf.mxu0
      %v608 = vpop.f32.mrf.mxu0
      %v609 = vadd.f32 0.0, %v608
      %v610 = vpop.f32.mrf.mxu0
      %611 = vmatprep.mubr.bf16.mxu0 0
      %612 = vmatmul.mubr.bf16.gmra.mxu0 %v457
      %v613 = vpop.f32.mrf.mxu0
      %v614 = vadd.f32 0.0, %v613
      %v615 = vpop.f32.mrf.mxu0
      %v616 = vpop.f32.mrf.mxu0
      %v617 = vadd.f32 0.0, %v616
      %v618 = vpop.f32.mrf.mxu0
      %619 = vmatprep.mubr.bf16.mxu0 0
      %620 = vmatmul.mubr.bf16.gmra.mxu0 %v458
      %v621 = vpop.f32.mrf.mxu0
      %v622 = vadd.f32 0.0, %v621
      %v623 = vpop.f32.mrf.mxu0
      %v624 = vpop.f32.mrf.mxu0
      %v625 = vadd.f32 0.0, %v624
      %v626 = vpop.f32.mrf.mxu0
      %627 = vmatprep.mubr.bf16.mxu0 0
      %628 = vmatmul.mubr.bf16.gmra.mxu0 %v459
      %v629 = vpop.f32.mrf.mxu0
      %v630 = vadd.f32 0.0, %v629
      %v631 = vpop.f32.mrf.mxu0
      %v632 = vpop.f32.mrf.mxu0
      %v633 = vadd.f32 0.0, %v632
      %v634 = vpop.f32.mrf.mxu0
      %635 = vmatprep.mubr.bf16.mxu0 0
      %636 = vmatmul.mubr.bf16.gmra.mxu0 %v460
      %v637 = vpop.f32.mrf.mxu0
      %v638 = vadd.f32 0.0, %v637
      %v639 = vpop.f32.mrf.mxu0
      %v640 = vpop.f32.mrf.mxu0
      %v641 = vadd.f32 0.0, %v640
      %v642 = vpop.f32.mrf.mxu0
      %643 = vmatprep.mubr.bf16.mxu0 0
      %644 = vmatmul.mubr.bf16.gmra.mxu0 %v461
      %v645 = vpop.f32.mrf.mxu0
      %v646 = vadd.f32 0.0, %v645
      %v647 = vpop.f32.mrf.mxu0
      %v648 = vpop.f32.mrf.mxu0
      %v649 = vadd.f32 0.0, %v648
      %v650 = vpop.f32.mrf.mxu0
      %651 = vmatprep.mubr.bf16.mxu0 0
      %652 = vmatmul.mubr.bf16.gmra.mxu0 %v462
      %v653 = vpop.f32.mrf.mxu0
      %v654 = vadd.f32 0.0, %v653
      %v655 = vpop.f32.mrf.mxu0
      %v656 = vpop.f32.mrf.mxu0
      %v657 = vadd.f32 0.0, %v656
      %v658 = vpop.f32.mrf.mxu0
      %659 = vmatprep.mubr.bf16.mxu0 0
      %660 = vmatmul.mubr.bf16.gmra.mxu0 %v463
      %v661 = vpop.f32.mrf.mxu0
      %v662 = vadd.f32 0.0, %v661
      %v663 = vpop.f32.mrf.mxu0
      %v664 = vpop.f32.mrf.mxu0
      %v665 = vadd.f32 0.0, %v664
      %v666 = vpop.f32.mrf.mxu0
      %667 = vmatprep.mubr.bf16.mxu0 0
      %668 = vmatmul.mubr.bf16.gmra.mxu0 %v464
      %v669 = vpop.f32.mrf.mxu0
      %v670 = vadd.f32 0.0, %v669
      %v671 = vpop.f32.mrf.mxu0
      %v672 = vpop.f32.mrf.mxu0
      %v673 = vadd.f32 0.0, %v672
      %v674 = vpop.f32.mrf.mxu0
      %675 = vmatprep.mubr.bf16.mxu0 0
      %676 = vmatmul.mubr.bf16.gmra.mxu0 %v465
      %v677 = vpop.f32.mrf.mxu0
      %v678 = vadd.f32 0.0, %v677
      %v679 = vpop.f32.mrf.mxu0
      %v680 = vpop.f32.mrf.mxu0
      %v681 = vadd.f32 0.0, %v680
      %v682 = vpop.f32.mrf.mxu0
      %683 = vmatprep.mubr.bf16.mxu0 0
      %684 = vmatmul.mubr.bf16.gmra.mxu0 %v466
      %v685 = vpop.f32.mrf.mxu0
      %v686 = vadd.f32 0.0, %v685
      %v687 = vpop.f32.mrf.mxu0
      %v688 = vpop.f32.mrf.mxu0
      %v689 = vadd.f32 0.0, %v688
      %v690 = vpop.f32.mrf.mxu0
      %691 = vdwg.mxu0
      %v696 = vunpack.c.l.b16 %v294
      %v697 = vunpack.c.l.b16 %v295
      %v698 = vunpack.c.l.b16 %v297
      %v699 = vunpack.c.l.b16 %v298
      %v700 = vpack.c.b16 %v697, %v696
      %v701 = vpack.c.b16 %v699, %v698
      %v720 = vunpack.c.l.b16 %v354
      %v721 = vunpack.c.l.b16 %v355
      %v722 = vunpack.c.l.b16 %v356
      %v723 = vunpack.c.l.b16 %v357
      %v724 = vunpack.c.l.b16 %v358
      %v725 = vunpack.c.l.b16 %v359
      %v726 = vunpack.c.l.b16 %v360
      %v727 = vunpack.c.l.b16 %v361
      %v728 = vunpack.c.l.b16 %v362
      %v729 = vunpack.c.l.b16 %v363
      %v730 = vunpack.c.l.b16 %v364
      %v731 = vunpack.c.l.b16 %v365
      %v732 = vunpack.c.l.b16 %v366
      %v733 = vunpack.c.l.b16 %v367
      %v734 = vunpack.c.l.b16 %v368
      %v735 = vunpack.c.l.b16 %v369
      %v736 = vpack.c.b16 %v721, %v720
      %v737 = vpack.c.b16 %v723, %v722
      %v738 = vpack.c.b16 %v725, %v724
      %v739 = vpack.c.b16 %v727, %v726
      %v740 = vpack.c.b16 %v729, %v728
      %v741 = vpack.c.b16 %v731, %v730
      %v742 = vpack.c.b16 %v733, %v732
      %v743 = vpack.c.b16 %v735, %v734
      %752 = vmatprep.subr.bf16.mxu0 0
      %753 = vmatpush1.bf16.msra.mxu0 %v743
      %754 = vmatprep.subr.bf16.mxu0 0
      %755 = vmatpush1.bf16.msra.mxu0 %v742
      %756 = vmatprep.subr.bf16.mxu0 0
      %757 = vmatpush1.bf16.msra.mxu0 %v741
      %758 = vmatprep.subr.bf16.mxu0 0
      %759 = vmatpush1.bf16.msra.mxu0 %v740
      %760 = vmatprep.subr.bf16.mxu0 0
      %761 = vmatpush1.bf16.msra.mxu0 %v739
      %762 = vmatprep.subr.bf16.mxu0 0
      %763 = vmatpush1.bf16.msra.mxu0 %v738
      %764 = vmatprep.subr.bf16.mxu0 0
      %765 = vmatpush1.bf16.msra.mxu0 %v737
      %766 = vmatprep.subr.bf16.mxu0 0
      %767 = vmatpush1.bf16.msra.mxu0 %v736
      %768 = vmatprep.subr.bf16.mxu0 0
      %769 = vmatpush2.bf16.msra.mxu0 0
      %770 = vmatprep.subr.bf16.mxu0 0
      %771 = vmatpush2.bf16.msra.mxu0 0
      %772 = vmatprep.subr.bf16.mxu0 0
      %773 = vmatpush2.bf16.msra.mxu0 0
      %774 = vmatprep.subr.bf16.mxu0 0
      %775 = vmatpush2.bf16.msra.mxu0 0
      %776 = vmatprep.subr.bf16.mxu0 0
      %777 = vmatpush2.bf16.msra.mxu0 0
      %778 = vmatprep.subr.bf16.mxu0 0
      %779 = vmatpush2.bf16.msra.mxu0 0
      %780 = vmatprep.subr.bf16.mxu0 0
      %781 = vmatpush2.bf16.msra.mxu0 0
      %782 = vmatprep.subr.bf16.mxu0 0
      %783 = vmatpush2.bf16.msra.mxu0 0
      %784 = vmatprep.mubr.bf16.mxu0 0
      %785 = vmatmul.mubr.bf16.gmra.mxu0 %v700
      %v786 = vpop.f32.mrf.mxu0
      %v787 = vadd.f32 %v566, %v786
      %v788 = vpop.f32.mrf.mxu0
      %v789 = vpop.f32.mrf.mxu0
      %v790 = vadd.f32 %v569, %v789
      %v791 = vpop.f32.mrf.mxu0
      %792 = vmatprep.mubr.bf16.mxu0 0
      %793 = vmatmul.mubr.bf16.gmra.mxu0 %v701
      %v794 = vpop.f32.mrf.mxu0
      %v795 = vadd.f32 %v574, %v794
      %v796 = vpop.f32.mrf.mxu0
      %v797 = vpop.f32.mrf.mxu0
      %v798 = vadd.f32 %v577, %v797
      %v799 = vpop.f32.mrf.mxu0
      %800 = vmatprep.mubr.bf16.mxu0 0
      %801 = vmatmul.mubr.bf16.gmra.mxu0 %v451
      %v802 = vpop.f32.mrf.mxu0
      %v803 = vadd.f32 %v582, %v802
      %v804 = vpop.f32.mrf.mxu0
      %v805 = vpop.f32.mrf.mxu0
      %v806 = vadd.f32 %v585, %v805
      %v807 = vpop.f32.mrf.mxu0
      %808 = vmatprep.mubr.bf16.mxu0 0
      %809 = vmatmul.mubr.bf16.gmra.mxu0 %v452
      %v810 = vpop.f32.mrf.mxu0
      %v811 = vadd.f32 %v590, %v810
      %v812 = vpop.f32.mrf.mxu0
      %v813 = vpop.f32.mrf.mxu0
      %v814 = vadd.f32 %v593, %v813
      %v815 = vpop.f32.mrf.mxu0
      %816 = vmatprep.mubr.bf16.mxu0 0
      %817 = vmatmul.mubr.bf16.gmra.mxu0 %v453
      %v818 = vpop.f32.mrf.mxu0
      %v819 = vadd.f32 %v598, %v818
      %v820 = vpop.f32.mrf.mxu0
      %v821 = vpop.f32.mrf.mxu0
      %v822 = vadd.f32 %v601, %v821
      %v823 = vpop.f32.mrf.mxu0
      %824 = vmatprep.mubr.bf16.mxu0 0
      %825 = vmatmul.mubr.bf16.gmra.mxu0 %v454
      %v826 = vpop.f32.mrf.mxu0
      %v827 = vadd.f32 %v606, %v826
      %v828 = vpop.f32.mrf.mxu0
      %v829 = vpop.f32.mrf.mxu0
      %v830 = vadd.f32 %v609, %v829
      %v831 = vpop.f32.mrf.mxu0
      %832 = vmatprep.mubr.bf16.mxu0 0
      %833 = vmatmul.mubr.bf16.gmra.mxu0 %v455
      %v834 = vpop.f32.mrf.mxu0
      %v835 = vadd.f32 %v614, %v834
      %v836 = vpop.f32.mrf.mxu0
      %v837 = vpop.f32.mrf.mxu0
      %v838 = vadd.f32 %v617, %v837
      %v839 = vpop.f32.mrf.mxu0
      %840 = vmatprep.mubr.bf16.mxu0 0
      %841 = vmatmul.mubr.bf16.gmra.mxu0 %v456
      %v842 = vpop.f32.mrf.mxu0
      %v843 = vadd.f32 %v622, %v842
      %v844 = vpop.f32.mrf.mxu0
      %v845 = vpop.f32.mrf.mxu0
      %v846 = vadd.f32 %v625, %v845
      %v847 = vpop.f32.mrf.mxu0
      %848 = vmatprep.mubr.bf16.mxu0 0
      %849 = vmatmul.mubr.bf16.gmra.mxu0 %v457
      %v850 = vpop.f32.mrf.mxu0
      %v851 = vadd.f32 %v630, %v850
      %v852 = vpop.f32.mrf.mxu0
      %v853 = vpop.f32.mrf.mxu0
      %v854 = vadd.f32 %v633, %v853
      %v855 = vpop.f32.mrf.mxu0
      %856 = vmatprep.mubr.bf16.mxu0 0
      %857 = vmatmul.mubr.bf16.gmra.mxu0 %v458
      %v858 = vpop.f32.mrf.mxu0
      %v859 = vadd.f32 %v638, %v858
      %v860 = vpop.f32.mrf.mxu0
      %v861 = vpop.f32.mrf.mxu0
      %v862 = vadd.f32 %v641, %v861
      %v863 = vpop.f32.mrf.mxu0
      %864 = vmatprep.mubr.bf16.mxu0 0
      %865 = vmatmul.mubr.bf16.gmra.mxu0 %v459
      %v866 = vpop.f32.mrf.mxu0
      %v867 = vadd.f32 %v646, %v866
      %v868 = vpop.f32.mrf.mxu0
      %v869 = vpop.f32.mrf.mxu0
      %v870 = vadd.f32 %v649, %v869
      %v871 = vpop.f32.mrf.mxu0
      %872 = vmatprep.mubr.bf16.mxu0 0
      %873 = vmatmul.mubr.bf16.gmra.mxu0 %v460
      %v874 = vpop.f32.mrf.mxu0
      %v875 = vadd.f32 %v654, %v874
      %v876 = vpop.f32.mrf.mxu0
      %v877 = vpop.f32.mrf.mxu0
      %v878 = vadd.f32 %v657, %v877
      %v879 = vpop.f32.mrf.mxu0
      %880 = vmatprep.mubr.bf16.mxu0 0
      %881 = vmatmul.mubr.bf16.gmra.mxu0 %v461
      %v882 = vpop.f32.mrf.mxu0
      %v883 = vadd.f32 %v662, %v882
      %v884 = vpop.f32.mrf.mxu0
      %v885 = vpop.f32.mrf.mxu0
      %v886 = vadd.f32 %v665, %v885
      %v887 = vpop.f32.mrf.mxu0
      %888 = vmatprep.mubr.bf16.mxu0 0
      %889 = vmatmul.mubr.bf16.gmra.mxu0 %v462
      %v890 = vpop.f32.mrf.mxu0
      %v891 = vadd.f32 %v670, %v890
      %v892 = vpop.f32.mrf.mxu0
      %v893 = vpop.f32.mrf.mxu0
      %v894 = vadd.f32 %v673, %v893
      %v895 = vpop.f32.mrf.mxu0
      %896 = vmatprep.mubr.bf16.mxu0 0
      %897 = vmatmul.mubr.bf16.gmra.mxu0 %v463
      %v898 = vpop.f32.mrf.mxu0
      %v899 = vadd.f32 %v678, %v898
      %v900 = vpop.f32.mrf.mxu0
      %v901 = vpop.f32.mrf.mxu0
      %v902 = vadd.f32 %v681, %v901
      %v903 = vpop.f32.mrf.mxu0
      %904 = vmatprep.mubr.bf16.mxu0 0
      %905 = vmatmul.mubr.bf16.gmra.mxu0 %v464
      %v906 = vpop.f32.mrf.mxu0
      %v907 = vadd.f32 %v686, %v906
      %v908 = vpop.f32.mrf.mxu0
      %v909 = vpop.f32.mrf.mxu0
      %v910 = vadd.f32 %v689, %v909
      %v911 = vpop.f32.mrf.mxu0
      %912 = vdwg.mxu0
      %s913 = scalar_lea.vmem %s2, 384
      %v914 = vld [vmem:[%s913] sm:$0xf]
      %v915 = vld [vmem:[%s913 + $0x4] sm:$0xf]
      %v916 = vld [vmem:[%s913 + $0x8] sm:$0xf]
      %v917 = vld [vmem:[%s913 + $0xc] sm:$0xf]
      %v918 = vld [vmem:[%s913 + $0x10] sm:$0xf]
      %v919 = vld [vmem:[%s913 + $0x14] sm:$0xf]
      %v920 = vld [vmem:[%s913 + $0x18] sm:$0xf]
      %v921 = vld [vmem:[%s913 + $0x1c] sm:$0xf]
      %v922 = vld [vmem:[%s913 + $0x20] sm:$0xf]
      %v923 = vld [vmem:[%s913 + $0x24] sm:$0xf]
      %v924 = vld [vmem:[%s913 + $0x28] sm:$0xf]
      %v925 = vld [vmem:[%s913 + $0x2c] sm:$0xf]
      %v926 = vld [vmem:[%s913 + $0x30] sm:$0xf]
      %v927 = vld [vmem:[%s913 + $0x34] sm:$0xf]
      %v928 = vld [vmem:[%s913 + $0x38] sm:$0xf]
      %v929 = vld [vmem:[%s913 + $0x3c] sm:$0xf]
      %v934 = vunpack.c.l.b16 %v348
      %v935 = vunpack.c.l.b16 %v349
      %v936 = vunpack.c.l.b16 %v351
      %v937 = vunpack.c.l.b16 %v352
      %v938 = vpack.c.b16 %v935, %v934
      %v939 = vpack.c.b16 %v937, %v936
      %v958 = vunpack.c.l.b16 %v914
      %v959 = vunpack.c.l.b16 %v915
      %v960 = vunpack.c.l.b16 %v916
      %v961 = vunpack.c.l.b16 %v917
      %v962 = vunpack.c.l.b16 %v918
      %v963 = vunpack.c.l.b16 %v919
      %v964 = vunpack.c.l.b16 %v920
      %v965 = vunpack.c.l.b16 %v921
      %v966 = vunpack.c.l.b16 %v922
      %v967 = vunpack.c.l.b16 %v923
      %v968 = vunpack.c.l.b16 %v924
      %v969 = vunpack.c.l.b16 %v925
      %v970 = vunpack.c.l.b16 %v926
      %v971 = vunpack.c.l.b16 %v927
      %v972 = vunpack.c.l.b16 %v928
      %v973 = vunpack.c.l.b16 %v929
      %v974 = vpack.c.b16 %v959, %v958
      %v975 = vpack.c.b16 %v961, %v960
      %v976 = vpack.c.b16 %v963, %v962
      %v977 = vpack.c.b16 %v965, %v964
      %v978 = vpack.c.b16 %v967, %v966
      %v979 = vpack.c.b16 %v969, %v968
      %v980 = vpack.c.b16 %v971, %v970
      %v981 = vpack.c.b16 %v973, %v972
      %990 = vmatprep.subr.bf16.mxu0 0
      %991 = vmatpush1.bf16.msra.mxu0 %v981
      %992 = vmatprep.subr.bf16.mxu0 0
      %993 = vmatpush1.bf16.msra.mxu0 %v980
      %994 = vmatprep.subr.bf16.mxu0 0
      %995 = vmatpush1.bf16.msra.mxu0 %v979
      %996 = vmatprep.subr.bf16.mxu0 0
      %997 = vmatpush1.bf16.msra.mxu0 %v978
      %998 = vmatprep.subr.bf16.mxu0 0
      %999 = vmatpush1.bf16.msra.mxu0 %v977
      %1000 = vmatprep.subr.bf16.mxu0 0
      %1001 = vmatpush1.bf16.msra.mxu0 %v976
      %1002 = vmatprep.subr.bf16.mxu0 0
      %1003 = vmatpush1.bf16.msra.mxu0 %v975
      %1004 = vmatprep.subr.bf16.mxu0 0
      %1005 = vmatpush1.bf16.msra.mxu0 %v974
      %1006 = vmatprep.subr.bf16.mxu0 0
      %1007 = vmatpush2.bf16.msra.mxu0 0
      %1008 = vmatprep.subr.bf16.mxu0 0
      %1009 = vmatpush2.bf16.msra.mxu0 0
      %1010 = vmatprep.subr.bf16.mxu0 0
      %1011 = vmatpush2.bf16.msra.mxu0 0
      %1012 = vmatprep.subr.bf16.mxu0 0
      %1013 = vmatpush2.bf16.msra.mxu0 0
      %1014 = vmatprep.subr.bf16.mxu0 0
      %1015 = vmatpush2.bf16.msra.mxu0 0
      %1016 = vmatprep.subr.bf16.mxu0 0
      %1017 = vmatpush2.bf16.msra.mxu0 0
      %1018 = vmatprep.subr.bf16.mxu0 0
      %1019 = vmatpush2.bf16.msra.mxu0 0
      %1020 = vmatprep.subr.bf16.mxu0 0
      %1021 = vmatpush2.bf16.msra.mxu0 0
      %1022 = vmatprep.mubr.bf16.mxu0 0
      %1023 = vmatmul.mubr.bf16.gmra.mxu0 %v453
      %v1024 = vpop.f32.mrf.mxu0
      %v1025 = vadd.f32 0.0, %v1024
      %v1026 = vpop.f32.mrf.mxu0
      %v1027 = vpop.f32.mrf.mxu0
      %v1028 = vadd.f32 0.0, %v1027
      %v1029 = vpop.f32.mrf.mxu0
      %1030 = vmatprep.mubr.bf16.mxu0 0
      %1031 = vmatmul.mubr.bf16.gmra.mxu0 %v454
      %v1032 = vpop.f32.mrf.mxu0
      %v1033 = vadd.f32 0.0, %v1032
      %v1034 = vpop.f32.mrf.mxu0
      %v1035 = vpop.f32.mrf.mxu0
      %v1036 = vadd.f32 0.0, %v1035
      %v1037 = vpop.f32.mrf.mxu0
      %1038 = vmatprep.mubr.bf16.mxu0 0
      %1039 = vmatmul.mubr.bf16.gmra.mxu0 %v455
      %v1040 = vpop.f32.mrf.mxu0
      %v1041 = vadd.f32 0.0, %v1040
      %v1042 = vpop.f32.mrf.mxu0
      %v1043 = vpop.f32.mrf.mxu0
      %v1044 = vadd.f32 0.0, %v1043
      %v1045 = vpop.f32.mrf.mxu0
      %1046 = vmatprep.mubr.bf16.mxu0 0
      %1047 = vmatmul.mubr.bf16.gmra.mxu0 %v456
      %v1048 = vpop.f32.mrf.mxu0
      %v1049 = vadd.f32 0.0, %v1048
      %v1050 = vpop.f32.mrf.mxu0
      %v1051 = vpop.f32.mrf.mxu0
      %v1052 = vadd.f32 0.0, %v1051
      %v1053 = vpop.f32.mrf.mxu0
      %1054 = vmatprep.mubr.bf16.mxu0 0
      %1055 = vmatmul.mubr.bf16.gmra.mxu0 %v457
      %v1056 = vpop.f32.mrf.mxu0
      %v1057 = vadd.f32 0.0, %v1056
      %v1058 = vpop.f32.mrf.mxu0
      %v1059 = vpop.f32.mrf.mxu0
      %v1060 = vadd.f32 0.0, %v1059
      %v1061 = vpop.f32.mrf.mxu0
      %1062 = vmatprep.mubr.bf16.mxu0 0
      %1063 = vmatmul.mubr.bf16.gmra.mxu0 %v458
      %v1064 = vpop.f32.mrf.mxu0
      %v1065 = vadd.f32 0.0, %v1064
      %v1066 = vpop.f32.mrf.mxu0
      %v1067 = vpop.f32.mrf.mxu0
      %v1068 = vadd.f32 0.0, %v1067
      %v1069 = vpop.f32.mrf.mxu0
      %1070 = vmatprep.mubr.bf16.mxu0 0
      %1071 = vmatmul.mubr.bf16.gmra.mxu0 %v459
      %v1072 = vpop.f32.mrf.mxu0
      %v1073 = vadd.f32 0.0, %v1072
      %v1074 = vpop.f32.mrf.mxu0
      %v1075 = vpop.f32.mrf.mxu0
      %v1076 = vadd.f32 0.0, %v1075
      %v1077 = vpop.f32.mrf.mxu0
      %1078 = vmatprep.mubr.bf16.mxu0 0
      %1079 = vmatmul.mubr.bf16.gmra.mxu0 %v460
      %v1080 = vpop.f32.mrf.mxu0
      %v1081 = vadd.f32 0.0, %v1080
      %v1082 = vpop.f32.mrf.mxu0
      %v1083 = vpop.f32.mrf.mxu0
      %v1084 = vadd.f32 0.0, %v1083
      %v1085 = vpop.f32.mrf.mxu0
      %1086 = vmatprep.mubr.bf16.mxu0 0
      %1087 = vmatmul.mubr.bf16.gmra.mxu0 %v461
      %v1088 = vpop.f32.mrf.mxu0
      %v1089 = vadd.f32 0.0, %v1088
      %v1090 = vpop.f32.mrf.mxu0
      %v1091 = vpop.f32.mrf.mxu0
      %v1092 = vadd.f32 0.0, %v1091
      %v1093 = vpop.f32.mrf.mxu0
      %1094 = vmatprep.mubr.bf16.mxu0 0
      %1095 = vmatmul.mubr.bf16.gmra.mxu0 %v462
      %v1096 = vpop.f32.mrf.mxu0
      %v1097 = vadd.f32 0.0, %v1096
      %v1098 = vpop.f32.mrf.mxu0
      %v1099 = vpop.f32.mrf.mxu0
      %v1100 = vadd.f32 0.0, %v1099
      %v1101 = vpop.f32.mrf.mxu0
      %1102 = vmatprep.mubr.bf16.mxu0 0
      %1103 = vmatmul.mubr.bf16.gmra.mxu0 %v463
      %v1104 = vpop.f32.mrf.mxu0
      %v1105 = vadd.f32 0.0, %v1104
      %v1106 = vpop.f32.mrf.mxu0
      %v1107 = vpop.f32.mrf.mxu0
      %v1108 = vadd.f32 0.0, %v1107
      %v1109 = vpop.f32.mrf.mxu0
      %1110 = vmatprep.mubr.bf16.mxu0 0
      %1111 = vmatmul.mubr.bf16.gmra.mxu0 %v464
      %v1112 = vpop.f32.mrf.mxu0
      %v1113 = vadd.f32 0.0, %v1112
      %v1114 = vpop.f32.mrf.mxu0
      %v1115 = vpop.f32.mrf.mxu0
      %v1116 = vadd.f32 0.0, %v1115
      %v1117 = vpop.f32.mrf.mxu0
      %1118 = vmatprep.mubr.bf16.mxu0 0
      %1119 = vmatmul.mubr.bf16.gmra.mxu0 %v465
      %v1120 = vpop.f32.mrf.mxu0
      %v1121 = vadd.f32 0.0, %v1120
      %v1122 = vpop.f32.mrf.mxu0
      %v1123 = vpop.f32.mrf.mxu0
      %v1124 = vadd.f32 0.0, %v1123
      %v1125 = vpop.f32.mrf.mxu0
      %1126 = vmatprep.mubr.bf16.mxu0 0
      %1127 = vmatmul.mubr.bf16.gmra.mxu0 %v466
      %v1128 = vpop.f32.mrf.mxu0
      %v1129 = vadd.f32 0.0, %v1128
      %v1130 = vpop.f32.mrf.mxu0
      %v1131 = vpop.f32.mrf.mxu0
      %v1132 = vadd.f32 0.0, %v1131
      %v1133 = vpop.f32.mrf.mxu0
      %1134 = vmatprep.mubr.bf16.mxu0 0
      %1135 = vmatmul.mubr.bf16.gmra.mxu0 %v938
      %v1136 = vpop.f32.mrf.mxu0
      %v1137 = vadd.f32 0.0, %v1136
      %v1138 = vpop.f32.mrf.mxu0
      %v1139 = vpop.f32.mrf.mxu0
      %v1140 = vadd.f32 0.0, %v1139
      %v1141 = vpop.f32.mrf.mxu0
      %1142 = vmatprep.mubr.bf16.mxu0 0
      %1143 = vmatmul.mubr.bf16.gmra.mxu0 %v939
      %v1144 = vpop.f32.mrf.mxu0
      %v1145 = vadd.f32 0.0, %v1144
      %v1146 = vpop.f32.mrf.mxu0
      %v1147 = vpop.f32.mrf.mxu0
      %v1148 = vadd.f32 0.0, %v1147
      %v1149 = vpop.f32.mrf.mxu0
      %1150 = vdwg.mxu0
      %v1151 = vadd.f32 %v787, %v1025
      %v1152 = vadd.f32 %v790, %v1028
      %v1153 = vadd.f32 %v795, %v1033
      %v1154 = vadd.f32 %v798, %v1036
      %v1155 = vadd.f32 %v803, %v1041
      %v1156 = vadd.f32 %v806, %v1044
      %v1157 = vadd.f32 %v811, %v1049
      %v1158 = vadd.f32 %v814, %v1052
      %v1159 = vadd.f32 %v819, %v1057
      %v1160 = vadd.f32 %v822, %v1060
      %v1161 = vadd.f32 %v827, %v1065
      %v1162 = vadd.f32 %v830, %v1068
      %v1163 = vadd.f32 %v835, %v1073
      %v1164 = vadd.f32 %v838, %v1076
      %v1165 = vadd.f32 %v843, %v1081
      %v1166 = vadd.f32 %v846, %v1084
      %v1167 = vadd.f32 %v851, %v1089
      %v1168 = vadd.f32 %v854, %v1092
      %v1169 = vadd.f32 %v859, %v1097
      %v1170 = vadd.f32 %v862, %v1100
      %v1171 = vadd.f32 %v867, %v1105
      %v1172 = vadd.f32 %v870, %v1108
      %v1173 = vadd.f32 %v875, %v1113
      %v1174 = vadd.f32 %v878, %v1116
      %v1175 = vadd.f32 %v883, %v1121
      %v1176 = vadd.f32 %v886, %v1124
      %v1177 = vadd.f32 %v891, %v1129
      %v1178 = vadd.f32 %v894, %v1132
      %v1179 = vadd.f32 %v899, %v1137
      %v1180 = vadd.f32 %v902, %v1140
      %v1181 = vadd.f32 %v907, %v1145
      %v1182 = vadd.f32 %v910, %v1148
      %vm1203 = vcmask 1042432
      %vm1204 = vcmask 1046532
      %vm1205 = vmor %vm1203, %vm1204
      %v1206 = vrot.slane %v294, 5
      %v1207 = vrot.slane %v1206, 4
      %v1208 = vrot.slane %v295, 5
      %v1209 = vsel %vm1205, %v1207, %v1208
      %v1210 = vrot.slane %v1208, 4
      %v1211 = vrot.slane %v296, 5
      %v1212 = vsel %vm1205, %v1210, %v1211
      %v1213 = vrot.slane %v297, 5
      %v1214 = vrot.slane %v1213, 4
      %v1215 = vrot.slane %v298, 5
      %v1216 = vsel %vm1205, %v1214, %v1215
      %v1217 = vrot.slane %v1215, 4
      %v1218 = vrot.slane %v299, 5
      %v1219 = vsel %vm1205, %v1217, %v1218
      %v1220 = vrot.slane %v300, 5
      %v1221 = vrot.slane %v1220, 4
      %v1222 = vrot.slane %v301, 5
      %v1223 = vsel %vm1205, %v1221, %v1222
      %v1224 = vrot.slane %v1222, 4
      %v1225 = vrot.slane %v302, 5
      %v1226 = vsel %vm1205, %v1224, %v1225
      %v1227 = vrot.slane %v303, 5
      %v1228 = vrot.slane %v1227, 4
      %v1229 = vrot.slane %v304, 5
      %v1230 = vsel %vm1205, %v1228, %v1229
      %v1231 = vrot.slane %v1229, 4
      %v1232 = vrot.slane %v305, 5
      %v1233 = vsel %vm1205, %v1231, %v1232
      %v1234 = vrot.slane %v306, 5
      %v1235 = vrot.slane %v1234, 4
      %v1236 = vrot.slane %v307, 5
      %v1237 = vsel %vm1205, %v1235, %v1236
      %v1238 = vrot.slane %v1236, 4
      %v1239 = vrot.slane %v308, 5
      %v1240 = vsel %vm1205, %v1238, %v1239
      %v1241 = vrot.slane %v309, 5
      %v1242 = vrot.slane %v1241, 4
      %v1243 = vrot.slane %v310, 5
      %v1244 = vsel %vm1205, %v1242, %v1243
      %v1245 = vrot.slane %v1243, 4
      %v1246 = vrot.slane %v311, 5
      %v1247 = vsel %vm1205, %v1245, %v1246
      %v1248 = vrot.slane %v312, 5
      %v1249 = vrot.slane %v1248, 4
      %v1250 = vrot.slane %v313, 5
      %v1251 = vsel %vm1205, %v1249, %v1250
      %v1252 = vrot.slane %v1250, 4
      %v1253 = vrot.slane %v314, 5
      %v1254 = vsel %vm1205, %v1252, %v1253
      %v1255 = vrot.slane %v315, 5
      %v1256 = vrot.slane %v1255, 4
      %v1257 = vrot.slane %v316, 5
      %v1258 = vsel %vm1205, %v1256, %v1257
      %v1259 = vrot.slane %v1257, 4
      %v1260 = vrot.slane %v317, 5
      %v1261 = vsel %vm1205, %v1259, %v1260
      %v1262 = vrot.slane %v318, 5
      %v1263 = vrot.slane %v1262, 4
      %v1264 = vrot.slane %v319, 5
      %v1265 = vsel %vm1205, %v1263, %v1264
      %v1266 = vrot.slane %v1264, 4
      %v1267 = vrot.slane %v320, 5
      %v1268 = vsel %vm1205, %v1266, %v1267
      %v1269 = vrot.slane %v321, 5
      %v1270 = vrot.slane %v1269, 4
      %v1271 = vrot.slane %v322, 5
      %v1272 = vsel %vm1205, %v1270, %v1271
      %v1273 = vrot.slane %v1271, 4
      %v1274 = vrot.slane %v323, 5
      %v1275 = vsel %vm1205, %v1273, %v1274
      %v1276 = vrot.slane %v324, 5
      %v1277 = vrot.slane %v1276, 4
      %v1278 = vrot.slane %v325, 5
      %v1279 = vsel %vm1205, %v1277, %v1278
      %v1280 = vrot.slane %v1278, 4
      %v1281 = vrot.slane %v326, 5
      %v1282 = vsel %vm1205, %v1280, %v1281
      %v1283 = vrot.slane %v327, 5
      %v1284 = vrot.slane %v1283, 4
      %v1285 = vrot.slane %v328, 5
      %v1286 = vsel %vm1205, %v1284, %v1285
      %v1287 = vrot.slane %v1285, 4
      %v1288 = vrot.slane %v329, 5
      %v1289 = vsel %vm1205, %v1287, %v1288
      %v1290 = vrot.slane %v330, 5
      %v1291 = vrot.slane %v1290, 4
      %v1292 = vrot.slane %v331, 5
      %v1293 = vsel %vm1205, %v1291, %v1292
      %v1294 = vrot.slane %v1292, 4
      %v1295 = vrot.slane %v332, 5
      %v1296 = vsel %vm1205, %v1294, %v1295
      %v1297 = vrot.slane %v333, 5
      %v1298 = vrot.slane %v1297, 4
      %v1299 = vrot.slane %v334, 5
      %v1300 = vsel %vm1205, %v1298, %v1299
      %v1301 = vrot.slane %v1299, 4
      %v1302 = vrot.slane %v335, 5
      %v1303 = vsel %vm1205, %v1301, %v1302
      %v1304 = vrot.slane %v336, 5
      %v1305 = vrot.slane %v1304, 4
      %v1306 = vrot.slane %v337, 5
      %v1307 = vsel %vm1205, %v1305, %v1306
      %v1308 = vrot.slane %v1306, 4
      %v1309 = vrot.slane %v338, 5
      %v1310 = vsel %vm1205, %v1308, %v1309
      %v1311 = vrot.slane %v339, 5
      %v1312 = vrot.slane %v1311, 4
      %v1313 = vrot.slane %v340, 5
      %v1314 = vsel %vm1205, %v1312, %v1313
      %v1315 = vrot.slane %v1313, 4
      %v1316 = vrot.slane %v341, 5
      %v1317 = vsel %vm1205, %v1315, %v1316
      %v1318 = vrot.slane %v342, 5
      %v1319 = vrot.slane %v1318, 4
      %v1320 = vrot.slane %v343, 5
      %v1321 = vsel %vm1205, %v1319, %v1320
      %v1322 = vrot.slane %v1320, 4
      %v1323 = vrot.slane %v344, 5
      %v1324 = vsel %vm1205, %v1322, %v1323
      %v1325 = vrot.slane %v345, 5
      %v1326 = vrot.slane %v1325, 4
      %v1327 = vrot.slane %v346, 5
      %v1328 = vsel %vm1205, %v1326, %v1327
      %v1329 = vrot.slane %v1327, 4
      %v1330 = vrot.slane %v347, 5
      %v1331 = vsel %vm1205, %v1329, %v1330
      %v1332 = vrot.slane %v348, 5
      %v1333 = vrot.slane %v1332, 4
      %v1334 = vrot.slane %v349, 5
      %v1335 = vsel %vm1205, %v1333, %v1334
      %v1336 = vrot.slane %v1334, 4
      %v1337 = vrot.slane %v350, 5
      %v1338 = vsel %vm1205, %v1336, %v1337
      %v1339 = vrot.slane %v351, 5
      %v1340 = vrot.slane %v1339, 4
      %v1341 = vrot.slane %v352, 5
      %v1342 = vsel %vm1205, %v1340, %v1341
      %v1343 = vrot.slane %v1341, 4
      %v1344 = vrot.slane %v353, 5
      %v1345 = vsel %vm1205, %v1343, %v1344
      %s1346 = scalar_lea.vmem %s2, 64
      %v1347 = vld [vmem:[%s1346] sm:$0xf]
      %v1348 = vld [vmem:[%s1346 + $0x4] sm:$0xf]
      %v1349 = vld [vmem:[%s1346 + $0x8] sm:$0xf]
      %v1350 = vld [vmem:[%s1346 + $0xc] sm:$0xf]
      %v1351 = vld [vmem:[%s1346 + $0x10] sm:$0xf]
      %v1352 = vld [vmem:[%s1346 + $0x14] sm:$0xf]
      %v1353 = vld [vmem:[%s1346 + $0x18] sm:$0xf]
      %v1354 = vld [vmem:[%s1346 + $0x1c] sm:$0xf]
      %v1355 = vld [vmem:[%s1346 + $0x20] sm:$0xf]
      %v1356 = vld [vmem:[%s1346 + $0x24] sm:$0xf]
      %v1357 = vld [vmem:[%s1346 + $0x28] sm:$0xf]
      %v1358 = vld [vmem:[%s1346 + $0x2c] sm:$0xf]
      %v1359 = vld [vmem:[%s1346 + $0x30] sm:$0xf]
      %v1360 = vld [vmem:[%s1346 + $0x34] sm:$0xf]
      %v1361 = vld [vmem:[%s1346 + $0x38] sm:$0xf]
      %v1362 = vld [vmem:[%s1346 + $0x3c] sm:$0xf]
      %v1363 = vunpack.c.l.b16 %v1209
      %v1364 = vunpack.c.l.b16 %v1212
      %v1365 = vunpack.c.l.b16 %v1216
      %v1366 = vunpack.c.l.b16 %v1219
      %v1367 = vunpack.c.l.b16 %v1223
      %v1368 = vunpack.c.l.b16 %v1226
      %v1369 = vunpack.c.l.b16 %v1230
      %v1370 = vunpack.c.l.b16 %v1233
      %v1371 = vunpack.c.l.b16 %v1237
      %v1372 = vunpack.c.l.b16 %v1240
      %v1373 = vunpack.c.l.b16 %v1244
      %v1374 = vunpack.c.l.b16 %v1247
      %v1375 = vunpack.c.l.b16 %v1251
      %v1376 = vunpack.c.l.b16 %v1254
      %v1377 = vunpack.c.l.b16 %v1258
      %v1378 = vunpack.c.l.b16 %v1261
      %v1379 = vunpack.c.l.b16 %v1265
      %v1380 = vunpack.c.l.b16 %v1268
      %v1381 = vunpack.c.l.b16 %v1272
      %v1382 = vunpack.c.l.b16 %v1275
      %v1383 = vunpack.c.l.b16 %v1279
      %v1384 = vunpack.c.l.b16 %v1282
      %v1385 = vunpack.c.l.b16 %v1286
      %v1386 = vunpack.c.l.b16 %v1289
      %v1387 = vunpack.c.l.b16 %v1293
      %v1388 = vunpack.c.l.b16 %v1296
      %v1389 = vunpack.c.l.b16 %v1300
      %v1390 = vunpack.c.l.b16 %v1303
      %v1391 = vunpack.c.l.b16 %v1307
      %v1392 = vunpack.c.l.b16 %v1310
      %v1393 = vunpack.c.l.b16 %v1314
      %v1394 = vunpack.c.l.b16 %v1317
      %v1395 = vpack.c.b16 %v1364, %v1363
      %v1396 = vpack.c.b16 %v1366, %v1365
      %v1397 = vpack.c.b16 %v1368, %v1367
      %v1398 = vpack.c.b16 %v1370, %v1369
      %v1399 = vpack.c.b16 %v1372, %v1371
      %v1400 = vpack.c.b16 %v1374, %v1373
      %v1401 = vpack.c.b16 %v1376, %v1375
      %v1402 = vpack.c.b16 %v1378, %v1377
      %v1403 = vpack.c.b16 %v1380, %v1379
      %v1404 = vpack.c.b16 %v1382, %v1381
      %v1405 = vpack.c.b16 %v1384, %v1383
      %v1406 = vpack.c.b16 %v1386, %v1385
      %v1407 = vpack.c.b16 %v1388, %v1387
      %v1408 = vpack.c.b16 %v1390, %v1389
      %v1409 = vpack.c.b16 %v1392, %v1391
      %v1410 = vpack.c.b16 %v1394, %v1393
      %v1443 = vunpack.c.l.b16 %v1347
      %v1444 = vunpack.c.l.b16 %v1348
      %v1445 = vunpack.c.l.b16 %v1349
      %v1446 = vunpack.c.l.b16 %v1350
      %v1447 = vunpack.c.l.b16 %v1351
      %v1448 = vunpack.c.l.b16 %v1352
      %v1449 = vunpack.c.l.b16 %v1353
      %v1450 = vunpack.c.l.b16 %v1354
      %v1451 = vunpack.c.l.b16 %v1355
      %v1452 = vunpack.c.l.b16 %v1356
      %v1453 = vunpack.c.l.b16 %v1357
      %v1454 = vunpack.c.l.b16 %v1358
      %v1455 = vunpack.c.l.b16 %v1359
      %v1456 = vunpack.c.l.b16 %v1360
      %v1457 = vunpack.c.l.b16 %v1361
      %v1458 = vunpack.c.l.b16 %v1362
      %v1459 = vpack.c.b16 %v1444, %v1443
      %v1460 = vpack.c.b16 %v1446, %v1445
      %v1461 = vpack.c.b16 %v1448, %v1447
      %v1462 = vpack.c.b16 %v1450, %v1449
      %v1463 = vpack.c.b16 %v1452, %v1451
      %v1464 = vpack.c.b16 %v1454, %v1453
      %v1465 = vpack.c.b16 %v1456, %v1455
      %v1466 = vpack.c.b16 %v1458, %v1457
      %1475 = vmatprep.subr.bf16.mxu0 0
      %1476 = vmatpush1.bf16.msra.mxu0 %v1466
      %1477 = vmatprep.subr.bf16.mxu0 0
      %1478 = vmatpush1.bf16.msra.mxu0 %v1465
      %1479 = vmatprep.subr.bf16.mxu0 0
      %1480 = vmatpush1.bf16.msra.mxu0 %v1464
      %1481 = vmatprep.subr.bf16.mxu0 0
      %1482 = vmatpush1.bf16.msra.mxu0 %v1463
      %1483 = vmatprep.subr.bf16.mxu0 0
      %1484 = vmatpush1.bf16.msra.mxu0 %v1462
      %1485 = vmatprep.subr.bf16.mxu0 0
      %1486 = vmatpush1.bf16.msra.mxu0 %v1461
      %1487 = vmatprep.subr.bf16.mxu0 0
      %1488 = vmatpush1.bf16.msra.mxu0 %v1460
      %1489 = vmatprep.subr.bf16.mxu0 0
      %1490 = vmatpush1.bf16.msra.mxu0 %v1459
      %1491 = vmatprep.subr.bf16.mxu0 0
      %1492 = vmatpush2.bf16.msra.mxu0 0
      %1493 = vmatprep.subr.bf16.mxu0 0
      %1494 = vmatpush2.bf16.msra.mxu0 0
      %1495 = vmatprep.subr.bf16.mxu0 0
      %1496 = vmatpush2.bf16.msra.mxu0 0
      %1497 = vmatprep.subr.bf16.mxu0 0
      %1498 = vmatpush2.bf16.msra.mxu0 0
      %1499 = vmatprep.subr.bf16.mxu0 0
      %1500 = vmatpush2.bf16.msra.mxu0 0
      %1501 = vmatprep.subr.bf16.mxu0 0
      %1502 = vmatpush2.bf16.msra.mxu0 0
      %1503 = vmatprep.subr.bf16.mxu0 0
      %1504 = vmatpush2.bf16.msra.mxu0 0
      %1505 = vmatprep.subr.bf16.mxu0 0
      %1506 = vmatpush2.bf16.msra.mxu0 0
      %1507 = vmatprep.mubr.bf16.mxu0 0
      %1508 = vmatmul.mubr.bf16.gmra.mxu0 %v1395
      %v1509 = vpop.f32.mrf.mxu0
      %v1510 = vadd.f32 0.0, %v1509
      %v1511 = vpop.f32.mrf.mxu0
      %v1512 = vpop.f32.mrf.mxu0
      %v1513 = vadd.f32 0.0, %v1512
      %v1514 = vpop.f32.mrf.mxu0
      %1515 = vmatprep.mubr.bf16.mxu0 0
      %1516 = vmatmul.mubr.bf16.gmra.mxu0 %v1396
      %v1517 = vpop.f32.mrf.mxu0
      %v1518 = vadd.f32 0.0, %v1517
      %v1519 = vpop.f32.mrf.mxu0
      %v1520 = vpop.f32.mrf.mxu0
      %v1521 = vadd.f32 0.0, %v1520
      %v1522 = vpop.f32.mrf.mxu0
      %1523 = vmatprep.mubr.bf16.mxu0 0
      %1524 = vmatmul.mubr.bf16.gmra.mxu0 %v1397
      %v1525 = vpop.f32.mrf.mxu0
      %v1526 = vadd.f32 0.0, %v1525
      %v1527 = vpop.f32.mrf.mxu0
      %v1528 = vpop.f32.mrf.mxu0
      %v1529 = vadd.f32 0.0, %v1528
      %v1530 = vpop.f32.mrf.mxu0
      %1531 = vmatprep.mubr.bf16.mxu0 0
      %1532 = vmatmul.mubr.bf16.gmra.mxu0 %v1398
      %v1533 = vpop.f32.mrf.mxu0
      %v1534 = vadd.f32 0.0, %v1533
      %v1535 = vpop.f32.mrf.mxu0
      %v1536 = vpop.f32.mrf.mxu0
      %v1537 = vadd.f32 0.0, %v1536
      %v1538 = vpop.f32.mrf.mxu0
      %1539 = vmatprep.mubr.bf16.mxu0 0
      %1540 = vmatmul.mubr.bf16.gmra.mxu0 %v1399
      %v1541 = vpop.f32.mrf.mxu0
      %v1542 = vadd.f32 0.0, %v1541
      %v1543 = vpop.f32.mrf.mxu0
      %v1544 = vpop.f32.mrf.mxu0
      %v1545 = vadd.f32 0.0, %v1544
      %v1546 = vpop.f32.mrf.mxu0
      %1547 = vmatprep.mubr.bf16.mxu0 0
      %1548 = vmatmul.mubr.bf16.gmra.mxu0 %v1400
      %v1549 = vpop.f32.mrf.mxu0
      %v1550 = vadd.f32 0.0, %v1549
      %v1551 = vpop.f32.mrf.mxu0
      %v1552 = vpop.f32.mrf.mxu0
      %v1553 = vadd.f32 0.0, %v1552
      %v1554 = vpop.f32.mrf.mxu0
      %1555 = vmatprep.mubr.bf16.mxu0 0
      %1556 = vmatmul.mubr.bf16.gmra.mxu0 %v1401
      %v1557 = vpop.f32.mrf.mxu0
      %v1558 = vadd.f32 0.0, %v1557
      %v1559 = vpop.f32.mrf.mxu0
      %v1560 = vpop.f32.mrf.mxu0
      %v1561 = vadd.f32 0.0, %v1560
      %v1562 = vpop.f32.mrf.mxu0
      %1563 = vmatprep.mubr.bf16.mxu0 0
      %1564 = vmatmul.mubr.bf16.gmra.mxu0 %v1402
      %v1565 = vpop.f32.mrf.mxu0
      %v1566 = vadd.f32 0.0, %v1565
      %v1567 = vpop.f32.mrf.mxu0
      %v1568 = vpop.f32.mrf.mxu0
      %v1569 = vadd.f32 0.0, %v1568
      %v1570 = vpop.f32.mrf.mxu0
      %1571 = vmatprep.mubr.bf16.mxu0 0
      %1572 = vmatmul.mubr.bf16.gmra.mxu0 %v1403
      %v1573 = vpop.f32.mrf.mxu0
      %v1574 = vadd.f32 0.0, %v1573
      %v1575 = vpop.f32.mrf.mxu0
      %v1576 = vpop.f32.mrf.mxu0
      %v1577 = vadd.f32 0.0, %v1576
      %v1578 = vpop.f32.mrf.mxu0
      %1579 = vmatprep.mubr.bf16.mxu0 0
      %1580 = vmatmul.mubr.bf16.gmra.mxu0 %v1404
      %v1581 = vpop.f32.mrf.mxu0
      %v1582 = vadd.f32 0.0, %v1581
      %v1583 = vpop.f32.mrf.mxu0
      %v1584 = vpop.f32.mrf.mxu0
      %v1585 = vadd.f32 0.0, %v1584
      %v1586 = vpop.f32.mrf.mxu0
      %1587 = vmatprep.mubr.bf16.mxu0 0
      %1588 = vmatmul.mubr.bf16.gmra.mxu0 %v1405
      %v1589 = vpop.f32.mrf.mxu0
      %v1590 = vadd.f32 0.0, %v1589
      %v1591 = vpop.f32.mrf.mxu0
      %v1592 = vpop.f32.mrf.mxu0
      %v1593 = vadd.f32 0.0, %v1592
      %v1594 = vpop.f32.mrf.mxu0
      %1595 = vmatprep.mubr.bf16.mxu0 0
      %1596 = vmatmul.mubr.bf16.gmra.mxu0 %v1406
      %v1597 = vpop.f32.mrf.mxu0
      %v1598 = vadd.f32 0.0, %v1597
      %v1599 = vpop.f32.mrf.mxu0
      %v1600 = vpop.f32.mrf.mxu0
      %v1601 = vadd.f32 0.0, %v1600
      %v1602 = vpop.f32.mrf.mxu0
      %1603 = vmatprep.mubr.bf16.mxu0 0
      %1604 = vmatmul.mubr.bf16.gmra.mxu0 %v1407
      %v1605 = vpop.f32.mrf.mxu0
      %v1606 = vadd.f32 0.0, %v1605
      %v1607 = vpop.f32.mrf.mxu0
      %v1608 = vpop.f32.mrf.mxu0
      %v1609 = vadd.f32 0.0, %v1608
      %v1610 = vpop.f32.mrf.mxu0
      %1611 = vmatprep.mubr.bf16.mxu0 0
      %1612 = vmatmul.mubr.bf16.gmra.mxu0 %v1408
      %v1613 = vpop.f32.mrf.mxu0
      %v1614 = vadd.f32 0.0, %v1613
      %v1615 = vpop.f32.mrf.mxu0
      %v1616 = vpop.f32.mrf.mxu0
      %v1617 = vadd.f32 0.0, %v1616
      %v1618 = vpop.f32.mrf.mxu0
      %1619 = vmatprep.mubr.bf16.mxu0 0
      %1620 = vmatmul.mubr.bf16.gmra.mxu0 %v1409
      %v1621 = vpop.f32.mrf.mxu0
      %v1622 = vadd.f32 0.0, %v1621
      %v1623 = vpop.f32.mrf.mxu0
      %v1624 = vpop.f32.mrf.mxu0
      %v1625 = vadd.f32 0.0, %v1624
      %v1626 = vpop.f32.mrf.mxu0
      %1627 = vmatprep.mubr.bf16.mxu0 0
      %1628 = vmatmul.mubr.bf16.gmra.mxu0 %v1410
      %v1629 = vpop.f32.mrf.mxu0
      %v1630 = vadd.f32 0.0, %v1629
      %v1631 = vpop.f32.mrf.mxu0
      %v1632 = vpop.f32.mrf.mxu0
      %v1633 = vadd.f32 0.0, %v1632
      %v1634 = vpop.f32.mrf.mxu0
      %1635 = vdwg.mxu0
      %v1636 = vadd.f32 %v1151, %v1510
      %v1637 = vadd.f32 %v1152, %v1513
      %v1638 = vadd.f32 %v1153, %v1518
      %v1639 = vadd.f32 %v1154, %v1521
      %v1640 = vadd.f32 %v1155, %v1526
      %v1641 = vadd.f32 %v1156, %v1529
      %v1642 = vadd.f32 %v1157, %v1534
      %v1643 = vadd.f32 %v1158, %v1537
      %v1644 = vadd.f32 %v1159, %v1542
      %v1645 = vadd.f32 %v1160, %v1545
      %v1646 = vadd.f32 %v1161, %v1550
      %v1647 = vadd.f32 %v1162, %v1553
      %v1648 = vadd.f32 %v1163, %v1558
      %v1649 = vadd.f32 %v1164, %v1561
      %v1650 = vadd.f32 %v1165, %v1566
      %v1651 = vadd.f32 %v1166, %v1569
      %v1652 = vadd.f32 %v1167, %v1574
      %v1653 = vadd.f32 %v1168, %v1577
      %v1654 = vadd.f32 %v1169, %v1582
      %v1655 = vadd.f32 %v1170, %v1585
      %v1656 = vadd.f32 %v1171, %v1590
      %v1657 = vadd.f32 %v1172, %v1593
      %v1658 = vadd.f32 %v1173, %v1598
      %v1659 = vadd.f32 %v1174, %v1601
      %v1660 = vadd.f32 %v1175, %v1606
      %v1661 = vadd.f32 %v1176, %v1609
      %v1662 = vadd.f32 %v1177, %v1614
      %v1663 = vadd.f32 %v1178, %v1617
      %v1664 = vadd.f32 %v1179, %v1622
      %v1665 = vadd.f32 %v1180, %v1625
      %v1666 = vadd.f32 %v1181, %v1630
      %v1667 = vadd.f32 %v1182, %v1633
      %s1668 = scalar_lea.vmem %s2, 256
      %v1669 = vld [vmem:[%s1668] sm:$0xf]
      %v1670 = vld [vmem:[%s1668 + $0x4] sm:$0xf]
      %v1671 = vld [vmem:[%s1668 + $0x8] sm:$0xf]
      %v1672 = vld [vmem:[%s1668 + $0xc] sm:$0xf]
      %v1673 = vld [vmem:[%s1668 + $0x10] sm:$0xf]
      %v1674 = vld [vmem:[%s1668 + $0x14] sm:$0xf]
      %v1675 = vld [vmem:[%s1668 + $0x18] sm:$0xf]
      %v1676 = vld [vmem:[%s1668 + $0x1c] sm:$0xf]
      %v1677 = vld [vmem:[%s1668 + $0x20] sm:$0xf]
      %v1678 = vld [vmem:[%s1668 + $0x24] sm:$0xf]
      %v1679 = vld [vmem:[%s1668 + $0x28] sm:$0xf]
      %v1680 = vld [vmem:[%s1668 + $0x2c] sm:$0xf]
      %v1681 = vld [vmem:[%s1668 + $0x30] sm:$0xf]
      %v1682 = vld [vmem:[%s1668 + $0x34] sm:$0xf]
      %v1683 = vld [vmem:[%s1668 + $0x38] sm:$0xf]
      %v1684 = vld [vmem:[%s1668 + $0x3c] sm:$0xf]
      %v1685 = vunpack.c.l.b16 %v1321
      %v1686 = vunpack.c.l.b16 %v1324
      %v1687 = vunpack.c.l.b16 %v1328
      %v1688 = vunpack.c.l.b16 %v1331
      %v1689 = vpack.c.b16 %v1686, %v1685
      %v1690 = vpack.c.b16 %v1688, %v1687
      %v1709 = vunpack.c.l.b16 %v1669
      %v1710 = vunpack.c.l.b16 %v1670
      %v1711 = vunpack.c.l.b16 %v1671
      %v1712 = vunpack.c.l.b16 %v1672
      %v1713 = vunpack.c.l.b16 %v1673
      %v1714 = vunpack.c.l.b16 %v1674
      %v1715 = vunpack.c.l.b16 %v1675
      %v1716 = vunpack.c.l.b16 %v1676
      %v1717 = vunpack.c.l.b16 %v1677
      %v1718 = vunpack.c.l.b16 %v1678
      %v1719 = vunpack.c.l.b16 %v1679
      %v1720 = vunpack.c.l.b16 %v1680
      %v1721 = vunpack.c.l.b16 %v1681
      %v1722 = vunpack.c.l.b16 %v1682
      %v1723 = vunpack.c.l.b16 %v1683
      %v1724 = vunpack.c.l.b16 %v1684
      %v1725 = vpack.c.b16 %v1710, %v1709
      %v1726 = vpack.c.b16 %v1712, %v1711
      %v1727 = vpack.c.b16 %v1714, %v1713
      %v1728 = vpack.c.b16 %v1716, %v1715
      %v1729 = vpack.c.b16 %v1718, %v1717
      %v1730 = vpack.c.b16 %v1720, %v1719
      %v1731 = vpack.c.b16 %v1722, %v1721
      %v1732 = vpack.c.b16 %v1724, %v1723
      %1741 = vmatprep.subr.bf16.mxu0 0
      %1742 = vmatpush1.bf16.msra.mxu0 %v1732
      %1743 = vmatprep.subr.bf16.mxu0 0
      %1744 = vmatpush1.bf16.msra.mxu0 %v1731
      %1745 = vmatprep.subr.bf16.mxu0 0
      %1746 = vmatpush1.bf16.msra.mxu0 %v1730
      %1747 = vmatprep.subr.bf16.mxu0 0
      %1748 = vmatpush1.bf16.msra.mxu0 %v1729
      %1749 = vmatprep.subr.bf16.mxu0 0
      %1750 = vmatpush1.bf16.msra.mxu0 %v1728
      %1751 = vmatprep.subr.bf16.mxu0 0
      %1752 = vmatpush1.bf16.msra.mxu0 %v1727
      %1753 = vmatprep.subr.bf16.mxu0 0
      %1754 = vmatpush1.bf16.msra.mxu0 %v1726
      %1755 = vmatprep.subr.bf16.mxu0 0
      %1756 = vmatpush1.bf16.msra.mxu0 %v1725
      %1757 = vmatprep.subr.bf16.mxu0 0
      %1758 = vmatpush2.bf16.msra.mxu0 0
      %1759 = vmatprep.subr.bf16.mxu0 0
      %1760 = vmatpush2.bf16.msra.mxu0 0
      %1761 = vmatprep.subr.bf16.mxu0 0
      %1762 = vmatpush2.bf16.msra.mxu0 0
      %1763 = vmatprep.subr.bf16.mxu0 0
      %1764 = vmatpush2.bf16.msra.mxu0 0
      %1765 = vmatprep.subr.bf16.mxu0 0
      %1766 = vmatpush2.bf16.msra.mxu0 0
      %1767 = vmatprep.subr.bf16.mxu0 0
      %1768 = vmatpush2.bf16.msra.mxu0 0
      %1769 = vmatprep.subr.bf16.mxu0 0
      %1770 = vmatpush2.bf16.msra.mxu0 0
      %1771 = vmatprep.subr.bf16.mxu0 0
      %1772 = vmatpush2.bf16.msra.mxu0 0
      %1773 = vmatprep.mubr.bf16.mxu0 0
      %1774 = vmatmul.mubr.bf16.gmra.mxu0 %v1397
      %v1775 = vpop.f32.mrf.mxu0
      %v1776 = vadd.f32 0.0, %v1775
      %v1777 = vpop.f32.mrf.mxu0
      %v1778 = vpop.f32.mrf.mxu0
      %v1779 = vadd.f32 0.0, %v1778
      %v1780 = vpop.f32.mrf.mxu0
      %1781 = vmatprep.mubr.bf16.mxu0 0
      %1782 = vmatmul.mubr.bf16.gmra.mxu0 %v1398
      %v1783 = vpop.f32.mrf.mxu0
      %v1784 = vadd.f32 0.0, %v1783
      %v1785 = vpop.f32.mrf.mxu0
      %v1786 = vpop.f32.mrf.mxu0
      %v1787 = vadd.f32 0.0, %v1786
      %v1788 = vpop.f32.mrf.mxu0
      %1789 = vmatprep.mubr.bf16.mxu0 0
      %1790 = vmatmul.mubr.bf16.gmra.mxu0 %v1399
      %v1791 = vpop.f32.mrf.mxu0
      %v1792 = vadd.f32 0.0, %v1791
      %v1793 = vpop.f32.mrf.mxu0
      %v1794 = vpop.f32.mrf.mxu0
      %v1795 = vadd.f32 0.0, %v1794
      %v1796 = vpop.f32.mrf.mxu0
      %1797 = vmatprep.mubr.bf16.mxu0 0
      %1798 = vmatmul.mubr.bf16.gmra.mxu0 %v1400
      %v1799 = vpop.f32.mrf.mxu0
      %v1800 = vadd.f32 0.0, %v1799
      %v1801 = vpop.f32.mrf.mxu0
      %v1802 = vpop.f32.mrf.mxu0
      %v1803 = vadd.f32 0.0, %v1802
      %v1804 = vpop.f32.mrf.mxu0
      %1805 = vmatprep.mubr.bf16.mxu0 0
      %1806 = vmatmul.mubr.bf16.gmra.mxu0 %v1401
      %v1807 = vpop.f32.mrf.mxu0
      %v1808 = vadd.f32 0.0, %v1807
      %v1809 = vpop.f32.mrf.mxu0
      %v1810 = vpop.f32.mrf.mxu0
      %v1811 = vadd.f32 0.0, %v1810
      %v1812 = vpop.f32.mrf.mxu0
      %1813 = vmatprep.mubr.bf16.mxu0 0
      %1814 = vmatmul.mubr.bf16.gmra.mxu0 %v1402
      %v1815 = vpop.f32.mrf.mxu0
      %v1816 = vadd.f32 0.0, %v1815
      %v1817 = vpop.f32.mrf.mxu0
      %v1818 = vpop.f32.mrf.mxu0
      %v1819 = vadd.f32 0.0, %v1818
      %v1820 = vpop.f32.mrf.mxu0
      %1821 = vmatprep.mubr.bf16.mxu0 0
      %1822 = vmatmul.mubr.bf16.gmra.mxu0 %v1403
      %v1823 = vpop.f32.mrf.mxu0
      %v1824 = vadd.f32 0.0, %v1823
      %v1825 = vpop.f32.mrf.mxu0
      %v1826 = vpop.f32.mrf.mxu0
      %v1827 = vadd.f32 0.0, %v1826
      %v1828 = vpop.f32.mrf.mxu0
      %1829 = vmatprep.mubr.bf16.mxu0 0
      %1830 = vmatmul.mubr.bf16.gmra.mxu0 %v1404
      %v1831 = vpop.f32.mrf.mxu0
      %v1832 = vadd.f32 0.0, %v1831
      %v1833 = vpop.f32.mrf.mxu0
      %v1834 = vpop.f32.mrf.mxu0
      %v1835 = vadd.f32 0.0, %v1834
      %v1836 = vpop.f32.mrf.mxu0
      %1837 = vmatprep.mubr.bf16.mxu0 0
      %1838 = vmatmul.mubr.bf16.gmra.mxu0 %v1405
      %v1839 = vpop.f32.mrf.mxu0
      %v1840 = vadd.f32 0.0, %v1839
      %v1841 = vpop.f32.mrf.mxu0
      %v1842 = vpop.f32.mrf.mxu0
      %v1843 = vadd.f32 0.0, %v1842
      %v1844 = vpop.f32.mrf.mxu0
      %1845 = vmatprep.mubr.bf16.mxu0 0
      %1846 = vmatmul.mubr.bf16.gmra.mxu0 %v1406
      %v1847 = vpop.f32.mrf.mxu0
      %v1848 = vadd.f32 0.0, %v1847
      %v1849 = vpop.f32.mrf.mxu0
      %v1850 = vpop.f32.mrf.mxu0
      %v1851 = vadd.f32 0.0, %v1850
      %v1852 = vpop.f32.mrf.mxu0
      %1853 = vmatprep.mubr.bf16.mxu0 0
      %1854 = vmatmul.mubr.bf16.gmra.mxu0 %v1407
      %v1855 = vpop.f32.mrf.mxu0
      %v1856 = vadd.f32 0.0, %v1855
      %v1857 = vpop.f32.mrf.mxu0
      %v1858 = vpop.f32.mrf.mxu0
      %v1859 = vadd.f32 0.0, %v1858
      %v1860 = vpop.f32.mrf.mxu0
      %1861 = vmatprep.mubr.bf16.mxu0 0
      %1862 = vmatmul.mubr.bf16.gmra.mxu0 %v1408
      %v1863 = vpop.f32.mrf.mxu0
      %v1864 = vadd.f32 0.0, %v1863
      %v1865 = vpop.f32.mrf.mxu0
      %v1866 = vpop.f32.mrf.mxu0
      %v1867 = vadd.f32 0.0, %v1866
      %v1868 = vpop.f32.mrf.mxu0
      %1869 = vmatprep.mubr.bf16.mxu0 0
      %1870 = vmatmul.mubr.bf16.gmra.mxu0 %v1409
      %v1871 = vpop.f32.mrf.mxu0
      %v1872 = vadd.f32 0.0, %v1871
      %v1873 = vpop.f32.mrf.mxu0
      %v1874 = vpop.f32.mrf.mxu0
      %v1875 = vadd.f32 0.0, %v1874
      %v1876 = vpop.f32.mrf.mxu0
      %1877 = vmatprep.mubr.bf16.mxu0 0
      %1878 = vmatmul.mubr.bf16.gmra.mxu0 %v1410
      %v1879 = vpop.f32.mrf.mxu0
      %v1880 = vadd.f32 0.0, %v1879
      %v1881 = vpop.f32.mrf.mxu0
      %v1882 = vpop.f32.mrf.mxu0
      %v1883 = vadd.f32 0.0, %v1882
      %v1884 = vpop.f32.mrf.mxu0
      %1885 = vmatprep.mubr.bf16.mxu0 0
      %1886 = vmatmul.mubr.bf16.gmra.mxu0 %v1689
      %v1887 = vpop.f32.mrf.mxu0
      %v1888 = vadd.f32 0.0, %v1887
      %v1889 = vpop.f32.mrf.mxu0
      %v1890 = vpop.f32.mrf.mxu0
      %v1891 = vadd.f32 0.0, %v1890
      %v1892 = vpop.f32.mrf.mxu0
      %1893 = vmatprep.mubr.bf16.mxu0 0
      %1894 = vmatmul.mubr.bf16.gmra.mxu0 %v1690
      %v1895 = vpop.f32.mrf.mxu0
      %v1896 = vadd.f32 0.0, %v1895
      %v1897 = vpop.f32.mrf.mxu0
      %v1898 = vpop.f32.mrf.mxu0
      %v1899 = vadd.f32 0.0, %v1898
      %v1900 = vpop.f32.mrf.mxu0
      %1901 = vdwg.mxu0
      %v1902 = vadd.f32 %v1636, %v1776
      %v1903 = vadd.f32 %v1637, %v1779
      %v1904 = vadd.f32 %v1638, %v1784
      %v1905 = vadd.f32 %v1639, %v1787
      %v1906 = vadd.f32 %v1640, %v1792
      %v1907 = vadd.f32 %v1641, %v1795
      %v1908 = vadd.f32 %v1642, %v1800
      %v1909 = vadd.f32 %v1643, %v1803
      %v1910 = vadd.f32 %v1644, %v1808
      %v1911 = vadd.f32 %v1645, %v1811
      %v1912 = vadd.f32 %v1646, %v1816
      %v1913 = vadd.f32 %v1647, %v1819
      %v1914 = vadd.f32 %v1648, %v1824
      %v1915 = vadd.f32 %v1649, %v1827
      %v1916 = vadd.f32 %v1650, %v1832
      %v1917 = vadd.f32 %v1651, %v1835
      %v1918 = vadd.f32 %v1652, %v1840
      %v1919 = vadd.f32 %v1653, %v1843
      %v1920 = vadd.f32 %v1654, %v1848
      %v1921 = vadd.f32 %v1655, %v1851
      %v1922 = vadd.f32 %v1656, %v1856
      %v1923 = vadd.f32 %v1657, %v1859
      %v1924 = vadd.f32 %v1658, %v1864
      %v1925 = vadd.f32 %v1659, %v1867
      %v1926 = vadd.f32 %v1660, %v1872
      %v1927 = vadd.f32 %v1661, %v1875
      %v1928 = vadd.f32 %v1662, %v1880
      %v1929 = vadd.f32 %v1663, %v1883
      %v1930 = vadd.f32 %v1664, %v1888
      %v1931 = vadd.f32 %v1665, %v1891
      %v1932 = vadd.f32 %v1666, %v1896
      %v1933 = vadd.f32 %v1667, %v1899
      %s1934 = scalar_lea.vmem %s2, 448
      %v1935 = vld [vmem:[%s1934] sm:$0xf]
      %v1936 = vld [vmem:[%s1934 + $0x4] sm:$0xf]
      %v1937 = vld [vmem:[%s1934 + $0x8] sm:$0xf]
      %v1938 = vld [vmem:[%s1934 + $0xc] sm:$0xf]
      %v1939 = vld [vmem:[%s1934 + $0x10] sm:$0xf]
      %v1940 = vld [vmem:[%s1934 + $0x14] sm:$0xf]
      %v1941 = vld [vmem:[%s1934 + $0x18] sm:$0xf]
      %v1942 = vld [vmem:[%s1934 + $0x1c] sm:$0xf]
      %v1943 = vld [vmem:[%s1934 + $0x20] sm:$0xf]
      %v1944 = vld [vmem:[%s1934 + $0x24] sm:$0xf]
      %v1945 = vld [vmem:[%s1934 + $0x28] sm:$0xf]
      %v1946 = vld [vmem:[%s1934 + $0x2c] sm:$0xf]
      %v1947 = vld [vmem:[%s1934 + $0x30] sm:$0xf]
      %v1948 = vld [vmem:[%s1934 + $0x34] sm:$0xf]
      %v1949 = vld [vmem:[%s1934 + $0x38] sm:$0xf]
      %v1950 = vld [vmem:[%s1934 + $0x3c] sm:$0xf]
      %v1951 = vunpack.c.l.b16 %v1335
      %v1952 = vunpack.c.l.b16 %v1338
      %v1953 = vunpack.c.l.b16 %v1342
      %v1954 = vunpack.c.l.b16 %v1345
      %v1955 = vpack.c.b16 %v1952, %v1951
      %v1956 = vpack.c.b16 %v1954, %v1953
      %v1975 = vunpack.c.l.b16 %v1935
      %v1976 = vunpack.c.l.b16 %v1936
      %v1977 = vunpack.c.l.b16 %v1937
      %v1978 = vunpack.c.l.b16 %v1938
      %v1979 = vunpack.c.l.b16 %v1939
      %v1980 = vunpack.c.l.b16 %v1940
      %v1981 = vunpack.c.l.b16 %v1941
      %v1982 = vunpack.c.l.b16 %v1942
      %v1983 = vunpack.c.l.b16 %v1943
      %v1984 = vunpack.c.l.b16 %v1944
      %v1985 = vunpack.c.l.b16 %v1945
      %v1986 = vunpack.c.l.b16 %v1946
      %v1987 = vunpack.c.l.b16 %v1947
      %v1988 = vunpack.c.l.b16 %v1948
      %v1989 = vunpack.c.l.b16 %v1949
      %v1990 = vunpack.c.l.b16 %v1950
      %v1991 = vpack.c.b16 %v1976, %v1975
      %v1992 = vpack.c.b16 %v1978, %v1977
      %v1993 = vpack.c.b16 %v1980, %v1979
      %v1994 = vpack.c.b16 %v1982, %v1981
      %v1995 = vpack.c.b16 %v1984, %v1983
      %v1996 = vpack.c.b16 %v1986, %v1985
      %v1997 = vpack.c.b16 %v1988, %v1987
      %v1998 = vpack.c.b16 %v1990, %v1989
      %2007 = vmatprep.subr.bf16.mxu0 0
      %2008 = vmatpush1.bf16.msra.mxu0 %v1998
      %2009 = vmatprep.subr.bf16.mxu0 0
      %2010 = vmatpush1.bf16.msra.mxu0 %v1997
      %2011 = vmatprep.subr.bf16.mxu0 0
      %2012 = vmatpush1.bf16.msra.mxu0 %v1996
      %2013 = vmatprep.subr.bf16.mxu0 0
      %2014 = vmatpush1.bf16.msra.mxu0 %v1995
      %2015 = vmatprep.subr.bf16.mxu0 0
      %2016 = vmatpush1.bf16.msra.mxu0 %v1994
      %2017 = vmatprep.subr.bf16.mxu0 0
      %2018 = vmatpush1.bf16.msra.mxu0 %v1993
      %2019 = vmatprep.subr.bf16.mxu0 0
      %2020 = vmatpush1.bf16.msra.mxu0 %v1992
      %2021 = vmatprep.subr.bf16.mxu0 0
      %2022 = vmatpush1.bf16.msra.mxu0 %v1991
      %2023 = vmatprep.subr.bf16.mxu0 0
      %2024 = vmatpush2.bf16.msra.mxu0 0
      %2025 = vmatprep.subr.bf16.mxu0 0
      %2026 = vmatpush2.bf16.msra.mxu0 0
      %2027 = vmatprep.subr.bf16.mxu0 0
      %2028 = vmatpush2.bf16.msra.mxu0 0
      %2029 = vmatprep.subr.bf16.mxu0 0
      %2030 = vmatpush2.bf16.msra.mxu0 0
      %2031 = vmatprep.subr.bf16.mxu0 0
      %2032 = vmatpush2.bf16.msra.mxu0 0
      %2033 = vmatprep.subr.bf16.mxu0 0
      %2034 = vmatpush2.bf16.msra.mxu0 0
      %2035 = vmatprep.subr.bf16.mxu0 0
      %2036 = vmatpush2.bf16.msra.mxu0 0
      %2037 = vmatprep.subr.bf16.mxu0 0
      %2038 = vmatpush2.bf16.msra.mxu0 0
      %2039 = vmatprep.mubr.bf16.mxu0 0
      %2040 = vmatmul.mubr.bf16.gmra.mxu0 %v1399
      %v2041 = vpop.f32.mrf.mxu0
      %v2042 = vadd.f32 0.0, %v2041
      %v2043 = vpop.f32.mrf.mxu0
      %v2044 = vpop.f32.mrf.mxu0
      %v2045 = vadd.f32 0.0, %v2044
      %v2046 = vpop.f32.mrf.mxu0
      %2047 = vmatprep.mubr.bf16.mxu0 0
      %2048 = vmatmul.mubr.bf16.gmra.mxu0 %v1400
      %v2049 = vpop.f32.mrf.mxu0
      %v2050 = vadd.f32 0.0, %v2049
      %v2051 = vpop.f32.mrf.mxu0
      %v2052 = vpop.f32.mrf.mxu0
      %v2053 = vadd.f32 0.0, %v2052
      %v2054 = vpop.f32.mrf.mxu0
      %2055 = vmatprep.mubr.bf16.mxu0 0
      %2056 = vmatmul.mubr.bf16.gmra.mxu0 %v1401
      %v2057 = vpop.f32.mrf.mxu0
      %v2058 = vadd.f32 0.0, %v2057
      %v2059 = vpop.f32.mrf.mxu0
      %v2060 = vpop.f32.mrf.mxu0
      %v2061 = vadd.f32 0.0, %v2060
      %v2062 = vpop.f32.mrf.mxu0
      %2063 = vmatprep.mubr.bf16.mxu0 0
      %2064 = vmatmul.mubr.bf16.gmra.mxu0 %v1402
      %v2065 = vpop.f32.mrf.mxu0
      %v2066 = vadd.f32 0.0, %v2065
      %v2067 = vpop.f32.mrf.mxu0
      %v2068 = vpop.f32.mrf.mxu0
      %v2069 = vadd.f32 0.0, %v2068
      %v2070 = vpop.f32.mrf.mxu0
      %2071 = vmatprep.mubr.bf16.mxu0 0
      %2072 = vmatmul.mubr.bf16.gmra.mxu0 %v1403
      %v2073 = vpop.f32.mrf.mxu0
      %v2074 = vadd.f32 0.0, %v2073
      %v2075 = vpop.f32.mrf.mxu0
      %v2076 = vpop.f32.mrf.mxu0
      %v2077 = vadd.f32 0.0, %v2076
      %v2078 = vpop.f32.mrf.mxu0
      %2079 = vmatprep.mubr.bf16.mxu0 0
      %2080 = vmatmul.mubr.bf16.gmra.mxu0 %v1404
      %v2081 = vpop.f32.mrf.mxu0
      %v2082 = vadd.f32 0.0, %v2081
      %v2083 = vpop.f32.mrf.mxu0
      %v2084 = vpop.f32.mrf.mxu0
      %v2085 = vadd.f32 0.0, %v2084
      %v2086 = vpop.f32.mrf.mxu0
      %2087 = vmatprep.mubr.bf16.mxu0 0
      %2088 = vmatmul.mubr.bf16.gmra.mxu0 %v1405
      %v2089 = vpop.f32.mrf.mxu0
      %v2090 = vadd.f32 0.0, %v2089
      %v2091 = vpop.f32.mrf.mxu0
      %v2092 = vpop.f32.mrf.mxu0
      %v2093 = vadd.f32 0.0, %v2092
      %v2094 = vpop.f32.mrf.mxu0
      %2095 = vmatprep.mubr.bf16.mxu0 0
      %2096 = vmatmul.mubr.bf16.gmra.mxu0 %v1406
      %v2097 = vpop.f32.mrf.mxu0
      %v2098 = vadd.f32 0.0, %v2097
      %v2099 = vpop.f32.mrf.mxu0
      %v2100 = vpop.f32.mrf.mxu0
      %v2101 = vadd.f32 0.0, %v2100
      %v2102 = vpop.f32.mrf.mxu0
      %2103 = vmatprep.mubr.bf16.mxu0 0
      %2104 = vmatmul.mubr.bf16.gmra.mxu0 %v1407
      %v2105 = vpop.f32.mrf.mxu0
      %v2106 = vadd.f32 0.0, %v2105
      %v2107 = vpop.f32.mrf.mxu0
      %v2108 = vpop.f32.mrf.mxu0
      %v2109 = vadd.f32 0.0, %v2108
      %v2110 = vpop.f32.mrf.mxu0
      %2111 = vmatprep.mubr.bf16.mxu0 0
      %2112 = vmatmul.mubr.bf16.gmra.mxu0 %v1408
      %v2113 = vpop.f32.mrf.mxu0
      %v2114 = vadd.f32 0.0, %v2113
      %v2115 = vpop.f32.mrf.mxu0
      %v2116 = vpop.f32.mrf.mxu0
      %v2117 = vadd.f32 0.0, %v2116
      %v2118 = vpop.f32.mrf.mxu0
      %2119 = vmatprep.mubr.bf16.mxu0 0
      %2120 = vmatmul.mubr.bf16.gmra.mxu0 %v1409
      %v2121 = vpop.f32.mrf.mxu0
      %v2122 = vadd.f32 0.0, %v2121
      %v2123 = vpop.f32.mrf.mxu0
      %v2124 = vpop.f32.mrf.mxu0
      %v2125 = vadd.f32 0.0, %v2124
      %v2126 = vpop.f32.mrf.mxu0
      %2127 = vmatprep.mubr.bf16.mxu0 0
      %2128 = vmatmul.mubr.bf16.gmra.mxu0 %v1410
      %v2129 = vpop.f32.mrf.mxu0
      %v2130 = vadd.f32 0.0, %v2129
      %v2131 = vpop.f32.mrf.mxu0
      %v2132 = vpop.f32.mrf.mxu0
      %v2133 = vadd.f32 0.0, %v2132
      %v2134 = vpop.f32.mrf.mxu0
      %2135 = vmatprep.mubr.bf16.mxu0 0
      %2136 = vmatmul.mubr.bf16.gmra.mxu0 %v1689
      %v2137 = vpop.f32.mrf.mxu0
      %v2138 = vadd.f32 0.0, %v2137
      %v2139 = vpop.f32.mrf.mxu0
      %v2140 = vpop.f32.mrf.mxu0
      %v2141 = vadd.f32 0.0, %v2140
      %v2142 = vpop.f32.mrf.mxu0
      %2143 = vmatprep.mubr.bf16.mxu0 0
      %2144 = vmatmul.mubr.bf16.gmra.mxu0 %v1690
      %v2145 = vpop.f32.mrf.mxu0
      %v2146 = vadd.f32 0.0, %v2145
      %v2147 = vpop.f32.mrf.mxu0
      %v2148 = vpop.f32.mrf.mxu0
      %v2149 = vadd.f32 0.0, %v2148
      %v2150 = vpop.f32.mrf.mxu0
      %2151 = vmatprep.mubr.bf16.mxu0 0
      %2152 = vmatmul.mubr.bf16.gmra.mxu0 %v1955
      %v2153 = vpop.f32.mrf.mxu0
      %v2154 = vadd.f32 0.0, %v2153
      %v2155 = vpop.f32.mrf.mxu0
      %v2156 = vpop.f32.mrf.mxu0
      %v2157 = vadd.f32 0.0, %v2156
      %v2158 = vpop.f32.mrf.mxu0
      %2159 = vmatprep.mubr.bf16.mxu0 0
      %2160 = vmatmul.mubr.bf16.gmra.mxu0 %v1956
      %v2161 = vpop.f32.mrf.mxu0
      %v2162 = vadd.f32 0.0, %v2161
      %v2163 = vpop.f32.mrf.mxu0
      %v2164 = vpop.f32.mrf.mxu0
      %v2165 = vadd.f32 0.0, %v2164
      %v2166 = vpop.f32.mrf.mxu0
      %2167 = vdwg.mxu0
      %v2168 = vadd.f32 %v1902, %v2042
      %v2169 = vadd.f32 %v1903, %v2045
      %v2170 = vadd.f32 %v1904, %v2050
      %v2171 = vadd.f32 %v1905, %v2053
      %v2172 = vadd.f32 %v1906, %v2058
      %v2173 = vadd.f32 %v1907, %v2061
      %v2174 = vadd.f32 %v1908, %v2066
      %v2175 = vadd.f32 %v1909, %v2069
      %v2176 = vadd.f32 %v1910, %v2074
      %v2177 = vadd.f32 %v1911, %v2077
      %v2178 = vadd.f32 %v1912, %v2082
      %v2179 = vadd.f32 %v1913, %v2085
      %v2180 = vadd.f32 %v1914, %v2090
      %v2181 = vadd.f32 %v1915, %v2093
      %v2182 = vadd.f32 %v1916, %v2098
      %v2183 = vadd.f32 %v1917, %v2101
      %v2184 = vadd.f32 %v1918, %v2106
      %v2185 = vadd.f32 %v1919, %v2109
      %v2186 = vadd.f32 %v1920, %v2114
      %v2187 = vadd.f32 %v1921, %v2117
      %v2188 = vadd.f32 %v1922, %v2122
      %v2189 = vadd.f32 %v1923, %v2125
      %v2190 = vadd.f32 %v1924, %v2130
      %v2191 = vadd.f32 %v1925, %v2133
      %v2192 = vadd.f32 %v1926, %v2138
      %v2193 = vadd.f32 %v1927, %v2141
      %v2194 = vadd.f32 %v1928, %v2146
      %v2195 = vadd.f32 %v1929, %v2149
      %v2196 = vadd.f32 %v1930, %v2154
      %v2197 = vadd.f32 %v1931, %v2157
      %v2198 = vadd.f32 %v1932, %v2162
      %v2199 = vadd.f32 %v1933, %v2165
      %vm2200 = vcmask 1041408
      %vm2201 = vcmask 1045508
      %vm2202 = vmor %vm2200, %vm2201
      %v2203 = vrot.slane %v294, 6
      %v2204 = vrot.slane %v2203, 4
      %v2205 = vrot.slane %v295, 6
      %v2206 = vsel %vm2202, %v2204, %v2205
      %v2207 = vrot.slane %v2205, 4
      %v2208 = vrot.slane %v296, 6
      %v2209 = vsel %vm2202, %v2207, %v2208
      %v2210 = vrot.slane %v297, 6
      %v2211 = vrot.slane %v2210, 4
      %v2212 = vrot.slane %v298, 6
      %v2213 = vsel %vm2202, %v2211, %v2212
      %v2214 = vrot.slane %v2212, 4
      %v2215 = vrot.slane %v299, 6
      %v2216 = vsel %vm2202, %v2214, %v2215
      %v2217 = vrot.slane %v300, 6
      %v2218 = vrot.slane %v2217, 4
      %v2219 = vrot.slane %v301, 6
      %v2220 = vsel %vm2202, %v2218, %v2219
      %v2221 = vrot.slane %v2219, 4
      %v2222 = vrot.slane %v302, 6
      %v2223 = vsel %vm2202, %v2221, %v2222
      %v2224 = vrot.slane %v303, 6
      %v2225 = vrot.slane %v2224, 4
      %v2226 = vrot.slane %v304, 6
      %v2227 = vsel %vm2202, %v2225, %v2226
      %v2228 = vrot.slane %v2226, 4
      %v2229 = vrot.slane %v305, 6
      %v2230 = vsel %vm2202, %v2228, %v2229
      %v2231 = vrot.slane %v306, 6
      %v2232 = vrot.slane %v2231, 4
      %v2233 = vrot.slane %v307, 6
      %v2234 = vsel %vm2202, %v2232, %v2233
      %v2235 = vrot.slane %v2233, 4
      %v2236 = vrot.slane %v308, 6
      %v2237 = vsel %vm2202, %v2235, %v2236
      %v2238 = vrot.slane %v309, 6
      %v2239 = vrot.slane %v2238, 4
      %v2240 = vrot.slane %v310, 6
      %v2241 = vsel %vm2202, %v2239, %v2240
      %v2242 = vrot.slane %v2240, 4
      %v2243 = vrot.slane %v311, 6
      %v2244 = vsel %vm2202, %v2242, %v2243
      %v2245 = vrot.slane %v312, 6
      %v2246 = vrot.slane %v2245, 4
      %v2247 = vrot.slane %v313, 6
      %v2248 = vsel %vm2202, %v2246, %v2247
      %v2249 = vrot.slane %v2247, 4
      %v2250 = vrot.slane %v314, 6
      %v2251 = vsel %vm2202, %v2249, %v2250
      %v2252 = vrot.slane %v315, 6
      %v2253 = vrot.slane %v2252, 4
      %v2254 = vrot.slane %v316, 6
      %v2255 = vsel %vm2202, %v2253, %v2254
      %v2256 = vrot.slane %v2254, 4
      %v2257 = vrot.slane %v317, 6
      %v2258 = vsel %vm2202, %v2256, %v2257
      %v2259 = vrot.slane %v318, 6
      %v2260 = vrot.slane %v2259, 4
      %v2261 = vrot.slane %v319, 6
      %v2262 = vsel %vm2202, %v2260, %v2261
      %v2263 = vrot.slane %v2261, 4
      %v2264 = vrot.slane %v320, 6
      %v2265 = vsel %vm2202, %v2263, %v2264
      %v2266 = vrot.slane %v321, 6
      %v2267 = vrot.slane %v2266, 4
      %v2268 = vrot.slane %v322, 6
      %v2269 = vsel %vm2202, %v2267, %v2268
      %v2270 = vrot.slane %v2268, 4
      %v2271 = vrot.slane %v323, 6
      %v2272 = vsel %vm2202, %v2270, %v2271
      %v2273 = vrot.slane %v324, 6
      %v2274 = vrot.slane %v2273, 4
      %v2275 = vrot.slane %v325, 6
      %v2276 = vsel %vm2202, %v2274, %v2275
      %v2277 = vrot.slane %v2275, 4
      %v2278 = vrot.slane %v326, 6
      %v2279 = vsel %vm2202, %v2277, %v2278
      %v2280 = vrot.slane %v327, 6
      %v2281 = vrot.slane %v2280, 4
      %v2282 = vrot.slane %v328, 6
      %v2283 = vsel %vm2202, %v2281, %v2282
      %v2284 = vrot.slane %v2282, 4
      %v2285 = vrot.slane %v329, 6
      %v2286 = vsel %vm2202, %v2284, %v2285
      %v2287 = vrot.slane %v330, 6
      %v2288 = vrot.slane %v2287, 4
      %v2289 = vrot.slane %v331, 6
      %v2290 = vsel %vm2202, %v2288, %v2289
      %v2291 = vrot.slane %v2289, 4
      %v2292 = vrot.slane %v332, 6
      %v2293 = vsel %vm2202, %v2291, %v2292
      %v2294 = vrot.slane %v333, 6
      %v2295 = vrot.slane %v2294, 4
      %v2296 = vrot.slane %v334, 6
      %v2297 = vsel %vm2202, %v2295, %v2296
      %v2298 = vrot.slane %v2296, 4
      %v2299 = vrot.slane %v335, 6
      %v2300 = vsel %vm2202, %v2298, %v2299
      %v2301 = vrot.slane %v336, 6
      %v2302 = vrot.slane %v2301, 4
      %v2303 = vrot.slane %v337, 6
      %v2304 = vsel %vm2202, %v2302, %v2303
      %v2305 = vrot.slane %v2303, 4
      %v2306 = vrot.slane %v338, 6
      %v2307 = vsel %vm2202, %v2305, %v2306
      %v2308 = vrot.slane %v339, 6
      %v2309 = vrot.slane %v2308, 4
      %v2310 = vrot.slane %v340, 6
      %v2311 = vsel %vm2202, %v2309, %v2310
      %v2312 = vrot.slane %v2310, 4
      %v2313 = vrot.slane %v341, 6
      %v2314 = vsel %vm2202, %v2312, %v2313
      %v2315 = vrot.slane %v342, 6
      %v2316 = vrot.slane %v2315, 4
      %v2317 = vrot.slane %v343, 6
      %v2318 = vsel %vm2202, %v2316, %v2317
      %v2319 = vrot.slane %v2317, 4
      %v2320 = vrot.slane %v344, 6
      %v2321 = vsel %vm2202, %v2319, %v2320
      %v2322 = vrot.slane %v345, 6
      %v2323 = vrot.slane %v2322, 4
      %v2324 = vrot.slane %v346, 6
      %v2325 = vsel %vm2202, %v2323, %v2324
      %v2326 = vrot.slane %v2324, 4
      %v2327 = vrot.slane %v347, 6
      %v2328 = vsel %vm2202, %v2326, %v2327
      %v2329 = vrot.slane %v348, 6
      %v2330 = vrot.slane %v2329, 4
      %v2331 = vrot.slane %v349, 6
      %v2332 = vsel %vm2202, %v2330, %v2331
      %v2333 = vrot.slane %v2331, 4
      %v2334 = vrot.slane %v350, 6
      %v2335 = vsel %vm2202, %v2333, %v2334
      %v2336 = vrot.slane %v351, 6
      %v2337 = vrot.slane %v2336, 4
      %v2338 = vrot.slane %v352, 6
      %v2339 = vsel %vm2202, %v2337, %v2338
      %v2340 = vrot.slane %v2338, 4
      %v2341 = vrot.slane %v353, 6
      %v2342 = vsel %vm2202, %v2340, %v2341
      %s2343 = scalar_lea.vmem %s2, 128
      %v2344 = vld [vmem:[%s2343] sm:$0xf]
      %v2345 = vld [vmem:[%s2343 + $0x4] sm:$0xf]
      %v2346 = vld [vmem:[%s2343 + $0x8] sm:$0xf]
      %v2347 = vld [vmem:[%s2343 + $0xc] sm:$0xf]
      %v2348 = vld [vmem:[%s2343 + $0x10] sm:$0xf]
      %v2349 = vld [vmem:[%s2343 + $0x14] sm:$0xf]
      %v2350 = vld [vmem:[%s2343 + $0x18] sm:$0xf]
      %v2351 = vld [vmem:[%s2343 + $0x1c] sm:$0xf]
      %v2352 = vld [vmem:[%s2343 + $0x20] sm:$0xf]
      %v2353 = vld [vmem:[%s2343 + $0x24] sm:$0xf]
      %v2354 = vld [vmem:[%s2343 + $0x28] sm:$0xf]
      %v2355 = vld [vmem:[%s2343 + $0x2c] sm:$0xf]
      %v2356 = vld [vmem:[%s2343 + $0x30] sm:$0xf]
      %v2357 = vld [vmem:[%s2343 + $0x34] sm:$0xf]
      %v2358 = vld [vmem:[%s2343 + $0x38] sm:$0xf]
      %v2359 = vld [vmem:[%s2343 + $0x3c] sm:$0xf]
      %v2360 = vunpack.c.l.b16 %v2206
      %v2361 = vunpack.c.l.b16 %v2209
      %v2362 = vunpack.c.l.b16 %v2213
      %v2363 = vunpack.c.l.b16 %v2216
      %v2364 = vunpack.c.l.b16 %v2220
      %v2365 = vunpack.c.l.b16 %v2223
      %v2366 = vunpack.c.l.b16 %v2227
      %v2367 = vunpack.c.l.b16 %v2230
      %v2368 = vunpack.c.l.b16 %v2234
      %v2369 = vunpack.c.l.b16 %v2237
      %v2370 = vunpack.c.l.b16 %v2241
      %v2371 = vunpack.c.l.b16 %v2244
      %v2372 = vunpack.c.l.b16 %v2248
      %v2373 = vunpack.c.l.b16 %v2251
      %v2374 = vunpack.c.l.b16 %v2255
      %v2375 = vunpack.c.l.b16 %v2258
      %v2376 = vunpack.c.l.b16 %v2262
      %v2377 = vunpack.c.l.b16 %v2265
      %v2378 = vunpack.c.l.b16 %v2269
      %v2379 = vunpack.c.l.b16 %v2272
      %v2380 = vunpack.c.l.b16 %v2276
      %v2381 = vunpack.c.l.b16 %v2279
      %v2382 = vunpack.c.l.b16 %v2283
      %v2383 = vunpack.c.l.b16 %v2286
      %v2384 = vunpack.c.l.b16 %v2290
      %v2385 = vunpack.c.l.b16 %v2293
      %v2386 = vunpack.c.l.b16 %v2297
      %v2387 = vunpack.c.l.b16 %v2300
      %v2388 = vunpack.c.l.b16 %v2304
      %v2389 = vunpack.c.l.b16 %v2307
      %v2390 = vunpack.c.l.b16 %v2311
      %v2391 = vunpack.c.l.b16 %v2314
      %v2392 = vpack.c.b16 %v2361, %v2360
      %v2393 = vpack.c.b16 %v2363, %v2362
      %v2394 = vpack.c.b16 %v2365, %v2364
      %v2395 = vpack.c.b16 %v2367, %v2366
      %v2396 = vpack.c.b16 %v2369, %v2368
      %v2397 = vpack.c.b16 %v2371, %v2370
      %v2398 = vpack.c.b16 %v2373, %v2372
      %v2399 = vpack.c.b16 %v2375, %v2374
      %v2400 = vpack.c.b16 %v2377, %v2376
      %v2401 = vpack.c.b16 %v2379, %v2378
      %v2402 = vpack.c.b16 %v2381, %v2380
      %v2403 = vpack.c.b16 %v2383, %v2382
      %v2404 = vpack.c.b16 %v2385, %v2384
      %v2405 = vpack.c.b16 %v2387, %v2386
      %v2406 = vpack.c.b16 %v2389, %v2388
      %v2407 = vpack.c.b16 %v2391, %v2390
      %v2440 = vunpack.c.l.b16 %v2344
      %v2441 = vunpack.c.l.b16 %v2345
      %v2442 = vunpack.c.l.b16 %v2346
      %v2443 = vunpack.c.l.b16 %v2347
      %v2444 = vunpack.c.l.b16 %v2348
      %v2445 = vunpack.c.l.b16 %v2349
      %v2446 = vunpack.c.l.b16 %v2350
      %v2447 = vunpack.c.l.b16 %v2351
      %v2448 = vunpack.c.l.b16 %v2352
      %v2449 = vunpack.c.l.b16 %v2353
      %v2450 = vunpack.c.l.b16 %v2354
      %v2451 = vunpack.c.l.b16 %v2355
      %v2452 = vunpack.c.l.b16 %v2356
      %v2453 = vunpack.c.l.b16 %v2357
      %v2454 = vunpack.c.l.b16 %v2358
      %v2455 = vunpack.c.l.b16 %v2359
      %v2456 = vpack.c.b16 %v2441, %v2440
      %v2457 = vpack.c.b16 %v2443, %v2442
      %v2458 = vpack.c.b16 %v2445, %v2444
      %v2459 = vpack.c.b16 %v2447, %v2446
      %v2460 = vpack.c.b16 %v2449, %v2448
      %v2461 = vpack.c.b16 %v2451, %v2450
      %v2462 = vpack.c.b16 %v2453, %v2452
      %v2463 = vpack.c.b16 %v2455, %v2454
      %2472 = vmatprep.subr.bf16.mxu0 0
      %2473 = vmatpush1.bf16.msra.mxu0 %v2463
      %2474 = vmatprep.subr.bf16.mxu0 0
      %2475 = vmatpush1.bf16.msra.mxu0 %v2462
      %2476 = vmatprep.subr.bf16.mxu0 0
      %2477 = vmatpush1.bf16.msra.mxu0 %v2461
      %2478 = vmatprep.subr.bf16.mxu0 0
      %2479 = vmatpush1.bf16.msra.mxu0 %v2460
      %2480 = vmatprep.subr.bf16.mxu0 0
      %2481 = vmatpush1.bf16.msra.mxu0 %v2459
      %2482 = vmatprep.subr.bf16.mxu0 0
      %2483 = vmatpush1.bf16.msra.mxu0 %v2458
      %2484 = vmatprep.subr.bf16.mxu0 0
      %2485 = vmatpush1.bf16.msra.mxu0 %v2457
      %2486 = vmatprep.subr.bf16.mxu0 0
      %2487 = vmatpush1.bf16.msra.mxu0 %v2456
      %2488 = vmatprep.subr.bf16.mxu0 0
      %2489 = vmatpush2.bf16.msra.mxu0 0
      %2490 = vmatprep.subr.bf16.mxu0 0
      %2491 = vmatpush2.bf16.msra.mxu0 0
      %2492 = vmatprep.subr.bf16.mxu0 0
      %2493 = vmatpush2.bf16.msra.mxu0 0
      %2494 = vmatprep.subr.bf16.mxu0 0
      %2495 = vmatpush2.bf16.msra.mxu0 0
      %2496 = vmatprep.subr.bf16.mxu0 0
      %2497 = vmatpush2.bf16.msra.mxu0 0
      %2498 = vmatprep.subr.bf16.mxu0 0
      %2499 = vmatpush2.bf16.msra.mxu0 0
      %2500 = vmatprep.subr.bf16.mxu0 0
      %2501 = vmatpush2.bf16.msra.mxu0 0
      %2502 = vmatprep.subr.bf16.mxu0 0
      %2503 = vmatpush2.bf16.msra.mxu0 0
      %2504 = vmatprep.mubr.bf16.mxu0 0
      %2505 = vmatmul.mubr.bf16.gmra.mxu0 %v2392
      %v2506 = vpop.f32.mrf.mxu0
      %v2507 = vadd.f32 0.0, %v2506
      %v2508 = vpop.f32.mrf.mxu0
      %v2509 = vpop.f32.mrf.mxu0
      %v2510 = vadd.f32 0.0, %v2509
      %v2511 = vpop.f32.mrf.mxu0
      %2512 = vmatprep.mubr.bf16.mxu0 0
      %2513 = vmatmul.mubr.bf16.gmra.mxu0 %v2393
      %v2514 = vpop.f32.mrf.mxu0
      %v2515 = vadd.f32 0.0, %v2514
      %v2516 = vpop.f32.mrf.mxu0
      %v2517 = vpop.f32.mrf.mxu0
      %v2518 = vadd.f32 0.0, %v2517
      %v2519 = vpop.f32.mrf.mxu0
      %2520 = vmatprep.mubr.bf16.mxu0 0
      %2521 = vmatmul.mubr.bf16.gmra.mxu0 %v2394
      %v2522 = vpop.f32.mrf.mxu0
      %v2523 = vadd.f32 0.0, %v2522
      %v2524 = vpop.f32.mrf.mxu0
      %v2525 = vpop.f32.mrf.mxu0
      %v2526 = vadd.f32 0.0, %v2525
      %v2527 = vpop.f32.mrf.mxu0
      %2528 = vmatprep.mubr.bf16.mxu0 0
      %2529 = vmatmul.mubr.bf16.gmra.mxu0 %v2395
      %v2530 = vpop.f32.mrf.mxu0
      %v2531 = vadd.f32 0.0, %v2530
      %v2532 = vpop.f32.mrf.mxu0
      %v2533 = vpop.f32.mrf.mxu0
      %v2534 = vadd.f32 0.0, %v2533
      %v2535 = vpop.f32.mrf.mxu0
      %2536 = vmatprep.mubr.bf16.mxu0 0
      %2537 = vmatmul.mubr.bf16.gmra.mxu0 %v2396
      %v2538 = vpop.f32.mrf.mxu0
      %v2539 = vadd.f32 0.0, %v2538
      %v2540 = vpop.f32.mrf.mxu0
      %v2541 = vpop.f32.mrf.mxu0
      %v2542 = vadd.f32 0.0, %v2541
      %v2543 = vpop.f32.mrf.mxu0
      %2544 = vmatprep.mubr.bf16.mxu0 0
      %2545 = vmatmul.mubr.bf16.gmra.mxu0 %v2397
      %v2546 = vpop.f32.mrf.mxu0
      %v2547 = vadd.f32 0.0, %v2546
      %v2548 = vpop.f32.mrf.mxu0
      %v2549 = vpop.f32.mrf.mxu0
      %v2550 = vadd.f32 0.0, %v2549
      %v2551 = vpop.f32.mrf.mxu0
      %2552 = vmatprep.mubr.bf16.mxu0 0
      %2553 = vmatmul.mubr.bf16.gmra.mxu0 %v2398
      %v2554 = vpop.f32.mrf.mxu0
      %v2555 = vadd.f32 0.0, %v2554
      %v2556 = vpop.f32.mrf.mxu0
      %v2557 = vpop.f32.mrf.mxu0
      %v2558 = vadd.f32 0.0, %v2557
      %v2559 = vpop.f32.mrf.mxu0
      %2560 = vmatprep.mubr.bf16.mxu0 0
      %2561 = vmatmul.mubr.bf16.gmra.mxu0 %v2399
      %v2562 = vpop.f32.mrf.mxu0
      %v2563 = vadd.f32 0.0, %v2562
      %v2564 = vpop.f32.mrf.mxu0
      %v2565 = vpop.f32.mrf.mxu0
      %v2566 = vadd.f32 0.0, %v2565
      %v2567 = vpop.f32.mrf.mxu0
      %2568 = vmatprep.mubr.bf16.mxu0 0
      %2569 = vmatmul.mubr.bf16.gmra.mxu0 %v2400
      %v2570 = vpop.f32.mrf.mxu0
      %v2571 = vadd.f32 0.0, %v2570
      %v2572 = vpop.f32.mrf.mxu0
      %v2573 = vpop.f32.mrf.mxu0
      %v2574 = vadd.f32 0.0, %v2573
      %v2575 = vpop.f32.mrf.mxu0
      %2576 = vmatprep.mubr.bf16.mxu0 0
      %2577 = vmatmul.mubr.bf16.gmra.mxu0 %v2401
      %v2578 = vpop.f32.mrf.mxu0
      %v2579 = vadd.f32 0.0, %v2578
      %v2580 = vpop.f32.mrf.mxu0
      %v2581 = vpop.f32.mrf.mxu0
      %v2582 = vadd.f32 0.0, %v2581
      %v2583 = vpop.f32.mrf.mxu0
      %2584 = vmatprep.mubr.bf16.mxu0 0
      %2585 = vmatmul.mubr.bf16.gmra.mxu0 %v2402
      %v2586 = vpop.f32.mrf.mxu0
      %v2587 = vadd.f32 0.0, %v2586
      %v2588 = vpop.f32.mrf.mxu0
      %v2589 = vpop.f32.mrf.mxu0
      %v2590 = vadd.f32 0.0, %v2589
      %v2591 = vpop.f32.mrf.mxu0
      %2592 = vmatprep.mubr.bf16.mxu0 0
      %2593 = vmatmul.mubr.bf16.gmra.mxu0 %v2403
      %v2594 = vpop.f32.mrf.mxu0
      %v2595 = vadd.f32 0.0, %v2594
      %v2596 = vpop.f32.mrf.mxu0
      %v2597 = vpop.f32.mrf.mxu0
      %v2598 = vadd.f32 0.0, %v2597
      %v2599 = vpop.f32.mrf.mxu0
      %2600 = vmatprep.mubr.bf16.mxu0 0
      %2601 = vmatmul.mubr.bf16.gmra.mxu0 %v2404
      %v2602 = vpop.f32.mrf.mxu0
      %v2603 = vadd.f32 0.0, %v2602
      %v2604 = vpop.f32.mrf.mxu0
      %v2605 = vpop.f32.mrf.mxu0
      %v2606 = vadd.f32 0.0, %v2605
      %v2607 = vpop.f32.mrf.mxu0
      %2608 = vmatprep.mubr.bf16.mxu0 0
      %2609 = vmatmul.mubr.bf16.gmra.mxu0 %v2405
      %v2610 = vpop.f32.mrf.mxu0
      %v2611 = vadd.f32 0.0, %v2610
      %v2612 = vpop.f32.mrf.mxu0
      %v2613 = vpop.f32.mrf.mxu0
      %v2614 = vadd.f32 0.0, %v2613
      %v2615 = vpop.f32.mrf.mxu0
      %2616 = vmatprep.mubr.bf16.mxu0 0
      %2617 = vmatmul.mubr.bf16.gmra.mxu0 %v2406
      %v2618 = vpop.f32.mrf.mxu0
      %v2619 = vadd.f32 0.0, %v2618
      %v2620 = vpop.f32.mrf.mxu0
      %v2621 = vpop.f32.mrf.mxu0
      %v2622 = vadd.f32 0.0, %v2621
      %v2623 = vpop.f32.mrf.mxu0
      %2624 = vmatprep.mubr.bf16.mxu0 0
      %2625 = vmatmul.mubr.bf16.gmra.mxu0 %v2407
      %v2626 = vpop.f32.mrf.mxu0
      %v2627 = vadd.f32 0.0, %v2626
      %v2628 = vpop.f32.mrf.mxu0
      %v2629 = vpop.f32.mrf.mxu0
      %v2630 = vadd.f32 0.0, %v2629
      %v2631 = vpop.f32.mrf.mxu0
      %2632 = vdwg.mxu0
      %v2633 = vadd.f32 %v2168, %v2507
      %v2634 = vadd.f32 %v2169, %v2510
      %v2635 = vadd.f32 %v2170, %v2515
      %v2636 = vadd.f32 %v2171, %v2518
      %v2637 = vadd.f32 %v2172, %v2523
      %v2638 = vadd.f32 %v2173, %v2526
      %v2639 = vadd.f32 %v2174, %v2531
      %v2640 = vadd.f32 %v2175, %v2534
      %v2641 = vadd.f32 %v2176, %v2539
      %v2642 = vadd.f32 %v2177, %v2542
      %v2643 = vadd.f32 %v2178, %v2547
      %v2644 = vadd.f32 %v2179, %v2550
      %v2645 = vadd.f32 %v2180, %v2555
      %v2646 = vadd.f32 %v2181, %v2558
      %v2647 = vadd.f32 %v2182, %v2563
      %v2648 = vadd.f32 %v2183, %v2566
      %v2649 = vadd.f32 %v2184, %v2571
      %v2650 = vadd.f32 %v2185, %v2574
      %v2651 = vadd.f32 %v2186, %v2579
      %v2652 = vadd.f32 %v2187, %v2582
      %v2653 = vadd.f32 %v2188, %v2587
      %v2654 = vadd.f32 %v2189, %v2590
      %v2655 = vadd.f32 %v2190, %v2595
      %v2656 = vadd.f32 %v2191, %v2598
      %v2657 = vadd.f32 %v2192, %v2603
      %v2658 = vadd.f32 %v2193, %v2606
      %v2659 = vadd.f32 %v2194, %v2611
      %v2660 = vadd.f32 %v2195, %v2614
      %v2661 = vadd.f32 %v2196, %v2619
      %v2662 = vadd.f32 %v2197, %v2622
      %v2663 = vadd.f32 %v2198, %v2627
      %v2664 = vadd.f32 %v2199, %v2630
      %s2665 = scalar_lea.vmem %s2, 320
      %v2666 = vld [vmem:[%s2665] sm:$0xf]
      %v2667 = vld [vmem:[%s2665 + $0x4] sm:$0xf]
      %v2668 = vld [vmem:[%s2665 + $0x8] sm:$0xf]
      %v2669 = vld [vmem:[%s2665 + $0xc] sm:$0xf]
      %v2670 = vld [vmem:[%s2665 + $0x10] sm:$0xf]
      %v2671 = vld [vmem:[%s2665 + $0x14] sm:$0xf]
      %v2672 = vld [vmem:[%s2665 + $0x18] sm:$0xf]
      %v2673 = vld [vmem:[%s2665 + $0x1c] sm:$0xf]
      %v2674 = vld [vmem:[%s2665 + $0x20] sm:$0xf]
      %v2675 = vld [vmem:[%s2665 + $0x24] sm:$0xf]
      %v2676 = vld [vmem:[%s2665 + $0x28] sm:$0xf]
      %v2677 = vld [vmem:[%s2665 + $0x2c] sm:$0xf]
      %v2678 = vld [vmem:[%s2665 + $0x30] sm:$0xf]
      %v2679 = vld [vmem:[%s2665 + $0x34] sm:$0xf]
      %v2680 = vld [vmem:[%s2665 + $0x38] sm:$0xf]
      %v2681 = vld [vmem:[%s2665 + $0x3c] sm:$0xf]
      %v2682 = vunpack.c.l.b16 %v2318
      %v2683 = vunpack.c.l.b16 %v2321
      %v2684 = vunpack.c.l.b16 %v2325
      %v2685 = vunpack.c.l.b16 %v2328
      %v2686 = vpack.c.b16 %v2683, %v2682
      %v2687 = vpack.c.b16 %v2685, %v2684
      %v2706 = vunpack.c.l.b16 %v2666
      %v2707 = vunpack.c.l.b16 %v2667
      %v2708 = vunpack.c.l.b16 %v2668
      %v2709 = vunpack.c.l.b16 %v2669
      %v2710 = vunpack.c.l.b16 %v2670
      %v2711 = vunpack.c.l.b16 %v2671
      %v2712 = vunpack.c.l.b16 %v2672
      %v2713 = vunpack.c.l.b16 %v2673
      %v2714 = vunpack.c.l.b16 %v2674
      %v2715 = vunpack.c.l.b16 %v2675
      %v2716 = vunpack.c.l.b16 %v2676
      %v2717 = vunpack.c.l.b16 %v2677
      %v2718 = vunpack.c.l.b16 %v2678
      %v2719 = vunpack.c.l.b16 %v2679
      %v2720 = vunpack.c.l.b16 %v2680
      %v2721 = vunpack.c.l.b16 %v2681
      %v2722 = vpack.c.b16 %v2707, %v2706
      %v2723 = vpack.c.b16 %v2709, %v2708
      %v2724 = vpack.c.b16 %v2711, %v2710
      %v2725 = vpack.c.b16 %v2713, %v2712
      %v2726 = vpack.c.b16 %v2715, %v2714
      %v2727 = vpack.c.b16 %v2717, %v2716
      %v2728 = vpack.c.b16 %v2719, %v2718
      %v2729 = vpack.c.b16 %v2721, %v2720
      %2738 = vmatprep.subr.bf16.mxu0 0
      %2739 = vmatpush1.bf16.msra.mxu0 %v2729
      %2740 = vmatprep.subr.bf16.mxu0 0
      %2741 = vmatpush1.bf16.msra.mxu0 %v2728
      %2742 = vmatprep.subr.bf16.mxu0 0
      %2743 = vmatpush1.bf16.msra.mxu0 %v2727
      %2744 = vmatprep.subr.bf16.mxu0 0
      %2745 = vmatpush1.bf16.msra.mxu0 %v2726
      %2746 = vmatprep.subr.bf16.mxu0 0
      %2747 = vmatpush1.bf16.msra.mxu0 %v2725
      %2748 = vmatprep.subr.bf16.mxu0 0
      %2749 = vmatpush1.bf16.msra.mxu0 %v2724
      %2750 = vmatprep.subr.bf16.mxu0 0
      %2751 = vmatpush1.bf16.msra.mxu0 %v2723
      %2752 = vmatprep.subr.bf16.mxu0 0
      %2753 = vmatpush1.bf16.msra.mxu0 %v2722
      %2754 = vmatprep.subr.bf16.mxu0 0
      %2755 = vmatpush2.bf16.msra.mxu0 0
      %2756 = vmatprep.subr.bf16.mxu0 0
      %2757 = vmatpush2.bf16.msra.mxu0 0
      %2758 = vmatprep.subr.bf16.mxu0 0
      %2759 = vmatpush2.bf16.msra.mxu0 0
      %2760 = vmatprep.subr.bf16.mxu0 0
      %2761 = vmatpush2.bf16.msra.mxu0 0
      %2762 = vmatprep.subr.bf16.mxu0 0
      %2763 = vmatpush2.bf16.msra.mxu0 0
      %2764 = vmatprep.subr.bf16.mxu0 0
      %2765 = vmatpush2.bf16.msra.mxu0 0
      %2766 = vmatprep.subr.bf16.mxu0 0
      %2767 = vmatpush2.bf16.msra.mxu0 0
      %2768 = vmatprep.subr.bf16.mxu0 0
      %2769 = vmatpush2.bf16.msra.mxu0 0
      %2770 = vmatprep.mubr.bf16.mxu0 0
      %2771 = vmatmul.mubr.bf16.gmra.mxu0 %v2394
      %v2772 = vpop.f32.mrf.mxu0
      %v2773 = vadd.f32 0.0, %v2772
      %v2774 = vpop.f32.mrf.mxu0
      %v2775 = vpop.f32.mrf.mxu0
      %v2776 = vadd.f32 0.0, %v2775
      %v2777 = vpop.f32.mrf.mxu0
      %2778 = vmatprep.mubr.bf16.mxu0 0
      %2779 = vmatmul.mubr.bf16.gmra.mxu0 %v2395
      %v2780 = vpop.f32.mrf.mxu0
      %v2781 = vadd.f32 0.0, %v2780
      %v2782 = vpop.f32.mrf.mxu0
      %v2783 = vpop.f32.mrf.mxu0
      %v2784 = vadd.f32 0.0, %v2783
      %v2785 = vpop.f32.mrf.mxu0
      %2786 = vmatprep.mubr.bf16.mxu0 0
      %2787 = vmatmul.mubr.bf16.gmra.mxu0 %v2396
      %v2788 = vpop.f32.mrf.mxu0
      %v2789 = vadd.f32 0.0, %v2788
      %v2790 = vpop.f32.mrf.mxu0
      %v2791 = vpop.f32.mrf.mxu0
      %v2792 = vadd.f32 0.0, %v2791
      %v2793 = vpop.f32.mrf.mxu0
      %2794 = vmatprep.mubr.bf16.mxu0 0
      %2795 = vmatmul.mubr.bf16.gmra.mxu0 %v2397
      %v2796 = vpop.f32.mrf.mxu0
      %v2797 = vadd.f32 0.0, %v2796
      %v2798 = vpop.f32.mrf.mxu0
      %v2799 = vpop.f32.mrf.mxu0
      %v2800 = vadd.f32 0.0, %v2799
      %v2801 = vpop.f32.mrf.mxu0
      %2802 = vmatprep.mubr.bf16.mxu0 0
      %2803 = vmatmul.mubr.bf16.gmra.mxu0 %v2398
      %v2804 = vpop.f32.mrf.mxu0
      %v2805 = vadd.f32 0.0, %v2804
      %v2806 = vpop.f32.mrf.mxu0
      %v2807 = vpop.f32.mrf.mxu0
      %v2808 = vadd.f32 0.0, %v2807
      %v2809 = vpop.f32.mrf.mxu0
      %2810 = vmatprep.mubr.bf16.mxu0 0
      %2811 = vmatmul.mubr.bf16.gmra.mxu0 %v2399
      %v2812 = vpop.f32.mrf.mxu0
      %v2813 = vadd.f32 0.0, %v2812
      %v2814 = vpop.f32.mrf.mxu0
      %v2815 = vpop.f32.mrf.mxu0
      %v2816 = vadd.f32 0.0, %v2815
      %v2817 = vpop.f32.mrf.mxu0
      %2818 = vmatprep.mubr.bf16.mxu0 0
      %2819 = vmatmul.mubr.bf16.gmra.mxu0 %v2400
      %v2820 = vpop.f32.mrf.mxu0
      %v2821 = vadd.f32 0.0, %v2820
      %v2822 = vpop.f32.mrf.mxu0
      %v2823 = vpop.f32.mrf.mxu0
      %v2824 = vadd.f32 0.0, %v2823
      %v2825 = vpop.f32.mrf.mxu0
      %2826 = vmatprep.mubr.bf16.mxu0 0
      %2827 = vmatmul.mubr.bf16.gmra.mxu0 %v2401
      %v2828 = vpop.f32.mrf.mxu0
      %v2829 = vadd.f32 0.0, %v2828
      %v2830 = vpop.f32.mrf.mxu0
      %v2831 = vpop.f32.mrf.mxu0
      %v2832 = vadd.f32 0.0, %v2831
      %v2833 = vpop.f32.mrf.mxu0
      %2834 = vmatprep.mubr.bf16.mxu0 0
      %2835 = vmatmul.mubr.bf16.gmra.mxu0 %v2402
      %v2836 = vpop.f32.mrf.mxu0
      %v2837 = vadd.f32 0.0, %v2836
      %v2838 = vpop.f32.mrf.mxu0
      %v2839 = vpop.f32.mrf.mxu0
      %v2840 = vadd.f32 0.0, %v2839
      %v2841 = vpop.f32.mrf.mxu0
      %2842 = vmatprep.mubr.bf16.mxu0 0
      %2843 = vmatmul.mubr.bf16.gmra.mxu0 %v2403
      %v2844 = vpop.f32.mrf.mxu0
      %v2845 = vadd.f32 0.0, %v2844
      %v2846 = vpop.f32.mrf.mxu0
      %v2847 = vpop.f32.mrf.mxu0
      %v2848 = vadd.f32 0.0, %v2847
      %v2849 = vpop.f32.mrf.mxu0
      %2850 = vmatprep.mubr.bf16.mxu0 0
      %2851 = vmatmul.mubr.bf16.gmra.mxu0 %v2404
      %v2852 = vpop.f32.mrf.mxu0
      %v2853 = vadd.f32 0.0, %v2852
      %v2854 = vpop.f32.mrf.mxu0
      %v2855 = vpop.f32.mrf.mxu0
      %v2856 = vadd.f32 0.0, %v2855
      %v2857 = vpop.f32.mrf.mxu0
      %2858 = vmatprep.mubr.bf16.mxu0 0
      %2859 = vmatmul.mubr.bf16.gmra.mxu0 %v2405
      %v2860 = vpop.f32.mrf.mxu0
      %v2861 = vadd.f32 0.0, %v2860
      %v2862 = vpop.f32.mrf.mxu0
      %v2863 = vpop.f32.mrf.mxu0
      %v2864 = vadd.f32 0.0, %v2863
      %v2865 = vpop.f32.mrf.mxu0
      %2866 = vmatprep.mubr.bf16.mxu0 0
      %2867 = vmatmul.mubr.bf16.gmra.mxu0 %v2406
      %v2868 = vpop.f32.mrf.mxu0
      %v2869 = vadd.f32 0.0, %v2868
      %v2870 = vpop.f32.mrf.mxu0
      %v2871 = vpop.f32.mrf.mxu0
      %v2872 = vadd.f32 0.0, %v2871
      %v2873 = vpop.f32.mrf.mxu0
      %2874 = vmatprep.mubr.bf16.mxu0 0
      %2875 = vmatmul.mubr.bf16.gmra.mxu0 %v2407
      %v2876 = vpop.f32.mrf.mxu0
      %v2877 = vadd.f32 0.0, %v2876
      %v2878 = vpop.f32.mrf.mxu0
      %v2879 = vpop.f32.mrf.mxu0
      %v2880 = vadd.f32 0.0, %v2879
      %v2881 = vpop.f32.mrf.mxu0
      %2882 = vmatprep.mubr.bf16.mxu0 0
      %2883 = vmatmul.mubr.bf16.gmra.mxu0 %v2686
      %v2884 = vpop.f32.mrf.mxu0
      %v2885 = vadd.f32 0.0, %v2884
      %v2886 = vpop.f32.mrf.mxu0
      %v2887 = vpop.f32.mrf.mxu0
      %v2888 = vadd.f32 0.0, %v2887
      %v2889 = vpop.f32.mrf.mxu0
      %2890 = vmatprep.mubr.bf16.mxu0 0
      %2891 = vmatmul.mubr.bf16.gmra.mxu0 %v2687
      %v2892 = vpop.f32.mrf.mxu0
      %v2893 = vadd.f32 0.0, %v2892
      %v2894 = vpop.f32.mrf.mxu0
      %v2895 = vpop.f32.mrf.mxu0
      %v2896 = vadd.f32 0.0, %v2895
      %v2897 = vpop.f32.mrf.mxu0
      %2898 = vdwg.mxu0
      %v2899 = vadd.f32 %v2633, %v2773
      %v2900 = vadd.f32 %v2634, %v2776
      %v2901 = vadd.f32 %v2635, %v2781
      %v2902 = vadd.f32 %v2636, %v2784
      %v2903 = vadd.f32 %v2637, %v2789
      %v2904 = vadd.f32 %v2638, %v2792
      %v2905 = vadd.f32 %v2639, %v2797
      %v2906 = vadd.f32 %v2640, %v2800
      %v2907 = vadd.f32 %v2641, %v2805
      %v2908 = vadd.f32 %v2642, %v2808
      %v2909 = vadd.f32 %v2643, %v2813
      %v2910 = vadd.f32 %v2644, %v2816
      %v2911 = vadd.f32 %v2645, %v2821
      %v2912 = vadd.f32 %v2646, %v2824
      %v2913 = vadd.f32 %v2647, %v2829
      %v2914 = vadd.f32 %v2648, %v2832
      %v2915 = vadd.f32 %v2649, %v2837
      %v2916 = vadd.f32 %v2650, %v2840
      %v2917 = vadd.f32 %v2651, %v2845
      %v2918 = vadd.f32 %v2652, %v2848
      %v2919 = vadd.f32 %v2653, %v2853
      %v2920 = vadd.f32 %v2654, %v2856
      %v2921 = vadd.f32 %v2655, %v2861
      %v2922 = vadd.f32 %v2656, %v2864
      %v2923 = vadd.f32 %v2657, %v2869
      %v2924 = vadd.f32 %v2658, %v2872
      %v2925 = vadd.f32 %v2659, %v2877
      %v2926 = vadd.f32 %v2660, %v2880
      %v2927 = vadd.f32 %v2661, %v2885
      %v2928 = vadd.f32 %v2662, %v2888
      %v2929 = vadd.f32 %v2663, %v2893
      %v2930 = vadd.f32 %v2664, %v2896
      %s2931 = scalar_lea.vmem %s2, 512
      %v2932 = vld [vmem:[%s2931] sm:$0xf]
      %v2933 = vld [vmem:[%s2931 + $0x4] sm:$0xf]
      %v2934 = vld [vmem:[%s2931 + $0x8] sm:$0xf]
      %v2935 = vld [vmem:[%s2931 + $0xc] sm:$0xf]
      %v2936 = vld [vmem:[%s2931 + $0x10] sm:$0xf]
      %v2937 = vld [vmem:[%s2931 + $0x14] sm:$0xf]
      %v2938 = vld [vmem:[%s2931 + $0x18] sm:$0xf]
      %v2939 = vld [vmem:[%s2931 + $0x1c] sm:$0xf]
      %v2940 = vld [vmem:[%s2931 + $0x20] sm:$0xf]
      %v2941 = vld [vmem:[%s2931 + $0x24] sm:$0xf]
      %v2942 = vld [vmem:[%s2931 + $0x28] sm:$0xf]
      %v2943 = vld [vmem:[%s2931 + $0x2c] sm:$0xf]
      %v2944 = vld [vmem:[%s2931 + $0x30] sm:$0xf]
      %v2945 = vld [vmem:[%s2931 + $0x34] sm:$0xf]
      %v2946 = vld [vmem:[%s2931 + $0x38] sm:$0xf]
      %v2947 = vld [vmem:[%s2931 + $0x3c] sm:$0xf]
      %v2948 = vunpack.c.l.b16 %v2332
      %v2949 = vunpack.c.l.b16 %v2335
      %v2950 = vunpack.c.l.b16 %v2339
      %v2951 = vunpack.c.l.b16 %v2342
      %v2952 = vpack.c.b16 %v2949, %v2948
      %v2953 = vpack.c.b16 %v2951, %v2950
      %v2972 = vunpack.c.l.b16 %v2932
      %v2973 = vunpack.c.l.b16 %v2933
      %v2974 = vunpack.c.l.b16 %v2934
      %v2975 = vunpack.c.l.b16 %v2935
      %v2976 = vunpack.c.l.b16 %v2936
      %v2977 = vunpack.c.l.b16 %v2937
      %v2978 = vunpack.c.l.b16 %v2938
      %v2979 = vunpack.c.l.b16 %v2939
      %v2980 = vunpack.c.l.b16 %v2940
      %v2981 = vunpack.c.l.b16 %v2941
      %v2982 = vunpack.c.l.b16 %v2942
      %v2983 = vunpack.c.l.b16 %v2943
      %v2984 = vunpack.c.l.b16 %v2944
      %v2985 = vunpack.c.l.b16 %v2945
      %v2986 = vunpack.c.l.b16 %v2946
      %v2987 = vunpack.c.l.b16 %v2947
      %v2988 = vpack.c.b16 %v2973, %v2972
      %v2989 = vpack.c.b16 %v2975, %v2974
      %v2990 = vpack.c.b16 %v2977, %v2976
      %v2991 = vpack.c.b16 %v2979, %v2978
      %v2992 = vpack.c.b16 %v2981, %v2980
      %v2993 = vpack.c.b16 %v2983, %v2982
      %v2994 = vpack.c.b16 %v2985, %v2984
      %v2995 = vpack.c.b16 %v2987, %v2986
      %3004 = vmatprep.subr.bf16.mxu0 0
      %3005 = vmatpush1.bf16.msra.mxu0 %v2995
      %3006 = vmatprep.subr.bf16.mxu0 0
      %3007 = vmatpush1.bf16.msra.mxu0 %v2994
      %3008 = vmatprep.subr.bf16.mxu0 0
      %3009 = vmatpush1.bf16.msra.mxu0 %v2993
      %3010 = vmatprep.subr.bf16.mxu0 0
      %3011 = vmatpush1.bf16.msra.mxu0 %v2992
      %3012 = vmatprep.subr.bf16.mxu0 0
      %3013 = vmatpush1.bf16.msra.mxu0 %v2991
      %3014 = vmatprep.subr.bf16.mxu0 0
      %3015 = vmatpush1.bf16.msra.mxu0 %v2990
      %3016 = vmatprep.subr.bf16.mxu0 0
      %3017 = vmatpush1.bf16.msra.mxu0 %v2989
      %3018 = vmatprep.subr.bf16.mxu0 0
      %3019 = vmatpush1.bf16.msra.mxu0 %v2988
      %3020 = vmatprep.subr.bf16.mxu0 0
      %3021 = vmatpush2.bf16.msra.mxu0 0
      %3022 = vmatprep.subr.bf16.mxu0 0
      %3023 = vmatpush2.bf16.msra.mxu0 0
      %3024 = vmatprep.subr.bf16.mxu0 0
      %3025 = vmatpush2.bf16.msra.mxu0 0
      %3026 = vmatprep.subr.bf16.mxu0 0
      %3027 = vmatpush2.bf16.msra.mxu0 0
      %3028 = vmatprep.subr.bf16.mxu0 0
      %3029 = vmatpush2.bf16.msra.mxu0 0
      %3030 = vmatprep.subr.bf16.mxu0 0
      %3031 = vmatpush2.bf16.msra.mxu0 0
      %3032 = vmatprep.subr.bf16.mxu0 0
      %3033 = vmatpush2.bf16.msra.mxu0 0
      %3034 = vmatprep.subr.bf16.mxu0 0
      %3035 = vmatpush2.bf16.msra.mxu0 0
      %3036 = vmatprep.mubr.bf16.mxu0 0
      %3037 = vmatmul.mubr.bf16.gmra.mxu0 %v2396
      %v3038 = vpop.f32.mrf.mxu0
      %v3039 = vadd.f32 0.0, %v3038
      %v3040 = vpop.f32.mrf.mxu0
      %v3041 = vpop.f32.mrf.mxu0
      %v3042 = vadd.f32 0.0, %v3041
      %v3043 = vpop.f32.mrf.mxu0
      %3044 = vmatprep.mubr.bf16.mxu0 0
      %3045 = vmatmul.mubr.bf16.gmra.mxu0 %v2397
      %v3046 = vpop.f32.mrf.mxu0
      %v3047 = vadd.f32 0.0, %v3046
      %v3048 = vpop.f32.mrf.mxu0
      %v3049 = vpop.f32.mrf.mxu0
      %v3050 = vadd.f32 0.0, %v3049
      %v3051 = vpop.f32.mrf.mxu0
      %3052 = vmatprep.mubr.bf16.mxu0 0
      %3053 = vmatmul.mubr.bf16.gmra.mxu0 %v2398
      %v3054 = vpop.f32.mrf.mxu0
      %v3055 = vadd.f32 0.0, %v3054
      %v3056 = vpop.f32.mrf.mxu0
      %v3057 = vpop.f32.mrf.mxu0
      %v3058 = vadd.f32 0.0, %v3057
      %v3059 = vpop.f32.mrf.mxu0
      %3060 = vmatprep.mubr.bf16.mxu0 0
      %3061 = vmatmul.mubr.bf16.gmra.mxu0 %v2399
      %v3062 = vpop.f32.mrf.mxu0
      %v3063 = vadd.f32 0.0, %v3062
      %v3064 = vpop.f32.mrf.mxu0
      %v3065 = vpop.f32.mrf.mxu0
      %v3066 = vadd.f32 0.0, %v3065
      %v3067 = vpop.f32.mrf.mxu0
      %3068 = vmatprep.mubr.bf16.mxu0 0
      %3069 = vmatmul.mubr.bf16.gmra.mxu0 %v2400
      %v3070 = vpop.f32.mrf.mxu0
      %v3071 = vadd.f32 0.0, %v3070
      %v3072 = vpop.f32.mrf.mxu0
      %v3073 = vpop.f32.mrf.mxu0
      %v3074 = vadd.f32 0.0, %v3073
      %v3075 = vpop.f32.mrf.mxu0
      %3076 = vmatprep.mubr.bf16.mxu0 0
      %3077 = vmatmul.mubr.bf16.gmra.mxu0 %v2401
      %v3078 = vpop.f32.mrf.mxu0
      %v3079 = vadd.f32 0.0, %v3078
      %v3080 = vpop.f32.mrf.mxu0
      %v3081 = vpop.f32.mrf.mxu0
      %v3082 = vadd.f32 0.0, %v3081
      %v3083 = vpop.f32.mrf.mxu0
      %3084 = vmatprep.mubr.bf16.mxu0 0
      %3085 = vmatmul.mubr.bf16.gmra.mxu0 %v2402
      %v3086 = vpop.f32.mrf.mxu0
      %v3087 = vadd.f32 0.0, %v3086
      %v3088 = vpop.f32.mrf.mxu0
      %v3089 = vpop.f32.mrf.mxu0
      %v3090 = vadd.f32 0.0, %v3089
      %v3091 = vpop.f32.mrf.mxu0
      %3092 = vmatprep.mubr.bf16.mxu0 0
      %3093 = vmatmul.mubr.bf16.gmra.mxu0 %v2403
      %v3094 = vpop.f32.mrf.mxu0
      %v3095 = vadd.f32 0.0, %v3094
      %v3096 = vpop.f32.mrf.mxu0
      %v3097 = vpop.f32.mrf.mxu0
      %v3098 = vadd.f32 0.0, %v3097
      %v3099 = vpop.f32.mrf.mxu0
      %3100 = vmatprep.mubr.bf16.mxu0 0
      %3101 = vmatmul.mubr.bf16.gmra.mxu0 %v2404
      %v3102 = vpop.f32.mrf.mxu0
      %v3103 = vadd.f32 0.0, %v3102
      %v3104 = vpop.f32.mrf.mxu0
      %v3105 = vpop.f32.mrf.mxu0
      %v3106 = vadd.f32 0.0, %v3105
      %v3107 = vpop.f32.mrf.mxu0
      %3108 = vmatprep.mubr.bf16.mxu0 0
      %3109 = vmatmul.mubr.bf16.gmra.mxu0 %v2405
      %v3110 = vpop.f32.mrf.mxu0
      %v3111 = vadd.f32 0.0, %v3110
      %v3112 = vpop.f32.mrf.mxu0
      %v3113 = vpop.f32.mrf.mxu0
      %v3114 = vadd.f32 0.0, %v3113
      %v3115 = vpop.f32.mrf.mxu0
      %3116 = vmatprep.mubr.bf16.mxu0 0
      %3117 = vmatmul.mubr.bf16.gmra.mxu0 %v2406
      %v3118 = vpop.f32.mrf.mxu0
      %v3119 = vadd.f32 0.0, %v3118
      %v3120 = vpop.f32.mrf.mxu0
      %v3121 = vpop.f32.mrf.mxu0
      %v3122 = vadd.f32 0.0, %v3121
      %v3123 = vpop.f32.mrf.mxu0
      %3124 = vmatprep.mubr.bf16.mxu0 0
      %3125 = vmatmul.mubr.bf16.gmra.mxu0 %v2407
      %v3126 = vpop.f32.mrf.mxu0
      %v3127 = vadd.f32 0.0, %v3126
      %v3128 = vpop.f32.mrf.mxu0
      %v3129 = vpop.f32.mrf.mxu0
      %v3130 = vadd.f32 0.0, %v3129
      %v3131 = vpop.f32.mrf.mxu0
      %3132 = vmatprep.mubr.bf16.mxu0 0
      %3133 = vmatmul.mubr.bf16.gmra.mxu0 %v2686
      %v3134 = vpop.f32.mrf.mxu0
      %v3135 = vadd.f32 0.0, %v3134
      %v3136 = vpop.f32.mrf.mxu0
      %v3137 = vpop.f32.mrf.mxu0
      %v3138 = vadd.f32 0.0, %v3137
      %v3139 = vpop.f32.mrf.mxu0
      %3140 = vmatprep.mubr.bf16.mxu0 0
      %3141 = vmatmul.mubr.bf16.gmra.mxu0 %v2687
      %v3142 = vpop.f32.mrf.mxu0
      %v3143 = vadd.f32 0.0, %v3142
      %v3144 = vpop.f32.mrf.mxu0
      %v3145 = vpop.f32.mrf.mxu0
      %v3146 = vadd.f32 0.0, %v3145
      %v3147 = vpop.f32.mrf.mxu0
      %3148 = vmatprep.mubr.bf16.mxu0 0
      %3149 = vmatmul.mubr.bf16.gmra.mxu0 %v2952
      %v3150 = vpop.f32.mrf.mxu0
      %v3151 = vadd.f32 0.0, %v3150
      %v3152 = vpop.f32.mrf.mxu0
      %v3153 = vpop.f32.mrf.mxu0
      %v3154 = vadd.f32 0.0, %v3153
      %v3155 = vpop.f32.mrf.mxu0
      %3156 = vmatprep.mubr.bf16.mxu0 0
      %3157 = vmatmul.mubr.bf16.gmra.mxu0 %v2953
      %v3158 = vpop.f32.mrf.mxu0
      %v3159 = vadd.f32 0.0, %v3158
      %v3160 = vpop.f32.mrf.mxu0
      %v3161 = vpop.f32.mrf.mxu0
      %v3162 = vadd.f32 0.0, %v3161
      %v3163 = vpop.f32.mrf.mxu0
      %3164 = vdwg.mxu0
      %v3165 = vadd.f32 %v2899, %v3039
      %v3166 = vadd.f32 %v2900, %v3042
      %v3167 = vadd.f32 %v2901, %v3047
      %v3168 = vadd.f32 %v2902, %v3050
      %v3169 = vadd.f32 %v2903, %v3055
      %v3170 = vadd.f32 %v2904, %v3058
      %v3171 = vadd.f32 %v2905, %v3063
      %v3172 = vadd.f32 %v2906, %v3066
      %v3173 = vadd.f32 %v2907, %v3071
      %v3174 = vadd.f32 %v2908, %v3074
      %v3175 = vadd.f32 %v2909, %v3079
      %v3176 = vadd.f32 %v2910, %v3082
      %v3177 = vadd.f32 %v2911, %v3087
      %v3178 = vadd.f32 %v2912, %v3090
      %v3179 = vadd.f32 %v2913, %v3095
      %v3180 = vadd.f32 %v2914, %v3098
      %v3181 = vadd.f32 %v2915, %v3103
      %v3182 = vadd.f32 %v2916, %v3106
      %v3183 = vadd.f32 %v2917, %v3111
      %v3184 = vadd.f32 %v2918, %v3114
      %v3185 = vadd.f32 %v2919, %v3119
      %v3186 = vadd.f32 %v2920, %v3122
      %v3187 = vadd.f32 %v2921, %v3127
      %v3188 = vadd.f32 %v2922, %v3130
      %v3189 = vadd.f32 %v2923, %v3135
      %v3190 = vadd.f32 %v2924, %v3138
      %v3191 = vadd.f32 %v2925, %v3143
      %v3192 = vadd.f32 %v2926, %v3146
      %v3193 = vadd.f32 %v2927, %v3151
      %v3194 = vadd.f32 %v2928, %v3154
      %v3195 = vadd.f32 %v2929, %v3159
      %v3196 = vadd.f32 %v2930, %v3162
      %v3197 = vld [vmem:[%s3] sm:$0x1]
      %v3199 = vlaneseq
      %v3200 = vshrl.u32 %v3199, 7
      %v3201 = vsub.s32 0, %v3200
      %v3202 = vrot.slane %v3197, %v3201
      %v3204 = vadd.f32 %v3165, %v3202
      %v3205 = vadd.f32 %v3166, %v3202
      %v3206 = vadd.f32 %v3167, %v3202
      %v3207 = vadd.f32 %v3168, %v3202
      %v3208 = vadd.f32 %v3169, %v3202
      %v3209 = vadd.f32 %v3170, %v3202
      %v3210 = vadd.f32 %v3171, %v3202
      %v3211 = vadd.f32 %v3172, %v3202
      %v3212 = vadd.f32 %v3173, %v3202
      %v3213 = vadd.f32 %v3174, %v3202
      %v3214 = vadd.f32 %v3175, %v3202
      %v3215 = vadd.f32 %v3176, %v3202
      %v3216 = vadd.f32 %v3177, %v3202
      %v3217 = vadd.f32 %v3178, %v3202
      %v3218 = vadd.f32 %v3179, %v3202
      %v3219 = vadd.f32 %v3180, %v3202
      %v3220 = vadd.f32 %v3181, %v3202
      %v3221 = vadd.f32 %v3182, %v3202
      %v3222 = vadd.f32 %v3183, %v3202
      %v3223 = vadd.f32 %v3184, %v3202
      %v3224 = vadd.f32 %v3185, %v3202
      %v3225 = vadd.f32 %v3186, %v3202
      %v3226 = vadd.f32 %v3187, %v3202
      %v3227 = vadd.f32 %v3188, %v3202
      %v3228 = vadd.f32 %v3189, %v3202
      %v3229 = vadd.f32 %v3190, %v3202
      %v3230 = vadd.f32 %v3191, %v3202
      %v3231 = vadd.f32 %v3192, %v3202
      %v3232 = vadd.f32 %v3193, %v3202
      %v3233 = vadd.f32 %v3194, %v3202
      %v3234 = vadd.f32 %v3195, %v3202
      %v3235 = vadd.f32 %v3196, %v3202
      %v3236 = vmax.f32 %v3204, 0.0
      %v3237 = vmax.f32 %v3205, 0.0
      %v3238 = vmax.f32 %v3206, 0.0
      %v3239 = vmax.f32 %v3207, 0.0
      %v3240 = vmax.f32 %v3208, 0.0
      %v3241 = vmax.f32 %v3209, 0.0
      %v3242 = vmax.f32 %v3210, 0.0
      %v3243 = vmax.f32 %v3211, 0.0
      %v3244 = vmax.f32 %v3212, 0.0
      %v3245 = vmax.f32 %v3213, 0.0
      %v3246 = vmax.f32 %v3214, 0.0
      %v3247 = vmax.f32 %v3215, 0.0
      %v3248 = vmax.f32 %v3216, 0.0
      %v3249 = vmax.f32 %v3217, 0.0
      %v3250 = vmax.f32 %v3218, 0.0
      %v3251 = vmax.f32 %v3219, 0.0
      %v3252 = vmax.f32 %v3220, 0.0
      %v3253 = vmax.f32 %v3221, 0.0
      %v3254 = vmax.f32 %v3222, 0.0
      %v3255 = vmax.f32 %v3223, 0.0
      %v3256 = vmax.f32 %v3224, 0.0
      %v3257 = vmax.f32 %v3225, 0.0
      %v3258 = vmax.f32 %v3226, 0.0
      %v3259 = vmax.f32 %v3227, 0.0
      %v3260 = vmax.f32 %v3228, 0.0
      %v3261 = vmax.f32 %v3229, 0.0
      %v3262 = vmax.f32 %v3230, 0.0
      %v3263 = vmax.f32 %v3231, 0.0
      %v3264 = vmax.f32 %v3232, 0.0
      %v3265 = vmax.f32 %v3233, 0.0
      %v3266 = vmax.f32 %v3234, 0.0
      %v3267 = vmax.f32 %v3235, 0.0
      %v3268 = vpack.c.bf16 %v3237, %v3236
      %v3269 = vpack.c.bf16 %v3239, %v3238
      %v3270 = vpack.c.bf16 %v3241, %v3240
      %v3271 = vpack.c.bf16 %v3243, %v3242
      %v3272 = vpack.c.bf16 %v3245, %v3244
      %v3273 = vpack.c.bf16 %v3247, %v3246
      %v3274 = vpack.c.bf16 %v3249, %v3248
      %v3275 = vpack.c.bf16 %v3251, %v3250
      %v3276 = vpack.c.bf16 %v3253, %v3252
      %v3277 = vpack.c.bf16 %v3255, %v3254
      %v3278 = vpack.c.bf16 %v3257, %v3256
      %v3279 = vpack.c.bf16 %v3259, %v3258
      %v3280 = vpack.c.bf16 %v3261, %v3260
      %v3281 = vpack.c.bf16 %v3263, %v3262
      %v3282 = vpack.c.bf16 %v3265, %v3264
      %v3283 = vpack.c.bf16 %v3267, %v3266
      %v3300 = vunpack.c.l.b16 %v3268
      %v3301 = vunpack.c.h.b16 %v3268
      %v3302 = vunpack.c.l.b16 %v3269
      %v3303 = vunpack.c.h.b16 %v3269
      %v3304 = vunpack.c.l.b16 %v3270
      %v3305 = vunpack.c.h.b16 %v3270
      %v3306 = vunpack.c.l.b16 %v3271
      %v3307 = vunpack.c.h.b16 %v3271
      %v3308 = vunpack.c.l.b16 %v3272
      %v3309 = vunpack.c.h.b16 %v3272
      %v3310 = vunpack.c.l.b16 %v3273
      %v3311 = vunpack.c.h.b16 %v3273
      %v3312 = vunpack.c.l.b16 %v3274
      %v3313 = vunpack.c.h.b16 %v3274
      %v3314 = vunpack.c.l.b16 %v3275
      %v3315 = vunpack.c.h.b16 %v3275
      %v3316 = vunpack.c.l.b16 %v3276
      %v3317 = vunpack.c.h.b16 %v3276
      %v3318 = vunpack.c.l.b16 %v3277
      %v3319 = vunpack.c.h.b16 %v3277
      %v3320 = vunpack.c.l.b16 %v3278
      %v3321 = vunpack.c.h.b16 %v3278
      %v3322 = vunpack.c.l.b16 %v3279
      %v3323 = vunpack.c.h.b16 %v3279
      %v3324 = vunpack.c.l.b16 %v3280
      %v3325 = vunpack.c.h.b16 %v3280
      %v3326 = vunpack.c.l.b16 %v3281
      %v3327 = vunpack.c.h.b16 %v3281
      %v3328 = vunpack.c.l.b16 %v3282
      %v3329 = vunpack.c.h.b16 %v3282
      %v3330 = vunpack.c.l.b16 %v3283
      %v3331 = vunpack.c.h.b16 %v3283
      %v3332 = vpack.c.b16 %v3300, %v3300
      %v3333 = vpack.c.b16 %v3301, %v3301
      %v3334 = vpack.c.b16 %v3302, %v3302
      %v3335 = vpack.c.b16 %v3303, %v3303
      %v3336 = vpack.c.b16 %v3304, %v3304
      %v3337 = vpack.c.b16 %v3305, %v3305
      %v3338 = vpack.c.b16 %v3306, %v3306
      %v3339 = vpack.c.b16 %v3307, %v3307
      %v3340 = vpack.c.b16 %v3308, %v3308
      %v3341 = vpack.c.b16 %v3309, %v3309
      %v3342 = vpack.c.b16 %v3310, %v3310
      %v3343 = vpack.c.b16 %v3311, %v3311
      %v3344 = vpack.c.b16 %v3312, %v3312
      %v3345 = vpack.c.b16 %v3313, %v3313
      %v3346 = vpack.c.b16 %v3314, %v3314
      %v3347 = vpack.c.b16 %v3315, %v3315
      %v3348 = vpack.c.b16 %v3316, %v3316
      %v3349 = vpack.c.b16 %v3317, %v3317
      %v3350 = vpack.c.b16 %v3318, %v3318
      %v3351 = vpack.c.b16 %v3319, %v3319
      %v3352 = vpack.c.b16 %v3320, %v3320
      %v3353 = vpack.c.b16 %v3321, %v3321
      %v3354 = vpack.c.b16 %v3322, %v3322
      %v3355 = vpack.c.b16 %v3323, %v3323
      %v3356 = vpack.c.b16 %v3324, %v3324
      %v3357 = vpack.c.b16 %v3325, %v3325
      %v3358 = vpack.c.b16 %v3326, %v3326
      %v3359 = vpack.c.b16 %v3327, %v3327
      %v3360 = vpack.c.b16 %v3328, %v3328
      %v3361 = vpack.c.b16 %v3329, %v3329
      %v3362 = vpack.c.b16 %v3330, %v3330
      %v3363 = vpack.c.b16 %v3331, %v3331
      %3396 = vst [vmem:[%s291] sm:$0xf] %v3332
      %3397 = vst [vmem:[%s291 + $0x4] sm:$0xf] %v3333
      %3398 = vst [vmem:[%s291 + $0x8] sm:$0xf] %v3334
      %3399 = vst [vmem:[%s291 + $0xc] sm:$0xf] %v3335
      %3400 = vst [vmem:[%s291 + $0x10] sm:$0xf] %v3336
      %3401 = vst [vmem:[%s291 + $0x14] sm:$0xf] %v3337
      %3402 = vst [vmem:[%s291 + $0x18] sm:$0xf] %v3338
      %3403 = vst [vmem:[%s291 + $0x1c] sm:$0xf] %v3339
      %3404 = vst [vmem:[%s291 + $0x20] sm:$0xf] %v3340
      %3405 = vst [vmem:[%s291 + $0x24] sm:$0xf] %v3341
      %3406 = vst [vmem:[%s291 + $0x28] sm:$0xf] %v3342
      %3407 = vst [vmem:[%s291 + $0x2c] sm:$0xf] %v3343
      %3408 = vst [vmem:[%s291 + $0x30] sm:$0xf] %v3344
      %3409 = vst [vmem:[%s291 + $0x34] sm:$0xf] %v3345
      %3410 = vst [vmem:[%s291 + $0x38] sm:$0xf] %v3346
      %3411 = vst [vmem:[%s291 + $0x3c] sm:$0xf] %v3347
      %3412 = vst [vmem:[%s291 + $0x40] sm:$0xf] %v3348
      %3413 = vst [vmem:[%s291 + $0x44] sm:$0xf] %v3349
      %3414 = vst [vmem:[%s291 + $0x48] sm:$0xf] %v3350
      %3415 = vst [vmem:[%s291 + $0x4c] sm:$0xf] %v3351
      %3416 = vst [vmem:[%s291 + $0x50] sm:$0xf] %v3352
      %3417 = vst [vmem:[%s291 + $0x54] sm:$0xf] %v3353
      %3418 = vst [vmem:[%s291 + $0x58] sm:$0xf] %v3354
      %3419 = vst [vmem:[%s291 + $0x5c] sm:$0xf] %v3355
      %3420 = vst [vmem:[%s291 + $0x60] sm:$0xf] %v3356
      %3421 = vst [vmem:[%s291 + $0x64] sm:$0xf] %v3357
      %3422 = vst [vmem:[%s291 + $0x68] sm:$0xf] %v3358
      %3423 = vst [vmem:[%s291 + $0x6c] sm:$0xf] %v3359
      %3424 = vst [vmem:[%s291 + $0x70] sm:$0xf] %v3360
      %3425 = vst [vmem:[%s291 + $0x74] sm:$0xf] %v3361
      %3426 = vst [vmem:[%s291 + $0x78] sm:$0xf] %v3362
      %3427 = vst [vmem:[%s291 + $0x7c] sm:$0xf] %v3363
      %s3428 = smul.u32 32, %s20
      %p3429 = scmp.lt.s32.totalorder %s19, 1
      %s3430 = scalar_select %p3429, %s19, 1
      %p3431 = scmp.lt.s32.totalorder %s3428, 31
      %s3432 = scalar_select %p3431, %s3428, 31
      %s3433 = smul.addr %s3430, 32
      %s3434 = sadd.s32 %s3432, %s3433
      %s3435 = smul.addr %s3434, 4
      %s3436 = scalar_lea.vmem %s4, %s3435
      // Predicated region
      $region37: #{aspp_forward.1} parent=35 // pred_check
        %p3437 = pneg %p149
      $region38: #{aspp_forward.1} parent=35 // pred_check_branch
        %3439 = sbr.rel (%p3437) target = $region40
      $region39: #{aspp_forward.1} parent=35 // pred_region
        %s3440 = smul.u32 32, %s20
      $region40: #{aspp_forward.1} parent=35 // pred_fallthru
        _
    $region36: #{aspp_forward.1} parent=5 // pred_fallthru
      _
    %p3441 = scmp.le.s32.totalorder 2, %s10
    // Predicated region
    $region41: #{aspp_forward.1} parent=5 // pred_check
      %p3442 = pneg %p3441
    $region42: #{aspp_forward.1} parent=5 // pred_check_branch
      %3444 = sbr.rel (%p3442) target = $region44
    $region43: #{aspp_forward.1} parent=5 // pred_region
      %s3445 = ssub.s32 %s10, 2
      // Predicated region
      $region45: #{aspp_forward.1} parent=43 // pred_check
        %p3446 = pneg %p155
      $region46: #{aspp_forward.1} parent=43 // pred_check_branch
        %3448 = sbr.rel (%p3446) target = $region48
      $region47: #{aspp_forward.1} parent=43 // pred_region
        %s3449 = smul.u32 32, %s22
        %p3450 = scmp.lt.s32.totalorder %s21, 1
        %s3451 = scalar_select %p3450, %s21, 1
        %p3452 = scmp.lt.s32.totalorder %s3449, 31
        %s3453 = scalar_select %p3452, %s3449, 31
        %s3454 = smul.addr %s3451, 32
        %s3455 = sadd.s32 %s3453, %s3454
        %s3456 = smul.addr %s3455, 4
        %s3457 = scalar_lea.vmem %s4, %s3456
      $region48: #{aspp_forward.1} parent=43 // pred_fallthru
        _
    $region44: #{aspp_forward.1} parent=5 // pred_fallthru
      _
  $region6: #{aspp_forward.1} parent=0 // loop_footer
    %s14 = sadd.s32 1, %s10
  $region7: #{aspp_forward.1} parent=0 // loop_footer_branch
    %9 = sbr.rel target = $region3
  $region8: #{aspp_forward.1} parent=0 // loop_exit
    _

</llo_original>
